<compile_context>
chip_gen: v6e
topology: v6e:2x2x1
jax: 0.10.0
libtpu: 0.0.40
codegen_flags: <defaults>
</compile_context>

<pallas_src>
import numpy as np
import jax
import jax.numpy as jnp
from jax.experimental import pallas as pl
from jax.experimental.pallas import tpu as pltpu

HIDDEN = 100            # self.hidden_sz
MOVE_EMB = 100          # self.move_emb_sz
WORD_MAX = 15
VOCAB = list("abcdefghijklmnopqrstuvwxyz")
VOCAB_SZ = len(VOCAB)

HPAD = 128              # 100 -> 128 lane padding
_NEG = -1e30

# ---------------------------------------------------------------------------
# Static slab layout (weights packed by padded output width; biases in one slab)
# ---------------------------------------------------------------------------
_SLAB_ORDERS = {
    "slab128": ("down2", "up2", "sep", "scdec", "wd2", "len0", "len1", "len2"),
    "slab256": ("down0", "down1", "up0", "up1", "wd0", "wd1", "mulv"),
    "slab384": ("we_qkv", "wd_qkv", "score_enc", "vecdec"),
}
_SLAB_COLS = {"slab128": 128, "slab256": 256, "slab384": 384}
_WEIGHT_ROWS = {
    "down2": 256, "up2": 256, "sep": 128, "scdec": 128, "wd2": 256,
    "len0": 256, "len1": 128, "len2": 128,
    "down0": 384, "down1": 256, "up0": 128, "up1": 256, "wd0": 128, "wd1": 256,
    "mulv": 128,
    "we_qkv": 128, "wd_qkv": 128, "score_enc": 128, "vecdec": 128,
}


def _build_layout():
    layout = {}
    for slab, order in _SLAB_ORDERS.items():
        off = 0
        for name in order:
            layout[name] = (slab, off, _WEIGHT_ROWS[name])
            off += _WEIGHT_ROWS[name]
    return layout


_LAYOUT = _build_layout()

_BIAS_ORDER = ("we_qkv", "wd_qkv", "score_enc",
               "down0", "down1", "up0", "up1", "wd0", "wd1", "mulv",
               "down2", "up2", "sep", "scdec", "wd2", "len0", "len1", "len2")
_BIAS_ROW = {n: i for i, n in enumerate(_BIAS_ORDER)}
_BIAS_ROWS_PAD = 24     # 18 biases padded to a multiple of 8 sublanes


# ---------------------------------------------------------------------------
# The single fused kernel: whole VarAutoEncoder forward
# ---------------------------------------------------------------------------
def _make_kernel(Gp):
    def kernel(emb2_ref, vecsum_ref, nscore_ref, eps_ref,
               enc_mask_ref, seg_ref, sel_ref, dec_mask_ref,
               slab128_ref, slab256_ref, slab384_ref, bias_ref,
               mulv_ref, score_ref, len_ref, wordord_ref, vec_ref):
        slabs = {"slab128": slab128_ref, "slab256": slab256_ref,
                 "slab384": slab384_ref}

        def lin(x, name, act=None, bias=True):
            slab, r0, rows = _LAYOUT[name]
            w = slabs[slab][r0:r0 + rows, :]                 # static VMEM slice
            y = jnp.dot(x.astype(jnp.bfloat16), w,           # bf16 MXU, f32 acc
                        preferred_element_type=jnp.float32)
            if bias:
                r = _BIAS_ROW[name]
                y = y + bias_ref[r:r + 1, :_SLAB_COLS[slab]]
            if act == "leaky":
                y = jnp.where(y >= 0.0, y, 0.01 * y)
            return y

        def softmax_last(y):
            y = y - jnp.max(y, axis=-1, keepdims=True)
            e = jnp.exp(y)
            return e * pl.reciprocal(jnp.sum(e, axis=-1, keepdims=True),
                                     approx=True)

        def masked_softmax_last(y, valid):
            lane = jax.lax.broadcasted_iota(jnp.int32, y.shape, y.ndim - 1)
            return softmax_last(jnp.where(lane < valid, y, _NEG))

        def attention(x, name, add_mask):
            # Fused Q|K|V projection (one (128,384) matmul), then lane slices.
            qkv = lin(x, name)
            q = qkv[:, 0:HPAD]
            k = qkv[:, HPAD:2 * HPAD]
            v = qkv[:, 2 * HPAD:3 * HPAD]
            raw = jax.lax.dot_general(q, k, (((1,), (1,)), ((), ())),
                                      preferred_element_type=jnp.float32)
            raw = raw + add_mask                         # block-diagonal groups
            return jnp.dot(softmax_last(raw), v,
                           preferred_element_type=jnp.float32)

        # ------------------------------ MoveEncoder ------------------------------
        attn = attention(emb2_ref[...], "we_qkv", enc_mask_ref[...])   # (NLp, H)
        # per-move sum over sequence positions via one 0/1 segment-sum matmul
        word = jnp.tanh(jnp.dot(seg_ref[...], attn,
                                preferred_element_type=jnp.float32))   # (Np, H)
        vector = jnp.tanh(vecsum_ref[...])                             # (Np, H)
        # `ordered` == `word` in the source (same tokens, same weights) -> reuse.
        moves = jnp.concatenate([word, word, vector], axis=-1)         # (Np, 3H)

        score_bias = lin(nscore_ref[...], "score_enc")                 # (Np, 3H)
        # TODO(synk): source bug `move_enc = move_enc + score_bias` would add the
        # bias to only the LAST move's encoding; we use the stacked encodings.
        h = moves + score_bias
        h = lin(h, "down0", act="leaky")      # Dropout = identity (eval)
        h = lin(h, "down1", act="leaky")
        down = lin(h, "down2")                                         # (Np, H)

        mulv = lin(down, "mulv")                        # (Np, 2H): mu | log_var
        mulv_ref[...] = mulv
        mu = mulv[:, 0:HPAD]
        lv = mulv[:, HPAD:2 * HPAD]
        # reparameterization with uniform [0,1) noise (torch.rand), drawn in wrapper
        encoded = mu + jnp.exp(0.5 * lv) * eps_ref[...]

        # ------------------------------ MoveDecoder ------------------------------
        h = lin(encoded, "up0", act="leaky")  # Dropout = identity (eval)
        h = lin(h, "up1", act="leaky")
        ups = lin(h, "up2")                                            # (Np, H)

        sb = lin(ups, "sep")
        move_d = ups - sb
        score_ref[...] = lin(sb, "scdec")            # true value in lane 0

        # reshape(-1,3,H).permute(1,0,2) via ONE selector matmul + static slices
        sel3 = jnp.dot(sel_ref[...], move_d,
                       preferred_element_type=jnp.float32)             # (3Gp, H)
        word_enc = sel3[0:Gp]
        ord_enc = sel3[Gp:2 * Gp]
        vec_enc = sel3[2 * Gp:3 * Gp]

        # length decoder
        lh = jnp.concatenate([word_enc, ord_enc], axis=-1)             # (Gp, 2H)
        lh = lin(lh, "len0", act="leaky")
        lh = lin(lh, "len1", act="leaky")
        len_ref[...] = masked_softmax_last(lin(lh, "len2"), WORD_MAX)

        # word decoder (shared weights) batched over {word, ordered}; the
        # additive block-diagonal mask keeps the two groups' attentions separate
        # and masks the padded key rows.
        wo = sel3[0:2 * Gp]                                            # (2Gp, H)
        ad = attention(wo, "wd_qkv", dec_mask_ref[...])
        wh = lin(ad, "wd0", act="leaky")
        wh = lin(wh, "wd1", act="leaky")
        wordord_ref[...] = masked_softmax_last(lin(wh, "wd2"), VOCAB_SZ)

        # vector decoder: embeddings as bias-free projections, fused row|col|dir
        vec_ref[...] = lin(vec_enc, "vecdec", bias=False)              # (Gp, 3H)

    return kernel


# ---------------------------------------------------------------------------
# Forward wrapper (jitted): embedding gathers + ONE pallas_call + un-padding
# ---------------------------------------------------------------------------
def _round_up(x, m):
    return ((x + m - 1) // m) * m


def _forward_impl(pp, tokens, rows, cols, dirs, scores, key):
    N, L = tokens.shape
    G = N // 3
    Np = _round_up(max(N, 8), 8)
    Gp = _round_up(max(G, 8), 8)
    NLp = Np * L                            # multiple of 8 since Np is
    f32 = jnp.float32

    # wrapper-side embedding gathers (tiny) and score normalization
    emb2 = (pp["letter_emb"][tokens] + pp["positional"][:L][None, :, :]
            ).reshape(N * L, HPAD)
    emb2 = jnp.pad(emb2, ((0, NLp - N * L), (0, 0)))                 # (NLp, 128)
    vecsum = pp["row_emb"][rows] + pp["col_emb"][cols] + pp["dir_emb"][dirs]
    vecsum = jnp.pad(vecsum, ((0, Np - N), (0, 0)))                  # (Np, 128)

    s = scores.astype(f32).reshape(-1, 1)
    s = s - jnp.min(s)
    mx = jnp.max(s)
    s = jnp.where(mx != 0.0, s / jnp.where(mx != 0.0, mx, 1.0), s)
    nscore = jnp.pad(s, ((0, Np - N), (0, HPAD - 1)))                # (Np, 128)

    # uniform [0,1) reparameterization noise (torch.rand); drawn outside the
    # kernel because the TPU hardware PRNG has no interpret-mode lowering.
    eps = jax.random.uniform(key, (Np, HPAD), f32)

    # trace-time numpy constants: block-diagonal masks / segment-sum / selector
    li = np.arange(NLp)
    enc_mask = np.where((li[:, None] // L) == (li[None, :] // L),
                        0.0, _NEG).astype(np.float32)                # (NLp, NLp)
    seg = ((li[None, :] // L) == np.arange(Np)[:, None]).astype(np.float32)
    r = np.arange(3 * Gp)
    sel = (((r % Gp)[:, None] < G) &
           (np.arange(Np)[None, :] ==
            3 * (r % Gp)[:, None] + (r // Gp)[:, None])).astype(np.float32)
    di = np.arange(2 * Gp)
    dec_mask = np.where(((di[:, None] // Gp) == (di[None, :] // Gp)) &
                        ((di[None, :] % Gp) < G),
                        0.0, _NEG).astype(np.float32)                # (2Gp, 2Gp)

    operands = (emb2, vecsum, nscore, eps,
                jnp.asarray(enc_mask), jnp.asarray(seg),
                jnp.asarray(sel), jnp.asarray(dec_mask),
                pp["slab128"], pp["slab256"], pp["slab384"], pp["bias"])

    out_shapes = (
        jax.ShapeDtypeStruct((Np, 2 * HPAD), f32),       # mu | log_var
        jax.ShapeDtypeStruct((Np, HPAD), f32),           # score_raw
        jax.ShapeDtypeStruct((Gp, HPAD), f32),           # length_raw
        jax.ShapeDtypeStruct((2 * Gp, HPAD), f32),       # word_raw | ordered_raw
        jax.ShapeDtypeStruct((Gp, 3 * HPAD), f32),       # row | col | dir
    )

    # advisory cost estimate for the XLA scheduler
    matmuls = [
        (NLp, 128, 384), (NLp, 128, NLp), (NLp, NLp, 128), (Np, NLp, 128),
        (Np, 128, 384), (Np, 384, 256), (Np, 256, 256), (Np, 256, 128),
        (Np, 128, 256),
        (Np, 128, 256), (Np, 256, 256), (Np, 256, 128),
        (Np, 128, 128), (Np, 128, 128),
        (3 * Gp, Np, 128),
        (Gp, 256, 128), (Gp, 128, 128), (Gp, 128, 128),
        (2 * Gp, 128, 384), (2 * Gp, 128, 2 * Gp), (2 * Gp, 2 * Gp, 128),
        (2 * Gp, 128, 256), (2 * Gp, 256, 256), (2 * Gp, 256, 128),
        (Gp, 128, 384),
    ]
    flops = 2 * sum(m * k * n for m, k, n in matmuls)
    transcendentals = NLp * NLp + 4 * Gp * Gp + 3 * Np * HPAD + 3 * Gp * HPAD
    bytes_accessed = (sum(int(np.prod(o.shape)) * o.dtype.itemsize
                          for o in operands)
                      + sum(int(np.prod(o.shape)) * 4 for o in out_shapes))

    vmem = pl.BlockSpec(memory_space=pltpu.MemorySpace.VMEM)
    outs = pl.pallas_call(
        _make_kernel(Gp),
        out_shape=out_shapes,
        in_specs=[vmem] * len(operands),
        out_specs=(vmem,) * len(out_shapes),
        cost_estimate=pl.CostEstimate(flops=flops,
                                      transcendentals=transcendentals,
                                      bytes_accessed=bytes_accessed),
    )(*operands)

    mulv_p, score_p, len_p, wo_p, vec_p = outs
    enc_mu = mulv_p[:N, :MOVE_EMB]
    enc_log_var = mulv_p[:N, HPAD:HPAD + MOVE_EMB]
    score_raw = score_p[:N, :1]
    length_raw = len_p[:G, :WORD_MAX]
    word_raw = wo_p[:G, :VOCAB_SZ]
    ordered_raw = wo_p[Gp:Gp + G, :VOCAB_SZ]
    vec_raw = (vec_p[:G, 0:WORD_MAX],
               vec_p[:G, HPAD:HPAD + WORD_MAX],
               vec_p[:G, 2 * HPAD:2 * HPAD + 2])
    decoded = (length_raw, word_raw, ordered_raw, vec_raw, score_raw)
    return decoded, enc_mu, enc_log_var


var_auto_encoder_forward = jax.jit(_forward_impl)


# ---------------------------------------------------------------------------
# Deterministic parameter construction (matches module __init__ shapes)
# ---------------------------------------------------------------------------
def make_params(key):
    keys = iter(jax.random.split(key, 128))

    def lin_init(in_sz, out_sz):
        bound = float(in_sz) ** -0.5
        w = jax.random.uniform(next(keys), (in_sz, out_sz), jnp.float32, -bound, bound)
        b = jax.random.uniform(next(keys), (1, out_sz), jnp.float32, -bound, bound)
        return (w, b)

    def emb_init(num, dim):
        return jax.random.normal(next(keys), (num, dim), jnp.float32)

    p = {}
    # --- MoveEncoder ---
    p["letter_emb"] = emb_init(VOCAB_SZ, HIDDEN)
    p["positional"] = emb_init(WORD_MAX, HIDDEN)
    p["word_enc_sa"] = {"Q": lin_init(HIDDEN, HIDDEN), "K": lin_init(HIDDEN, HIDDEN),
                        "V": lin_init(HIDDEN, HIDDEN)}
    p["row_emb"] = emb_init(WORD_MAX, HIDDEN)
    p["col_emb"] = emb_init(WORD_MAX, HIDDEN)
    p["dir_emb"] = emb_init(2, HIDDEN)
    p["score_enc"] = lin_init(1, 3 * HIDDEN)
    p["down0"] = lin_init(3 * HIDDEN, 200)
    p["down1"] = lin_init(200, 150)
    p["down2"] = lin_init(150, MOVE_EMB)
    p["enc_mu"] = lin_init(MOVE_EMB, MOVE_EMB)
    p["enc_log_var"] = lin_init(MOVE_EMB, MOVE_EMB)
    # --- MoveDecoder ---
    p["up0"] = lin_init(MOVE_EMB, 150)
    p["up1"] = lin_init(150, 200)
    p["up2"] = lin_init(200, MOVE_EMB)
    p["score_separate"] = lin_init(MOVE_EMB, MOVE_EMB)
    p["score_dec"] = lin_init(MOVE_EMB, 1)
    p["word_dec_sa"] = {"Q": lin_init(HIDDEN, HIDDEN), "K": lin_init(HIDDEN, HIDDEN),
                        "V": lin_init(HIDDEN, HIDDEN)}
    p["wd0"] = lin_init(HIDDEN, 150)     # WordDecoder hdn0 (undefined in source)
    p["wd1"] = lin_init(150, 200)        # WordDecoder hdn1
    p["wd2"] = lin_init(200, VOCAB_SZ)
    p["len0"] = lin_init(2 * HIDDEN, 100)
    p["len1"] = lin_init(100, 50)
    p["len2"] = lin_init(50, WORD_MAX)
    # VectorDecoder embeddings (used as bias-free linear projections)
    p["row_dec"] = emb_init(HIDDEN, WORD_MAX)
    p["col_dec"] = emb_init(HIDDEN, WORD_MAX)
    p["dir_dec"] = emb_init(HIDDEN, 2)
    return p


# ---------------------------------------------------------------------------
# One-time padding + packing into 3 bf16 weight slabs and 1 f32 bias slab
# ---------------------------------------------------------------------------
def _place(dst, src, r0, c0):
    return dst.at[r0:r0 + src.shape[0], c0:c0 + src.shape[1]].set(src)


def pad_params(p):
    f32 = jnp.float32

    def plain(wb, rpad, cpad):
        w, b = wb
        return (_place(jnp.zeros((rpad, cpad), f32), w, 0, 0),
                _place(jnp.zeros((1, cpad), f32), b, 0, 0))

    def fuse_cols(parts, rpad, cpad, with_bias=True):
        W = jnp.zeros((rpad, cpad), f32)
        B = jnp.zeros((1, cpad), f32) if with_bias else None
        for i, wb in enumerate(parts):
            w, b = wb
            W = _place(W, w, 0, i * HPAD)
            if with_bias:
                B = _place(B, b, 0, i * HPAD)
        return (W, B)

    blocks = {}
    blocks["we_qkv"] = fuse_cols([p["word_enc_sa"]["Q"], p["word_enc_sa"]["K"],
                                  p["word_enc_sa"]["V"]], HPAD, 3 * HPAD)
    blocks["wd_qkv"] = fuse_cols([p["word_dec_sa"]["Q"], p["word_dec_sa"]["K"],
                                  p["word_dec_sa"]["V"]], HPAD, 3 * HPAD)
    blocks["mulv"] = fuse_cols([p["enc_mu"], p["enc_log_var"]], HPAD, 2 * HPAD)
    blocks["vecdec"] = fuse_cols([(p["row_dec"], None), (p["col_dec"], None),
                                  (p["dir_dec"], None)], HPAD, 3 * HPAD,
                                 with_bias=False)

    # score_enc: (1, 300) -> (128, 384), 100-wide column segments at 0/128/256
    w, b = p["score_enc"]
    W = jnp.zeros((HPAD, 3 * HPAD), f32)
    B = jnp.zeros((1, 3 * HPAD), f32)
    for i in range(3):
        W = _place(W, w[:, i * HIDDEN:(i + 1) * HIDDEN], 0, i * HPAD)
        B = _place(B, b[:, i * HIDDEN:(i + 1) * HIDDEN], 0, i * HPAD)
    blocks["score_enc"] = (W, B)

    # down0: (300, 200) -> (384, 256), 100-wide row segments at 0/128/256
    w, b = p["down0"]
    W = jnp.zeros((3 * HPAD, 256), f32)
    for i in range(3):
        W = _place(W, w[i * HIDDEN:(i + 1) * HIDDEN, :], i * HPAD, 0)
    blocks["down0"] = (W, _place(jnp.zeros((1, 256), f32), b, 0, 0))

    # len0: (200, 100) -> (256, 128), 100-wide row segments at 0/128
    w, b = p["len0"]
    W = jnp.zeros((2 * HPAD, HPAD), f32)
    for i in range(2):
        W = _place(W, w[i * HIDDEN:(i + 1) * HIDDEN, :], i * HPAD, 0)
    blocks["len0"] = (W, _place(jnp.zeros((1, HPAD), f32), b, 0, 0))

    blocks["down1"] = plain(p["down1"], 256, 256)
    blocks["down2"] = plain(p["down2"], 256, HPAD)
    blocks["up0"] = plain(p["up0"], HPAD, 256)
    blocks["up1"] = plain(p["up1"], 256, 256)
    blocks["up2"] = plain(p["up2"], 256, HPAD)
    blocks["sep"] = plain(p["score_separate"], HPAD, HPAD)
    blocks["scdec"] = plain(p["score_dec"], HPAD, HPAD)
    blocks["wd0"] = plain(p["wd0"], HPAD, 256)
    blocks["wd1"] = plain(p["wd1"], 256, 256)
    blocks["wd2"] = plain(p["wd2"], 256, HPAD)
    blocks["len1"] = plain(p["len1"], HPAD, HPAD)
    blocks["len2"] = plain(p["len2"], HPAD, HPAD)

    pp = {}
    for slab, order in _SLAB_ORDERS.items():
        mats = []
        off = 0
        for name in order:
            wmat = blocks[name][0]
            assert _LAYOUT[name] == (slab, off, wmat.shape[0])
            mats.append(wmat)
            off += wmat.shape[0]
        pp[slab] = jnp.concatenate(mats, axis=0).astype(jnp.bfloat16)

    bias = jnp.zeros((_BIAS_ROWS_PAD, 3 * HPAD), f32)
    for name in _BIAS_ORDER:
        b = blocks[name][1]
        bias = bias.at[_BIAS_ROW[name], :b.shape[1]].set(b[0])
    pp["bias"] = bias

    pp["letter_emb"] = _place(jnp.zeros((VOCAB_SZ, HPAD), f32), p["letter_emb"], 0, 0)
    pp["positional"] = _place(jnp.zeros((WORD_MAX, HPAD), f32), p["positional"], 0, 0)
    pp["row_emb"] = _place(jnp.zeros((WORD_MAX, HPAD), f32), p["row_emb"], 0, 0)
    pp["col_emb"] = _place(jnp.zeros((WORD_MAX, HPAD), f32), p["col_emb"], 0, 0)
    pp["dir_emb"] = _place(jnp.zeros((2, HPAD), f32), p["dir_emb"], 0, 0)
    return pp


# ---------------------------------------------------------------------------
if __name__ == "__main__":
    root = jax.random.PRNGKey(0)
    k_params, k_data, k_eps = jax.random.split(root, 3)

    params = make_params(k_params)
    pparams = pad_params(params)

    # 6 deterministic moves (divisible by 3, as MoveDecoder's reshape requires),
    # each with 5 letter tokens, row, col, dir and a scalar score.
    n_moves, word_len = 6, 5
    kt, kr, kc, kd, ks = jax.random.split(k_data, 5)
    tokens = jax.random.randint(kt, (n_moves, word_len), 0, VOCAB_SZ)
    rows = jax.random.randint(kr, (n_moves,), 0, WORD_MAX)
    cols = jax.random.randint(kc, (n_moves,), 0, WORD_MAX)
    dirs = jax.random.randint(kd, (n_moves,), 0, 2)
    scores = jax.random.uniform(ks, (n_moves,), jnp.float32, 0.0, 10.0)

    decoded, enc_mu, enc_log_var = var_auto_encoder_forward(
        pparams, tokens, rows, cols, dirs, scores, k_eps)
    jax.block_until_ready((decoded, enc_mu, enc_log_var))

    length_raw, word_raw, ordered_raw, vec_raw, score_raw = decoded
    g = n_moves // 3
    assert length_raw.shape == (g, WORD_MAX)
    assert word_raw.shape == (g, VOCAB_SZ)
    assert ordered_raw.shape == (g, VOCAB_SZ)
    assert vec_raw[0].shape == (g, WORD_MAX)
    assert vec_raw[1].shape == (g, WORD_MAX)
    assert vec_raw[2].shape == (g, 2)
    assert score_raw.shape == (n_moves, 1)
    assert enc_mu.shape == (n_moves, MOVE_EMB)
    assert enc_log_var.shape == (n_moves, MOVE_EMB)

    for arr in (length_raw, word_raw, ordered_raw, *vec_raw, score_raw,
                enc_mu, enc_log_var):
        assert bool(jnp.all(jnp.isfinite(arr)))
    # softmax heads must sum to ~1 over their true widths (padding masked out)
    assert float(jnp.max(jnp.abs(jnp.sum(length_raw, axis=-1) - 1.0))) < 1e-2
    assert float(jnp.max(jnp.abs(jnp.sum(word_raw, axis=-1) - 1.0))) < 1e-2
    assert float(jnp.max(jnp.abs(jnp.sum(ordered_raw, axis=-1) - 1.0))) < 1e-2

    print("KERNEL_OK")
</pallas_src>

<mosaic_0001>
module attributes {stable_mosaic.version = 11 : i64} {
  func.func @kernel(%arg0: memref<40x128xf32, #tpu.memory_space<vmem>>, %arg1: memref<8x128xf32, #tpu.memory_space<vmem>>, %arg2: memref<8x128xf32, #tpu.memory_space<vmem>>, %arg3: memref<8x128xf32, #tpu.memory_space<vmem>>, %arg4: memref<40x40xf32, #tpu.memory_space<vmem>>, %arg5: memref<8x40xf32, #tpu.memory_space<vmem>>, %arg6: memref<24x8xf32, #tpu.memory_space<vmem>>, %arg7: memref<16x16xf32, #tpu.memory_space<vmem>>, %arg8: memref<1536x128xbf16, #tpu.memory_space<vmem>>, %arg9: memref<1536x256xbf16, #tpu.memory_space<vmem>>, %arg10: memref<512x384xbf16, #tpu.memory_space<vmem>>, %arg11: memref<24x384xf32, #tpu.memory_space<vmem>>, %arg12: memref<8x256xf32, #tpu.memory_space<vmem>>, %arg13: memref<8x128xf32, #tpu.memory_space<vmem>>, %arg14: memref<8x128xf32, #tpu.memory_space<vmem>>, %arg15: memref<16x128xf32, #tpu.memory_space<vmem>>, %arg16: memref<8x384xf32, #tpu.memory_space<vmem>>) attributes {dimension_semantics = [], scalar_prefetch = 0 : i64, scratch_operands = 0 : i64, tpu.core_type = #tpu.core_type<tc>} {
    %c0 = arith.constant 0 : index
    %c0_0 = arith.constant 0 : index
    %0 = vector.load %arg0[%c0, %c0_0] : memref<40x128xf32, #tpu.memory_space<vmem>>, vector<40x128xf32>
    %c0_1 = arith.constant 0 : index
    %c0_2 = arith.constant 0 : index
    %1 = vector.load %arg4[%c0_1, %c0_2] : memref<40x40xf32, #tpu.memory_space<vmem>>, vector<40x40xf32>
    %c0_3 = arith.constant 0 : index
    %c0_4 = arith.constant 0 : index
    %2 = vector.load %arg10[%c0_3, %c0_4] : memref<512x384xbf16, #tpu.memory_space<vmem>>, vector<128x384xbf16>
    %3 = arith.truncf %0 : vector<40x128xf32> to vector<40x128xbf16>
    %cst = arith.constant dense<0.000000e+00> : vector<40x384xf32>
    %4 = tpu.matmul %3, %2, %cst {dimension_numbers = #tpu.dot_dimension_numbers<[1], [0], [0], [1], [0, 0, 1, 1], [], []>} : vector<40x128xbf16>, vector<128x384xbf16>, vector<40x384xf32> -> vector<40x384xf32>
    %c0_5 = arith.constant 0 : index
    %c0_6 = arith.constant 0 : index
    %5 = vector.load %arg11[%c0_5, %c0_6] : memref<24x384xf32, #tpu.memory_space<vmem>>, vector<1x384xf32>
    %6 = vector.broadcast %5 : vector<1x384xf32> to vector<40x384xf32>
    %7 = arith.addf %4, %6 : vector<40x384xf32>
    %8 = vector.extract_strided_slice %7 {offsets = [0, 0], sizes = [40, 128], strides = [1, 1]} : vector<40x384xf32> to vector<40x128xf32>
    %9 = vector.extract_strided_slice %7 {offsets = [0, 128], sizes = [40, 128], strides = [1, 1]} : vector<40x384xf32> to vector<40x128xf32>
    %10 = vector.extract_strided_slice %7 {offsets = [0, 256], sizes = [40, 128], strides = [1, 1]} : vector<40x384xf32> to vector<40x128xf32>
    %cst_7 = arith.constant dense<0.000000e+00> : vector<40x40xf32>
    %11 = tpu.matmul %8, %9, %cst_7 {dimension_numbers = #tpu.dot_dimension_numbers<[1], [1], [0], [0], [0, 0, 1, 0], [], []>} : vector<40x128xf32>, vector<40x128xf32>, vector<40x40xf32> -> vector<40x40xf32>
    %12 = arith.addf %11, %1 : vector<40x40xf32>
    %cst_8 = arith.constant dense<0xFF800000> : vector<40xf32>
    %13 = vector.multi_reduction <maximumf>, %12, %cst_8 [1] : vector<40x40xf32> to vector<40xf32>
    %14 = vector.shape_cast %13 : vector<40xf32> to vector<40x1xf32>
    %15 = vector.broadcast %14 : vector<40x1xf32> to vector<40x40xf32>
    %16 = arith.subf %12, %15 : vector<40x40xf32>
    %17 = math.exp %16 : vector<40x40xf32>
    %cst_9 = arith.constant dense<0.000000e+00> : vector<40xf32>
    %18 = vector.multi_reduction <add>, %17, %cst_9 [1] : vector<40x40xf32> to vector<40xf32>
    %19 = vector.shape_cast %18 : vector<40xf32> to vector<40x1xf32>
    %20 = tpu.reciprocal %19 {approx = true} : vector<40x1xf32> -> vector<40x1xf32>
    %21 = vector.broadcast %20 : vector<40x1xf32> to vector<40x40xf32>
    %22 = arith.mulf %17, %21 : vector<40x40xf32>
    %cst_10 = arith.constant dense<0.000000e+00> : vector<40x128xf32>
    %23 = tpu.matmul %22, %10, %cst_10 {dimension_numbers = #tpu.dot_dimension_numbers<[1], [0], [0], [1], [0, 0, 1, 1], [], []>} : vector<40x40xf32>, vector<40x128xf32>, vector<40x128xf32> -> vector<40x128xf32>
    %c0_11 = arith.constant 0 : index
    %c0_12 = arith.constant 0 : index
    %24 = vector.load %arg5[%c0_11, %c0_12] : memref<8x40xf32, #tpu.memory_space<vmem>>, vector<8x40xf32>
    %cst_13 = arith.constant dense<0.000000e+00> : vector<8x128xf32>
    %25 = tpu.matmul %24, %23, %cst_13 {dimension_numbers = #tpu.dot_dimension_numbers<[1], [0], [0], [1], [0, 0, 1, 1], [], []>} : vector<8x40xf32>, vector<40x128xf32>, vector<8x128xf32> -> vector<8x128xf32>
    %26 = math.tanh %25 : vector<8x128xf32>
    %c0_14 = arith.constant 0 : index
    %c0_15 = arith.constant 0 : index
    %27 = vector.load %arg1[%c0_14, %c0_15] : memref<8x128xf32, #tpu.memory_space<vmem>>, vector<8x128xf32>
    %28 = math.tanh %27 : vector<8x128xf32>
    %29 = tpu.concatenate %26, %26, %28 in 1 : vector<8x128xf32>, vector<8x128xf32>, vector<8x128xf32> -> vector<8x384xf32>
    %c0_16 = arith.constant 0 : index
    %c0_17 = arith.constant 0 : index
    %30 = vector.load %arg2[%c0_16, %c0_17] : memref<8x128xf32, #tpu.memory_space<vmem>>, vector<8x128xf32>
    %c256 = arith.constant 256 : index
    %c0_18 = arith.constant 0 : index
    %31 = vector.load %arg10[%c256, %c0_18] : memref<512x384xbf16, #tpu.memory_space<vmem>>, vector<128x384xbf16>
    %32 = arith.truncf %30 : vector<8x128xf32> to vector<8x128xbf16>
    %cst_19 = arith.constant dense<0.000000e+00> : vector<8x384xf32>
    %33 = tpu.matmul %32, %31, %cst_19 {dimension_numbers = #tpu.dot_dimension_numbers<[1], [0], [0], [1], [0, 0, 1, 1], [], []>} : vector<8x128xbf16>, vector<128x384xbf16>, vector<8x384xf32> -> vector<8x384xf32>
    %c2 = arith.constant 2 : index
    %c0_20 = arith.constant 0 : index
    %34 = vector.load %arg11[%c2, %c0_20] : memref<24x384xf32, #tpu.memory_space<vmem>>, vector<1x384xf32>
    %35 = vector.broadcast %34 : vector<1x384xf32> to vector<8x384xf32>
    %36 = arith.addf %33, %35 : vector<8x384xf32>
    %37 = arith.addf %29, %36 : vector<8x384xf32>
    %c0_21 = arith.constant 0 : index
    %c0_22 = arith.constant 0 : index
    %38 = vector.load %arg9[%c0_21, %c0_22] : memref<1536x256xbf16, #tpu.memory_space<vmem>>, vector<384x256xbf16>
    %39 = arith.truncf %37 : vector<8x384xf32> to vector<8x384xbf16>
    %cst_23 = arith.constant dense<0.000000e+00> : vector<8x256xf32>
    %40 = tpu.matmul %39, %38, %cst_23 {dimension_numbers = #tpu.dot_dimension_numbers<[1], [0], [0], [1], [0, 0, 1, 1], [], []>} : vector<8x384xbf16>, vector<384x256xbf16>, vector<8x256xf32> -> vector<8x256xf32>
    %c3 = arith.constant 3 : index
    %c0_24 = arith.constant 0 : index
    %41 = vector.load %arg11[%c3, %c0_24] : memref<24x384xf32, #tpu.memory_space<vmem>>, vector<1x256xf32>
    %42 = vector.broadcast %41 : vector<1x256xf32> to vector<8x256xf32>
    %43 = arith.addf %40, %42 : vector<8x256xf32>
    %cst_25 = arith.constant 0.000000e+00 : f32
    %44 = vector.broadcast %cst_25 : f32 to vector<8x256xf32>
    %45 = arith.cmpf oge, %43, %44 : vector<8x256xf32>
    %cst_26 = arith.constant 0.00999999977 : f32
    %46 = vector.broadcast %cst_26 : f32 to vector<8x256xf32>
    %47 = arith.mulf %46, %43 : vector<8x256xf32>
    %48 = arith.select %45, %43, %47 : vector<8x256xi1>, vector<8x256xf32>
    %c384 = arith.constant 384 : index
    %c0_27 = arith.constant 0 : index
    %49 = vector.load %arg9[%c384, %c0_27] : memref<1536x256xbf16, #tpu.memory_space<vmem>>, vector<256x256xbf16>
    %50 = arith.truncf %48 : vector<8x256xf32> to vector<8x256xbf16>
    %cst_28 = arith.constant dense<0.000000e+00> : vector<8x256xf32>
    %51 = tpu.matmul %50, %49, %cst_28 {dimension_numbers = #tpu.dot_dimension_numbers<[1], [0], [0], [1], [0, 0, 1, 1], [], []>} : vector<8x256xbf16>, vector<256x256xbf16>, vector<8x256xf32> -> vector<8x256xf32>
    %c4 = arith.constant 4 : index
    %c0_29 = arith.constant 0 : index
    %52 = vector.load %arg11[%c4, %c0_29] : memref<24x384xf32, #tpu.memory_space<vmem>>, vector<1x256xf32>
    %53 = vector.broadcast %52 : vector<1x256xf32> to vector<8x256xf32>
    %54 = arith.addf %51, %53 : vector<8x256xf32>
    %cst_30 = arith.constant 0.000000e+00 : f32
    %55 = vector.broadcast %cst_30 : f32 to vector<8x256xf32>
    %56 = arith.cmpf oge, %54, %55 : vector<8x256xf32>
    %cst_31 = arith.constant 0.00999999977 : f32
    %57 = vector.broadcast %cst_31 : f32 to vector<8x256xf32>
    %58 = arith.mulf %57, %54 : vector<8x256xf32>
    %59 = arith.select %56, %54, %58 : vector<8x256xi1>, vector<8x256xf32>
    %c0_32 = arith.constant 0 : index
    %c0_33 = arith.constant 0 : index
    %60 = vector.load %arg8[%c0_32, %c0_33] : memref<1536x128xbf16, #tpu.memory_space<vmem>>, vector<256x128xbf16>
    %61 = arith.truncf %59 : vector<8x256xf32> to vector<8x256xbf16>
    %cst_34 = arith.constant dense<0.000000e+00> : vector<8x128xf32>
    %62 = tpu.matmul %61, %60, %cst_34 {dimension_numbers = #tpu.dot_dimension_numbers<[1], [0], [0], [1], [0, 0, 1, 1], [], []>} : vector<8x256xbf16>, vector<256x128xbf16>, vector<8x128xf32> -> vector<8x128xf32>
    %c10 = arith.constant 10 : index
    %c0_35 = arith.constant 0 : index
    %63 = vector.load %arg11[%c10, %c0_35] : memref<24x384xf32, #tpu.memory_space<vmem>>, vector<1x128xf32>
    %64 = vector.broadcast %63 : vector<1x128xf32> to vector<8x128xf32>
    %65 = arith.addf %62, %64 : vector<8x128xf32>
    %c1408 = arith.constant 1408 : index
    %c0_36 = arith.constant 0 : index
    %66 = vector.load %arg9[%c1408, %c0_36] : memref<1536x256xbf16, #tpu.memory_space<vmem>>, vector<128x256xbf16>
    %67 = arith.truncf %65 : vector<8x128xf32> to vector<8x128xbf16>
    %cst_37 = arith.constant dense<0.000000e+00> : vector<8x256xf32>
    %68 = tpu.matmul %67, %66, %cst_37 {dimension_numbers = #tpu.dot_dimension_numbers<[1], [0], [0], [1], [0, 0, 1, 1], [], []>} : vector<8x128xbf16>, vector<128x256xbf16>, vector<8x256xf32> -> vector<8x256xf32>
    %c9 = arith.constant 9 : index
    %c0_38 = arith.constant 0 : index
    %69 = vector.load %arg11[%c9, %c0_38] : memref<24x384xf32, #tpu.memory_space<vmem>>, vector<1x256xf32>
    %70 = vector.broadcast %69 : vector<1x256xf32> to vector<8x256xf32>
    %71 = arith.addf %68, %70 : vector<8x256xf32>
    %c0_39 = arith.constant 0 : index
    %c0_40 = arith.constant 0 : index
    %72 = vector.load %arg12[%c0_39, %c0_40] : memref<8x256xf32, #tpu.memory_space<vmem>>, vector<8x256xf32>
    tpu.vector_store %arg12[%c0_39, %c0_40], %71 {strides = array<i32>} : memref<8x256xf32, #tpu.memory_space<vmem>>, vector<8x256xf32>,
    %73 = vector.extract_strided_slice %71 {offsets = [0, 0], sizes = [8, 128], strides = [1, 1]} : vector<8x256xf32> to vector<8x128xf32>
    %74 = vector.extract_strided_slice %71 {offsets = [0, 128], sizes = [8, 128], strides = [1, 1]} : vector<8x256xf32> to vector<8x128xf32>
    %cst_41 = arith.constant 5.000000e-01 : f32
    %75 = vector.broadcast %cst_41 : f32 to vector<8x128xf32>
    %76 = arith.mulf %75, %74 : vector<8x128xf32>
    %77 = math.exp %76 : vector<8x128xf32>
    %c0_42 = arith.constant 0 : index
    %c0_43 = arith.constant 0 : index
    %78 = vector.load %arg3[%c0_42, %c0_43] : memref<8x128xf32, #tpu.memory_space<vmem>>, vector<8x128xf32>
    %79 = arith.mulf %77, %78 : vector<8x128xf32>
    %80 = arith.addf %73, %79 : vector<8x128xf32>
    %c640 = arith.constant 640 : index
    %c0_44 = arith.constant 0 : index
    %81 = vector.load %arg9[%c640, %c0_44] : memref<1536x256xbf16, #tpu.memory_space<vmem>>, vector<128x256xbf16>
    %82 = arith.truncf %80 : vector<8x128xf32> to vector<8x128xbf16>
    %cst_45 = arith.constant dense<0.000000e+00> : vector<8x256xf32>
    %83 = tpu.matmul %82, %81, %cst_45 {dimension_numbers = #tpu.dot_dimension_numbers<[1], [0], [0], [1], [0, 0, 1, 1], [], []>} : vector<8x128xbf16>, vector<128x256xbf16>, vector<8x256xf32> -> vector<8x256xf32>
    %c5 = arith.constant 5 : index
    %c0_46 = arith.constant 0 : index
    %84 = vector.load %arg11[%c5, %c0_46] : memref<24x384xf32, #tpu.memory_space<vmem>>, vector<1x256xf32>
    %85 = vector.broadcast %84 : vector<1x256xf32> to vector<8x256xf32>
    %86 = arith.addf %83, %85 : vector<8x256xf32>
    %cst_47 = arith.constant 0.000000e+00 : f32
    %87 = vector.broadcast %cst_47 : f32 to vector<8x256xf32>
    %88 = arith.cmpf oge, %86, %87 : vector<8x256xf32>
    %cst_48 = arith.constant 0.00999999977 : f32
    %89 = vector.broadcast %cst_48 : f32 to vector<8x256xf32>
    %90 = arith.mulf %89, %86 : vector<8x256xf32>
    %91 = arith.select %88, %86, %90 : vector<8x256xi1>, vector<8x256xf32>
    %c768 = arith.constant 768 : index
    %c0_49 = arith.constant 0 : index
    %92 = vector.load %arg9[%c768, %c0_49] : memref<1536x256xbf16, #tpu.memory_space<vmem>>, vector<256x256xbf16>
    %93 = arith.truncf %91 : vector<8x256xf32> to vector<8x256xbf16>
    %cst_50 = arith.constant dense<0.000000e+00> : vector<8x256xf32>
    %94 = tpu.matmul %93, %92, %cst_50 {dimension_numbers = #tpu.dot_dimension_numbers<[1], [0], [0], [1], [0, 0, 1, 1], [], []>} : vector<8x256xbf16>, vector<256x256xbf16>, vector<8x256xf32> -> vector<8x256xf32>
    %c6 = arith.constant 6 : index
    %c0_51 = arith.constant 0 : index
    %95 = vector.load %arg11[%c6, %c0_51] : memref<24x384xf32, #tpu.memory_space<vmem>>, vector<1x256xf32>
    %96 = vector.broadcast %95 : vector<1x256xf32> to vector<8x256xf32>
    %97 = arith.addf %94, %96 : vector<8x256xf32>
    %cst_52 = arith.constant 0.000000e+00 : f32
    %98 = vector.broadcast %cst_52 : f32 to vector<8x256xf32>
    %99 = arith.cmpf oge, %97, %98 : vector<8x256xf32>
    %cst_53 = arith.constant 0.00999999977 : f32
    %100 = vector.broadcast %cst_53 : f32 to vector<8x256xf32>
    %101 = arith.mulf %100, %97 : vector<8x256xf32>
    %102 = arith.select %99, %97, %101 : vector<8x256xi1>, vector<8x256xf32>
    %c256_54 = arith.constant 256 : index
    %c0_55 = arith.constant 0 : index
    %103 = vector.load %arg8[%c256_54, %c0_55] : memref<1536x128xbf16, #tpu.memory_space<vmem>>, vector<256x128xbf16>
    %104 = arith.truncf %102 : vector<8x256xf32> to vector<8x256xbf16>
    %cst_56 = arith.constant dense<0.000000e+00> : vector<8x128xf32>
    %105 = tpu.matmul %104, %103, %cst_56 {dimension_numbers = #tpu.dot_dimension_numbers<[1], [0], [0], [1], [0, 0, 1, 1], [], []>} : vector<8x256xbf16>, vector<256x128xbf16>, vector<8x128xf32> -> vector<8x128xf32>
    %c11 = arith.constant 11 : index
    %c0_57 = arith.constant 0 : index
    %106 = vector.load %arg11[%c11, %c0_57] : memref<24x384xf32, #tpu.memory_space<vmem>>, vector<1x128xf32>
    %107 = vector.broadcast %106 : vector<1x128xf32> to vector<8x128xf32>
    %108 = arith.addf %105, %107 : vector<8x128xf32>
    %c512 = arith.constant 512 : index
    %c0_58 = arith.constant 0 : index
    %109 = vector.load %arg8[%c512, %c0_58] : memref<1536x128xbf16, #tpu.memory_space<vmem>>, vector<128x128xbf16>
    %110 = arith.truncf %108 : vector<8x128xf32> to vector<8x128xbf16>
    %cst_59 = arith.constant dense<0.000000e+00> : vector<8x128xf32>
    %111 = tpu.matmul %110, %109, %cst_59 {dimension_numbers = #tpu.dot_dimension_numbers<[1], [0], [0], [1], [0, 0, 1, 1], [], []>} : vector<8x128xbf16>, vector<128x128xbf16>, vector<8x128xf32> -> vector<8x128xf32>
    %c12 = arith.constant 12 : index
    %c0_60 = arith.constant 0 : index
    %112 = vector.load %arg11[%c12, %c0_60] : memref<24x384xf32, #tpu.memory_space<vmem>>, vector<1x128xf32>
    %113 = vector.broadcast %112 : vector<1x128xf32> to vector<8x128xf32>
    %114 = arith.addf %111, %113 : vector<8x128xf32>
    %115 = arith.subf %108, %114 : vector<8x128xf32>
    %c640_61 = arith.constant 640 : index
    %c0_62 = arith.constant 0 : index
    %116 = vector.load %arg8[%c640_61, %c0_62] : memref<1536x128xbf16, #tpu.memory_space<vmem>>, vector<128x128xbf16>
    %117 = arith.truncf %114 : vector<8x128xf32> to vector<8x128xbf16>
    %cst_63 = arith.constant dense<0.000000e+00> : vector<8x128xf32>
    %118 = tpu.matmul %117, %116, %cst_63 {dimension_numbers = #tpu.dot_dimension_numbers<[1], [0], [0], [1], [0, 0, 1, 1], [], []>} : vector<8x128xbf16>, vector<128x128xbf16>, vector<8x128xf32> -> vector<8x128xf32>
    %c13 = arith.constant 13 : index
    %c0_64 = arith.constant 0 : index
    %119 = vector.load %arg11[%c13, %c0_64] : memref<24x384xf32, #tpu.memory_space<vmem>>, vector<1x128xf32>
    %120 = vector.broadcast %119 : vector<1x128xf32> to vector<8x128xf32>
    %121 = arith.addf %118, %120 : vector<8x128xf32>
    %c0_65 = arith.constant 0 : index
    %c0_66 = arith.constant 0 : index
    %122 = vector.load %arg13[%c0_65, %c0_66] : memref<8x128xf32, #tpu.memory_space<vmem>>, vector<8x128xf32>
    tpu.vector_store %arg13[%c0_65, %c0_66], %121 {strides = array<i32>} : memref<8x128xf32, #tpu.memory_space<vmem>>, vector<8x128xf32>,
    %c0_67 = arith.constant 0 : index
    %c0_68 = arith.constant 0 : index
    %123 = vector.load %arg6[%c0_67, %c0_68] : memref<24x8xf32, #tpu.memory_space<vmem>>, vector<24x8xf32>
    %cst_69 = arith.constant dense<0.000000e+00> : vector<24x128xf32>
    %124 = tpu.matmul %123, %115, %cst_69 {dimension_numbers = #tpu.dot_dimension_numbers<[1], [0], [0], [1], [0, 0, 1, 1], [], []>} : vector<24x8xf32>, vector<8x128xf32>, vector<24x128xf32> -> vector<24x128xf32>
    %125 = vector.extract_strided_slice %124 {offsets = [0, 0], sizes = [8, 128], strides = [1, 1]} : vector<24x128xf32> to vector<8x128xf32>
    %126 = vector.extract_strided_slice %124 {offsets = [8, 0], sizes = [8, 128], strides = [1, 1]} : vector<24x128xf32> to vector<8x128xf32>
    %127 = vector.extract_strided_slice %124 {offsets = [16, 0], sizes = [8, 128], strides = [1, 1]} : vector<24x128xf32> to vector<8x128xf32>
    %128 = tpu.concatenate %125, %126 in 1 : vector<8x128xf32>, vector<8x128xf32> -> vector<8x256xf32>
    %c1024 = arith.constant 1024 : index
    %c0_70 = arith.constant 0 : index
    %129 = vector.load %arg8[%c1024, %c0_70] : memref<1536x128xbf16, #tpu.memory_space<vmem>>, vector<256x128xbf16>
    %130 = arith.truncf %128 : vector<8x256xf32> to vector<8x256xbf16>
    %cst_71 = arith.constant dense<0.000000e+00> : vector<8x128xf32>
    %131 = tpu.matmul %130, %129, %cst_71 {dimension_numbers = #tpu.dot_dimension_numbers<[1], [0], [0], [1], [0, 0, 1, 1], [], []>} : vector<8x256xbf16>, vector<256x128xbf16>, vector<8x128xf32> -> vector<8x128xf32>
    %c15 = arith.constant 15 : index
    %c0_72 = arith.constant 0 : index
    %132 = vector.load %arg11[%c15, %c0_72] : memref<24x384xf32, #tpu.memory_space<vmem>>, vector<1x128xf32>
    %133 = vector.broadcast %132 : vector<1x128xf32> to vector<8x128xf32>
    %134 = arith.addf %131, %133 : vector<8x128xf32>
    %cst_73 = arith.constant 0.000000e+00 : f32
    %135 = vector.broadcast %cst_73 : f32 to vector<8x128xf32>
    %136 = arith.cmpf oge, %134, %135 : vector<8x128xf32>
    %cst_74 = arith.constant 0.00999999977 : f32
    %137 = vector.broadcast %cst_74 : f32 to vector<8x128xf32>
    %138 = arith.mulf %137, %134 : vector<8x128xf32>
    %139 = arith.select %136, %134, %138 : vector<8x128xi1>, vector<8x128xf32>
    %c1280 = arith.constant 1280 : index
    %c0_75 = arith.constant 0 : index
    %140 = vector.load %arg8[%c1280, %c0_75] : memref<1536x128xbf16, #tpu.memory_space<vmem>>, vector<128x128xbf16>
    %141 = arith.truncf %139 : vector<8x128xf32> to vector<8x128xbf16>
    %cst_76 = arith.constant dense<0.000000e+00> : vector<8x128xf32>
    %142 = tpu.matmul %141, %140, %cst_76 {dimension_numbers = #tpu.dot_dimension_numbers<[1], [0], [0], [1], [0, 0, 1, 1], [], []>} : vector<8x128xbf16>, vector<128x128xbf16>, vector<8x128xf32> -> vector<8x128xf32>
    %c16 = arith.constant 16 : index
    %c0_77 = arith.constant 0 : index
    %143 = vector.load %arg11[%c16, %c0_77] : memref<24x384xf32, #tpu.memory_space<vmem>>, vector<1x128xf32>
    %144 = vector.broadcast %143 : vector<1x128xf32> to vector<8x128xf32>
    %145 = arith.addf %142, %144 : vector<8x128xf32>
    %cst_78 = arith.constant 0.000000e+00 : f32
    %146 = vector.broadcast %cst_78 : f32 to vector<8x128xf32>
    %147 = arith.cmpf oge, %145, %146 : vector<8x128xf32>
    %cst_79 = arith.constant 0.00999999977 : f32
    %148 = vector.broadcast %cst_79 : f32 to vector<8x128xf32>
    %149 = arith.mulf %148, %145 : vector<8x128xf32>
    %150 = arith.select %147, %145, %149 : vector<8x128xi1>, vector<8x128xf32>
    %c1408_80 = arith.constant 1408 : index
    %c0_81 = arith.constant 0 : index
    %151 = vector.load %arg8[%c1408_80, %c0_81] : memref<1536x128xbf16, #tpu.memory_space<vmem>>, vector<128x128xbf16>
    %152 = arith.truncf %150 : vector<8x128xf32> to vector<8x128xbf16>
    %cst_82 = arith.constant dense<0.000000e+00> : vector<8x128xf32>
    %153 = tpu.matmul %152, %151, %cst_82 {dimension_numbers = #tpu.dot_dimension_numbers<[1], [0], [0], [1], [0, 0, 1, 1], [], []>} : vector<8x128xbf16>, vector<128x128xbf16>, vector<8x128xf32> -> vector<8x128xf32>
    %c17 = arith.constant 17 : index
    %c0_83 = arith.constant 0 : index
    %154 = vector.load %arg11[%c17, %c0_83] : memref<24x384xf32, #tpu.memory_space<vmem>>, vector<1x128xf32>
    %155 = vector.broadcast %154 : vector<1x128xf32> to vector<8x128xf32>
    %156 = arith.addf %153, %155 : vector<8x128xf32>
    %157 = tpu.iota {dimensions = array<i32: 1>} : vector<8x128xi32>
    %c15_i32 = arith.constant 15 : i32
    %158 = vector.broadcast %c15_i32 : i32 to vector<8x128xi32>
    %159 = arith.cmpi slt, %157, %158 : vector<8x128xi32>
    %cst_84 = arith.constant -1.000000e+30 : f32
    %160 = vector.broadcast %cst_84 : f32 to vector<8x128xf32>
    %161 = arith.select %159, %156, %160 : vector<8x128xi1>, vector<8x128xf32>
    %cst_85 = arith.constant dense<0xFF800000> : vector<8xf32>
    %162 = vector.multi_reduction <maximumf>, %161, %cst_85 [1] : vector<8x128xf32> to vector<8xf32>
    %163 = vector.shape_cast %162 : vector<8xf32> to vector<8x1xf32>
    %164 = vector.broadcast %163 : vector<8x1xf32> to vector<8x128xf32>
    %165 = arith.subf %161, %164 : vector<8x128xf32>
    %166 = math.exp %165 : vector<8x128xf32>
    %cst_86 = arith.constant dense<0.000000e+00> : vector<8xf32>
    %167 = vector.multi_reduction <add>, %166, %cst_86 [1] : vector<8x128xf32> to vector<8xf32>
    %168 = vector.shape_cast %167 : vector<8xf32> to vector<8x1xf32>
    %169 = tpu.reciprocal %168 {approx = true} : vector<8x1xf32> -> vector<8x1xf32>
    %170 = vector.broadcast %169 : vector<8x1xf32> to vector<8x128xf32>
    %171 = arith.mulf %166, %170 : vector<8x128xf32>
    %c0_87 = arith.constant 0 : index
    %c0_88 = arith.constant 0 : index
    %172 = vector.load %arg14[%c0_87, %c0_88] : memref<8x128xf32, #tpu.memory_space<vmem>>, vector<8x128xf32>
    tpu.vector_store %arg14[%c0_87, %c0_88], %171 {strides = array<i32>} : memref<8x128xf32, #tpu.memory_space<vmem>>, vector<8x128xf32>,
    %173 = vector.extract_strided_slice %124 {offsets = [0, 0], sizes = [16, 128], strides = [1, 1]} : vector<24x128xf32> to vector<16x128xf32>
    %c0_89 = arith.constant 0 : index
    %c0_90 = arith.constant 0 : index
    %174 = vector.load %arg7[%c0_89, %c0_90] : memref<16x16xf32, #tpu.memory_space<vmem>>, vector<16x16xf32>
    %c128 = arith.constant 128 : index
    %c0_91 = arith.constant 0 : index
    %175 = vector.load %arg10[%c128, %c0_91] : memref<512x384xbf16, #tpu.memory_space<vmem>>, vector<128x384xbf16>
    %176 = arith.truncf %173 : vector<16x128xf32> to vector<16x128xbf16>
    %cst_92 = arith.constant dense<0.000000e+00> : vector<16x384xf32>
    %177 = tpu.matmul %176, %175, %cst_92 {dimension_numbers = #tpu.dot_dimension_numbers<[1], [0], [0], [1], [0, 0, 1, 1], [], []>} : vector<16x128xbf16>, vector<128x384xbf16>, vector<16x384xf32> -> vector<16x384xf32>
    %c1 = arith.constant 1 : index
    %c0_93 = arith.constant 0 : index
    %178 = vector.load %arg11[%c1, %c0_93] : memref<24x384xf32, #tpu.memory_space<vmem>>, vector<1x384xf32>
    %179 = vector.broadcast %178 : vector<1x384xf32> to vector<16x384xf32>
    %180 = arith.addf %177, %179 : vector<16x384xf32>
    %181 = vector.extract_strided_slice %180 {offsets = [0, 0], sizes = [16, 128], strides = [1, 1]} : vector<16x384xf32> to vector<16x128xf32>
    %182 = vector.extract_strided_slice %180 {offsets = [0, 128], sizes = [16, 128], strides = [1, 1]} : vector<16x384xf32> to vector<16x128xf32>
    %183 = vector.extract_strided_slice %180 {offsets = [0, 256], sizes = [16, 128], strides = [1, 1]} : vector<16x384xf32> to vector<16x128xf32>
    %cst_94 = arith.constant dense<0.000000e+00> : vector<16x16xf32>
    %184 = tpu.matmul %181, %182, %cst_94 {dimension_numbers = #tpu.dot_dimension_numbers<[1], [1], [0], [0], [0, 0, 1, 0], [], []>} : vector<16x128xf32>, vector<16x128xf32>, vector<16x16xf32> -> vector<16x16xf32>
    %185 = arith.addf %184, %174 : vector<16x16xf32>
    %cst_95 = arith.constant dense<0xFF800000> : vector<16xf32>
    %186 = vector.multi_reduction <maximumf>, %185, %cst_95 [1] : vector<16x16xf32> to vector<16xf32>
    %187 = vector.shape_cast %186 : vector<16xf32> to vector<16x1xf32>
    %188 = vector.broadcast %187 : vector<16x1xf32> to vector<16x16xf32>
    %189 = arith.subf %185, %188 : vector<16x16xf32>
    %190 = math.exp %189 : vector<16x16xf32>
    %cst_96 = arith.constant dense<0.000000e+00> : vector<16xf32>
    %191 = vector.multi_reduction <add>, %190, %cst_96 [1] : vector<16x16xf32> to vector<16xf32>
    %192 = vector.shape_cast %191 : vector<16xf32> to vector<16x1xf32>
    %193 = tpu.reciprocal %192 {approx = true} : vector<16x1xf32> -> vector<16x1xf32>
    %194 = vector.broadcast %193 : vector<16x1xf32> to vector<16x16xf32>
    %195 = arith.mulf %190, %194 : vector<16x16xf32>
    %cst_97 = arith.constant dense<0.000000e+00> : vector<16x128xf32>
    %196 = tpu.matmul %195, %183, %cst_97 {dimension_numbers = #tpu.dot_dimension_numbers<[1], [0], [0], [1], [0, 0, 1, 1], [], []>} : vector<16x16xf32>, vector<16x128xf32>, vector<16x128xf32> -> vector<16x128xf32>
    %c1024_98 = arith.constant 1024 : index
    %c0_99 = arith.constant 0 : index
    %197 = vector.load %arg9[%c1024_98, %c0_99] : memref<1536x256xbf16, #tpu.memory_space<vmem>>, vector<128x256xbf16>
    %198 = arith.truncf %196 : vector<16x128xf32> to vector<16x128xbf16>
    %cst_100 = arith.constant dense<0.000000e+00> : vector<16x256xf32>
    %199 = tpu.matmul %198, %197, %cst_100 {dimension_numbers = #tpu.dot_dimension_numbers<[1], [0], [0], [1], [0, 0, 1, 1], [], []>} : vector<16x128xbf16>, vector<128x256xbf16>, vector<16x256xf32> -> vector<16x256xf32>
    %c7 = arith.constant 7 : index
    %c0_101 = arith.constant 0 : index
    %200 = vector.load %arg11[%c7, %c0_101] : memref<24x384xf32, #tpu.memory_space<vmem>>, vector<1x256xf32>
    %201 = vector.broadcast %200 : vector<1x256xf32> to vector<16x256xf32>
    %202 = arith.addf %199, %201 : vector<16x256xf32>
    %cst_102 = arith.constant 0.000000e+00 : f32
    %203 = vector.broadcast %cst_102 : f32 to vector<16x256xf32>
    %204 = arith.cmpf oge, %202, %203 : vector<16x256xf32>
    %cst_103 = arith.constant 0.00999999977 : f32
    %205 = vector.broadcast %cst_103 : f32 to vector<16x256xf32>
    %206 = arith.mulf %205, %202 : vector<16x256xf32>
    %207 = arith.select %204, %202, %206 : vector<16x256xi1>, vector<16x256xf32>
    %c1152 = arith.constant 1152 : index
    %c0_104 = arith.constant 0 : index
    %208 = vector.load %arg9[%c1152, %c0_104] : memref<1536x256xbf16, #tpu.memory_space<vmem>>, vector<256x256xbf16>
    %209 = arith.truncf %207 : vector<16x256xf32> to vector<16x256xbf16>
    %cst_105 = arith.constant dense<0.000000e+00> : vector<16x256xf32>
    %210 = tpu.matmul %209, %208, %cst_105 {dimension_numbers = #tpu.dot_dimension_numbers<[1], [0], [0], [1], [0, 0, 1, 1], [], []>} : vector<16x256xbf16>, vector<256x256xbf16>, vector<16x256xf32> -> vector<16x256xf32>
    %c8 = arith.constant 8 : index
    %c0_106 = arith.constant 0 : index
    %211 = vector.load %arg11[%c8, %c0_106] : memref<24x384xf32, #tpu.memory_space<vmem>>, vector<1x256xf32>
    %212 = vector.broadcast %211 : vector<1x256xf32> to vector<16x256xf32>
    %213 = arith.addf %210, %212 : vector<16x256xf32>
    %cst_107 = arith.constant 0.000000e+00 : f32
    %214 = vector.broadcast %cst_107 : f32 to vector<16x256xf32>
    %215 = arith.cmpf oge, %213, %214 : vector<16x256xf32>
    %cst_108 = arith.constant 0.00999999977 : f32
    %216 = vector.broadcast %cst_108 : f32 to vector<16x256xf32>
    %217 = arith.mulf %216, %213 : vector<16x256xf32>
    %218 = arith.select %215, %213, %217 : vector<16x256xi1>, vector<16x256xf32>
    %c768_109 = arith.constant 768 : index
    %c0_110 = arith.constant 0 : index
    %219 = vector.load %arg8[%c768_109, %c0_110] : memref<1536x128xbf16, #tpu.memory_space<vmem>>, vector<256x128xbf16>
    %220 = arith.truncf %218 : vector<16x256xf32> to vector<16x256xbf16>
    %cst_111 = arith.constant dense<0.000000e+00> : vector<16x128xf32>
    %221 = tpu.matmul %220, %219, %cst_111 {dimension_numbers = #tpu.dot_dimension_numbers<[1], [0], [0], [1], [0, 0, 1, 1], [], []>} : vector<16x256xbf16>, vector<256x128xbf16>, vector<16x128xf32> -> vector<16x128xf32>
    %c14 = arith.constant 14 : index
    %c0_112 = arith.constant 0 : index
    %222 = vector.load %arg11[%c14, %c0_112] : memref<24x384xf32, #tpu.memory_space<vmem>>, vector<1x128xf32>
    %223 = vector.broadcast %222 : vector<1x128xf32> to vector<16x128xf32>
    %224 = arith.addf %221, %223 : vector<16x128xf32>
    %225 = tpu.iota {dimensions = array<i32: 1>} : vector<16x128xi32>
    %c26_i32 = arith.constant 26 : i32
    %226 = vector.broadcast %c26_i32 : i32 to vector<16x128xi32>
    %227 = arith.cmpi slt, %225, %226 : vector<16x128xi32>
    %cst_113 = arith.constant -1.000000e+30 : f32
    %228 = vector.broadcast %cst_113 : f32 to vector<16x128xf32>
    %229 = arith.select %227, %224, %228 : vector<16x128xi1>, vector<16x128xf32>
    %cst_114 = arith.constant dense<0xFF800000> : vector<16xf32>
    %230 = vector.multi_reduction <maximumf>, %229, %cst_114 [1] : vector<16x128xf32> to vector<16xf32>
    %231 = vector.shape_cast %230 : vector<16xf32> to vector<16x1xf32>
    %232 = vector.broadcast %231 : vector<16x1xf32> to vector<16x128xf32>
    %233 = arith.subf %229, %232 : vector<16x128xf32>
    %234 = math.exp %233 : vector<16x128xf32>
    %cst_115 = arith.constant dense<0.000000e+00> : vector<16xf32>
    %235 = vector.multi_reduction <add>, %234, %cst_115 [1] : vector<16x128xf32> to vector<16xf32>
    %236 = vector.shape_cast %235 : vector<16xf32> to vector<16x1xf32>
    %237 = tpu.reciprocal %236 {approx = true} : vector<16x1xf32> -> vector<16x1xf32>
    %238 = vector.broadcast %237 : vector<16x1xf32> to vector<16x128xf32>
    %239 = arith.mulf %234, %238 : vector<16x128xf32>
    %c0_116 = arith.constant 0 : index
    %c0_117 = arith.constant 0 : index
    %240 = vector.load %arg15[%c0_116, %c0_117] : memref<16x128xf32, #tpu.memory_space<vmem>>, vector<16x128xf32>
    tpu.vector_store %arg15[%c0_116, %c0_117], %239 {strides = array<i32>} : memref<16x128xf32, #tpu.memory_space<vmem>>, vector<16x128xf32>,
    %c384_118 = arith.constant 384 : index
    %c0_119 = arith.constant 0 : index
    %241 = vector.load %arg10[%c384_118, %c0_119] : memref<512x384xbf16, #tpu.memory_space<vmem>>, vector<128x384xbf16>
    %242 = arith.truncf %127 : vector<8x128xf32> to vector<8x128xbf16>
    %cst_120 = arith.constant dense<0.000000e+00> : vector<8x384xf32>
    %243 = tpu.matmul %242, %241, %cst_120 {dimension_numbers = #tpu.dot_dimension_numbers<[1], [0], [0], [1], [0, 0, 1, 1], [], []>} : vector<8x128xbf16>, vector<128x384xbf16>, vector<8x384xf32> -> vector<8x384xf32>
    %c0_121 = arith.constant 0 : index
    %c0_122 = arith.constant 0 : index
    %244 = vector.load %arg16[%c0_121, %c0_122] : memref<8x384xf32, #tpu.memory_space<vmem>>, vector<8x384xf32>
    tpu.vector_store %arg16[%c0_121, %c0_122], %243 {strides = array<i32>} : memref<8x384xf32, #tpu.memory_space<vmem>>, vector<8x384xf32>,
    return
  }
}

</mosaic_0001>

<llo_original>
// kernel: _forward_impl.1
$region0: #{_forward_impl.1}
  #allocation0 [shape = 'u32[]', space=smem, size = 0x4, offset = 0x4, fixed_abs, tag = 'smem constant byte address 0x4 - core index']
  #allocation1 [shape = 'u32[144,128]{1,0:T(1,128)}', space=vmem, size = 0x12000, scoped, tag = 'internal scratch']
  %s0 = inlined_call_operand.vmem [shape: f32[40,128], index: 0, kind: input, shape index: {}]
  %s1 = inlined_call_operand.vmem [shape: f32[8,128], index: 1, kind: input, shape index: {}]
  %s2 = inlined_call_operand.vmem [shape: f32[8,128], index: 2, kind: input, shape index: {}]
  %s3 = inlined_call_operand.vmem [shape: f32[8,128], index: 3, kind: input, shape index: {}]
  %s4 = inlined_call_operand.vmem [shape: f32[40,40], index: 4, kind: input, shape index: {}]
  %s5 = inlined_call_operand.vmem [shape: f32[8,40], index: 5, kind: input, shape index: {}]
  %s6 = inlined_call_operand.vmem [shape: f32[24,8], index: 6, kind: input, shape index: {}]
  %s7 = inlined_call_operand.vmem [shape: f32[16,16], index: 7, kind: input, shape index: {}]
  %s8 = inlined_call_operand.vmem [shape: bf16[1536,128], index: 8, kind: input, shape index: {}]
  %s9 = inlined_call_operand.hbm [shape: bf16[1536,256], index: 9, kind: input, shape index: {}]
  %s10 = inlined_call_operand.hbm [shape: bf16[512,384], index: 10, kind: input, shape index: {}]
  %s11 = inlined_call_operand.vmem [shape: f32[24,384], index: 11, kind: input, shape index: {}]
  %s12 = inlined_call_operand.vmem [shape: f32[8,256], index: 12, kind: output, shape index: {0}]
  %s13 = inlined_call_operand.vmem [shape: f32[8,128], index: 13, kind: output, shape index: {1}]
  %s14 = inlined_call_operand.vmem [shape: f32[8,128], index: 14, kind: output, shape index: {2}]
  %s15 = inlined_call_operand.vmem [shape: f32[16,128], index: 15, kind: output, shape index: {3}]
  %s16 = inlined_call_operand.vmem [shape: f32[8,384], index: 16, kind: output, shape index: {4}]
  %17 = xla_tuple %s12, %s13, %s14, %s15, %s16
  %s18 = sld [smem:[#allocation0]]
  $region98: #{_forward_impl.1} parent=0
    _
  %s20 = ssub.s32 1, %s18
  %s21 = scalar_select 0, %s20, %s18
  $region1: #{_forward_impl.1} parent=0
    #allocation2 [shape = 'u8[786432]{0}', space=vmem, size = 0xc0000, scoped, tag = 'input window, operand 9, single buffered']
    #allocation3 [shape = 's32[1]{0}', space=sflag, size = 0x4, scoped, tag = 'scoped memory for _forward_impl.1']
    #allocation4 [shape = 'u8[393216]{0}', space=vmem, size = 0x60000, scoped, tag = 'input window, operand 10, single buffered']
    #allocation5 [shape = 's32[1]{0}', space=sflag, size = 0x4, scoped, tag = 'scoped memory for _forward_impl.1']
    %22 = vsyncpa [#allocation3], 0
    %23 = vsyncpa [#allocation5], 0
    // Predicated region
    $region2: #{_forward_impl.1} parent=1 // pred_check
      _
    $region3: #{_forward_impl.1} parent=1 // pred_check_branch
      %25 = sbr.rel (0) target = $region5
    $region4: #{_forward_impl.1} parent=1 // pred_region
      _
    $region5: #{_forward_impl.1} parent=1 // pred_fallthru
      _
    // Predicated region
    $region6: #{_forward_impl.1} parent=1 // pred_check
      _
    $region7: #{_forward_impl.1} parent=1 // pred_check_branch
      %27 = sbr.rel (0) target = $region9
    $region8: #{_forward_impl.1} parent=1 // pred_region
      _
    $region9: #{_forward_impl.1} parent=1 // pred_fallthru
      _
    // Predicated region
    $region10: #{_forward_impl.1} parent=1 // pred_check
      _
    $region11: #{_forward_impl.1} parent=1 // pred_check_branch
      %29 = sbr.rel (0) target = $region13
    $region12: #{_forward_impl.1} parent=1 // pred_region
      _
    $region13: #{_forward_impl.1} parent=1 // pred_fallthru
      _
    // Predicated region
    $region14: #{_forward_impl.1} parent=1 // pred_check
      _
    $region15: #{_forward_impl.1} parent=1 // pred_check_branch
      %31 = sbr.rel (0) target = $region17
    $region16: #{_forward_impl.1} parent=1 // pred_region
      _
    $region17: #{_forward_impl.1} parent=1 // pred_fallthru
      _
    // Predicated region
    $region18: #{_forward_impl.1} parent=1 // pred_check
      _
    $region19: #{_forward_impl.1} parent=1 // pred_check_branch
      %33 = sbr.rel (0) target = $region21
    $region20: #{_forward_impl.1} parent=1 // pred_region
      _
    $region21: #{_forward_impl.1} parent=1 // pred_fallthru
      _
    // Predicated region
    $region22: #{_forward_impl.1} parent=1 // pred_check
      _
    $region23: #{_forward_impl.1} parent=1 // pred_check_branch
      %35 = sbr.rel (0) target = $region25
    $region24: #{_forward_impl.1} parent=1 // pred_region
      _
    $region25: #{_forward_impl.1} parent=1 // pred_fallthru
      _
    // Predicated region
    $region26: #{_forward_impl.1} parent=1 // pred_check
      _
    $region27: #{_forward_impl.1} parent=1 // pred_check_branch
      %37 = sbr.rel (0) target = $region29
    $region28: #{_forward_impl.1} parent=1 // pred_region
      _
    $region29: #{_forward_impl.1} parent=1 // pred_fallthru
      _
    // Predicated region
    $region30: #{_forward_impl.1} parent=1 // pred_check
      _
    $region31: #{_forward_impl.1} parent=1 // pred_check_branch
      %39 = sbr.rel (0) target = $region33
    $region32: #{_forward_impl.1} parent=1 // pred_region
      _
    $region33: #{_forward_impl.1} parent=1 // pred_fallthru
      _
    // Predicated region
    $region34: #{_forward_impl.1} parent=1 // pred_check
      _
    $region35: #{_forward_impl.1} parent=1 // pred_check_branch
      %41 = sbr.rel (0) target = $region37
    $region36: #{_forward_impl.1} parent=1 // pred_region
      _
    $region37: #{_forward_impl.1} parent=1 // pred_fallthru
      _
    // Predicated region
    $region38: #{_forward_impl.1} parent=1 // pred_check
      _
    $region39: #{_forward_impl.1} parent=1 // pred_check_branch
      %43 = sbr.rel (0) target = $region41
    $region40: #{_forward_impl.1} parent=1 // pred_region
      %s45 = ssub.s32 24576, 24576
      %46 = vsyncadd [#allocation3], %s45
      %s47 = sshll.u32 [#allocation2], 4
      %s48 = int_to_ptr.vmem [resolvable:$true] %s47
      %53 = dma.hbm_to_vmem [thread:$0]  %s9, 24576, %s48, [#allocation3], 128, 128, 8
    $region41: #{_forward_impl.1} parent=1 // pred_fallthru
      _
    // Predicated region
    $region42: #{_forward_impl.1} parent=1 // pred_check
      _
    $region43: #{_forward_impl.1} parent=1 // pred_check_branch
      %55 = sbr.rel (0) target = $region45
    $region44: #{_forward_impl.1} parent=1 // pred_region
      %s57 = ssub.s32 12288, 12288
      %58 = vsyncadd [#allocation5], %s57
      %s59 = sshll.u32 [#allocation4], 4
      %s60 = int_to_ptr.vmem [resolvable:$true] %s59
      %65 = dma.hbm_to_vmem [thread:$0]  %s10, 12288, %s60, [#allocation5], 192, 192, 12
    $region45: #{_forward_impl.1} parent=1 // pred_fallthru
      _
    // Predicated region
    $region46: #{_forward_impl.1} parent=1 // pred_check
      _
    $region47: #{_forward_impl.1} parent=1 // pred_check_branch
      %67 = sbr.rel (0) target = $region49
    $region48: #{_forward_impl.1} parent=1 // pred_region
      _
    $region49: #{_forward_impl.1} parent=1 // pred_fallthru
      _
    // Predicated region
    $region50: #{_forward_impl.1} parent=1 // pred_check
      _
    $region51: #{_forward_impl.1} parent=1 // pred_check_branch
      %69 = sbr.rel (0) target = $region53
    $region52: #{_forward_impl.1} parent=1 // pred_region
      %70 = dma.done [#allocation3], 24576
    $region53: #{_forward_impl.1} parent=1 // pred_fallthru
      _
    // Predicated region
    $region54: #{_forward_impl.1} parent=1 // pred_check
      _
    $region55: #{_forward_impl.1} parent=1 // pred_check_branch
      %72 = sbr.rel (0) target = $region57
    $region56: #{_forward_impl.1} parent=1 // pred_region
      %73 = dma.done [#allocation5], 12288
    $region57: #{_forward_impl.1} parent=1 // pred_fallthru
      _
    %v75 = vld [vmem:[%s0] sm:$0xff]
    %v76 = vld [vmem:[%s0 + $0x8] sm:$0xff]
    %v77 = vld [vmem:[%s0 + $0x10] sm:$0xff]
    %v78 = vld [vmem:[%s0 + $0x18] sm:$0xff]
    %v79 = vld [vmem:[%s0 + $0x20] sm:$0xff]
    %v80 = vld [vmem:[%s4] sm:$0xff]
    %v81 = vld [vmem:[%s4 + $0x8] sm:$0xff]
    %v82 = vld [vmem:[%s4 + $0x10] sm:$0xff]
    %v83 = vld [vmem:[%s4 + $0x18] sm:$0xff]
    %v84 = vld [vmem:[%s4 + $0x20] sm:$0xff]
    %v85 = vld [vmem:[#allocation4] sm:$0xff]
    %v86 = vld [vmem:[#allocation4 + $0x8] sm:$0xf]
    %v87 = vld [vmem:[#allocation4 + $0xc] sm:$0xff]
    %v88 = vld [vmem:[#allocation4 + $0x14] sm:$0xf]
    %v89 = vld [vmem:[#allocation4 + $0x18] sm:$0xff]
    %v90 = vld [vmem:[#allocation4 + $0x20] sm:$0xf]
    %v91 = vld [vmem:[#allocation4 + $0x24] sm:$0xff]
    %v92 = vld [vmem:[#allocation4 + $0x2c] sm:$0xf]
    %v93 = vld [vmem:[#allocation4 + $0x30] sm:$0xff]
    %v94 = vld [vmem:[#allocation4 + $0x38] sm:$0xf]
    %v95 = vld [vmem:[#allocation4 + $0x3c] sm:$0xff]
    %v96 = vld [vmem:[#allocation4 + $0x44] sm:$0xf]
    %v97 = vld [vmem:[#allocation4 + $0x48] sm:$0xff]
    %v98 = vld [vmem:[#allocation4 + $0x50] sm:$0xf]
    %v99 = vld [vmem:[#allocation4 + $0x54] sm:$0xff]
    %v100 = vld [vmem:[#allocation4 + $0x5c] sm:$0xf]
    %v101 = vld [vmem:[#allocation4 + $0x60] sm:$0xff]
    %v102 = vld [vmem:[#allocation4 + $0x68] sm:$0xf]
    %v103 = vld [vmem:[#allocation4 + $0x6c] sm:$0xff]
    %v104 = vld [vmem:[#allocation4 + $0x74] sm:$0xf]
    %v105 = vld [vmem:[#allocation4 + $0x78] sm:$0xff]
    %v106 = vld [vmem:[#allocation4 + $0x80] sm:$0xf]
    %v107 = vld [vmem:[#allocation4 + $0x84] sm:$0xff]
    %v108 = vld [vmem:[#allocation4 + $0x8c] sm:$0xf]
    %v109 = vld [vmem:[#allocation4 + $0x90] sm:$0xff]
    %v110 = vld [vmem:[#allocation4 + $0x98] sm:$0xf]
    %v111 = vld [vmem:[#allocation4 + $0x9c] sm:$0xff]
    %v112 = vld [vmem:[#allocation4 + $0xa4] sm:$0xf]
    %v113 = vld [vmem:[#allocation4 + $0xa8] sm:$0xff]
    %v114 = vld [vmem:[#allocation4 + $0xb0] sm:$0xf]
    %v115 = vld [vmem:[#allocation4 + $0xb4] sm:$0xff]
    %v116 = vld [vmem:[#allocation4 + $0xbc] sm:$0xf]
    %v117 = vpack.c.bf16 %v76, %v75
    %v118 = vpack.c.bf16 %v78, %v77
    %v119 = vpack.c.bf16 %v79, %v79
    %v120 = vld [vmem:[%s11] ss:$8 sm:$0x7]
    %v122 = vlaneseq
    %v123 = vshrl.u32 %v122, 7
    %v124 = vsub.s32 0, %v123
    %v125 = vrot.slane %v120, %v124
    %v126 = vlaneseq
    %v127 = vshrl.u32 %v126, 7
    %v128 = vsub.s32 1, %v127
    %v129 = vrot.slane %v120, %v128
    %v130 = vlaneseq
    %v131 = vshrl.u32 %v130, 7
    %v132 = vsub.s32 2, %v131
    %v133 = vrot.slane %v120, %v132
    %v169 = vunpack.c.l.b16 %v85
    %v170 = vunpack.c.h.b16 %v85
    %v171 = vunpack.c.l.b16 %v86
    %v172 = vunpack.c.l.b16 %v87
    %v173 = vunpack.c.h.b16 %v87
    %v174 = vunpack.c.l.b16 %v88
    %v175 = vunpack.c.l.b16 %v89
    %v176 = vunpack.c.h.b16 %v89
    %v177 = vunpack.c.l.b16 %v90
    %v178 = vunpack.c.l.b16 %v91
    %v179 = vunpack.c.h.b16 %v91
    %v180 = vunpack.c.l.b16 %v92
    %v181 = vunpack.c.l.b16 %v93
    %v182 = vunpack.c.h.b16 %v93
    %v183 = vunpack.c.l.b16 %v94
    %v184 = vunpack.c.l.b16 %v95
    %v185 = vunpack.c.h.b16 %v95
    %v186 = vunpack.c.l.b16 %v96
    %v187 = vunpack.c.l.b16 %v97
    %v188 = vunpack.c.h.b16 %v97
    %v189 = vunpack.c.l.b16 %v98
    %v190 = vunpack.c.l.b16 %v99
    %v191 = vunpack.c.h.b16 %v99
    %v192 = vunpack.c.l.b16 %v100
    %v193 = vunpack.c.l.b16 %v101
    %v194 = vunpack.c.h.b16 %v101
    %v195 = vunpack.c.l.b16 %v102
    %v196 = vunpack.c.l.b16 %v103
    %v197 = vunpack.c.h.b16 %v103
    %v198 = vunpack.c.l.b16 %v104
    %v199 = vunpack.c.l.b16 %v105
    %v200 = vunpack.c.h.b16 %v105
    %v201 = vunpack.c.l.b16 %v106
    %v202 = vunpack.c.l.b16 %v107
    %v203 = vunpack.c.h.b16 %v107
    %v204 = vunpack.c.l.b16 %v108
    %v205 = vunpack.c.l.b16 %v109
    %v206 = vunpack.c.h.b16 %v109
    %v207 = vunpack.c.l.b16 %v110
    %v208 = vunpack.c.l.b16 %v111
    %v209 = vunpack.c.h.b16 %v111
    %v210 = vunpack.c.l.b16 %v112
    %v211 = vunpack.c.l.b16 %v113
    %v212 = vunpack.c.h.b16 %v113
    %v213 = vunpack.c.l.b16 %v114
    %v214 = vunpack.c.l.b16 %v115
    %v215 = vunpack.c.h.b16 %v115
    %v216 = vunpack.c.l.b16 %v116
    %v217 = vpack.c.b16 %v172, %v169
    %v218 = vpack.c.b16 %v173, %v170
    %v219 = vpack.c.b16 %v174, %v171
    %v220 = vpack.c.b16 %v178, %v175
    %v221 = vpack.c.b16 %v179, %v176
    %v222 = vpack.c.b16 %v180, %v177
    %v223 = vpack.c.b16 %v184, %v181
    %v224 = vpack.c.b16 %v185, %v182
    %v225 = vpack.c.b16 %v186, %v183
    %v226 = vpack.c.b16 %v190, %v187
    %v227 = vpack.c.b16 %v191, %v188
    %v228 = vpack.c.b16 %v192, %v189
    %v229 = vpack.c.b16 %v196, %v193
    %v230 = vpack.c.b16 %v197, %v194
    %v231 = vpack.c.b16 %v198, %v195
    %v232 = vpack.c.b16 %v202, %v199
    %v233 = vpack.c.b16 %v203, %v200
    %v234 = vpack.c.b16 %v204, %v201
    %v235 = vpack.c.b16 %v208, %v205
    %v236 = vpack.c.b16 %v209, %v206
    %v237 = vpack.c.b16 %v210, %v207
    %v238 = vpack.c.b16 %v214, %v211
    %v239 = vpack.c.b16 %v215, %v212
    %v240 = vpack.c.b16 %v216, %v213
    %265 = vmatprep.subr.bf16.mxu0 %v239
    %266 = vmatpush1.bf16.msra.mxu0 %v238
    %267 = vmatprep.subr.bf16.mxu0 %v236
    %268 = vmatpush1.bf16.msra.mxu0 %v235
    %269 = vmatprep.subr.bf16.mxu0 %v233
    %270 = vmatpush1.bf16.msra.mxu0 %v232
    %271 = vmatprep.subr.bf16.mxu0 %v230
    %272 = vmatpush1.bf16.msra.mxu0 %v229
    %273 = vmatprep.subr.bf16.mxu0 %v227
    %274 = vmatpush1.bf16.msra.mxu0 %v226
    %275 = vmatprep.subr.bf16.mxu0 %v224
    %276 = vmatpush1.bf16.msra.mxu0 %v223
    %277 = vmatprep.subr.bf16.mxu0 %v221
    %278 = vmatpush1.bf16.msra.mxu0 %v220
    %279 = vmatprep.subr.bf16.mxu0 %v218
    %280 = vmatpush1.bf16.msra.mxu0 %v217
    %281 = vmatprep.subr.bf16.mxu0 0
    %282 = vmatpush2.bf16.msra.mxu0 0
    %283 = vmatprep.subr.bf16.mxu0 0
    %284 = vmatpush2.bf16.msra.mxu0 0
    %285 = vmatprep.subr.bf16.mxu0 0
    %286 = vmatpush2.bf16.msra.mxu0 0
    %287 = vmatprep.subr.bf16.mxu0 0
    %288 = vmatpush2.bf16.msra.mxu0 0
    %289 = vmatprep.subr.bf16.mxu0 0
    %290 = vmatpush2.bf16.msra.mxu0 0
    %291 = vmatprep.subr.bf16.mxu0 0
    %292 = vmatpush2.bf16.msra.mxu0 0
    %293 = vmatprep.subr.bf16.mxu0 0
    %294 = vmatpush2.bf16.msra.mxu0 0
    %295 = vmatprep.subr.bf16.mxu0 0
    %296 = vmatpush2.bf16.msra.mxu0 0
    %297 = vmatprep.mubr.bf16.mxu0 0
    %298 = vmatmul.mubr.bf16.gmra.mxu0 %v117
    %v299 = vpop.f32.mrf.mxu0
    %v300 = vadd.f32 %v125, %v299
    %v301 = vpop.f32.mrf.mxu0
    %v302 = vadd.f32 %v129, %v301
    %v303 = vpop.f32.mrf.mxu0
    %v304 = vadd.f32 %v125, %v303
    %v305 = vpop.f32.mrf.mxu0
    %v306 = vadd.f32 %v129, %v305
    %307 = vmatprep.mubr.bf16.mxu0 0
    %308 = vmatmul.mubr.bf16.gmra.mxu0 %v118
    %v309 = vpop.f32.mrf.mxu0
    %v310 = vadd.f32 %v125, %v309
    %v311 = vpop.f32.mrf.mxu0
    %v312 = vadd.f32 %v129, %v311
    %v313 = vpop.f32.mrf.mxu0
    %v314 = vadd.f32 %v125, %v313
    %v315 = vpop.f32.mrf.mxu0
    %v316 = vadd.f32 %v129, %v315
    %317 = vmatprep.mubr.bf16.mxu0 0
    %318 = vmatmul.mubr.bf16.gmra.mxu0 %v119
    %v319 = vpop.f32.mrf.mxu0
    %v320 = vadd.f32 %v125, %v319
    %v321 = vpop.f32.mrf.mxu0
    %v322 = vadd.f32 %v129, %v321
    %v323 = vpop.f32.mrf.mxu0
    %v324 = vpop.f32.mrf.mxu0
    %325 = vdwg.mxu0
    %326 = vmatprep.subr.bf16.mxu0 0
    %327 = vmatpush1.bf16.msra.mxu0 %v240
    %328 = vmatprep.subr.bf16.mxu0 0
    %329 = vmatpush1.bf16.msra.mxu0 %v237
    %330 = vmatprep.subr.bf16.mxu0 0
    %331 = vmatpush1.bf16.msra.mxu0 %v234
    %332 = vmatprep.subr.bf16.mxu0 0
    %333 = vmatpush1.bf16.msra.mxu0 %v231
    %334 = vmatprep.subr.bf16.mxu0 0
    %335 = vmatpush1.bf16.msra.mxu0 %v228
    %336 = vmatprep.subr.bf16.mxu0 0
    %337 = vmatpush1.bf16.msra.mxu0 %v225
    %338 = vmatprep.subr.bf16.mxu0 0
    %339 = vmatpush1.bf16.msra.mxu0 %v222
    %340 = vmatprep.subr.bf16.mxu0 0
    %341 = vmatpush1.bf16.msra.mxu0 %v219
    %342 = vmatprep.subr.bf16.mxu0 0
    %343 = vmatpush2.bf16.msra.mxu0 0
    %344 = vmatprep.subr.bf16.mxu0 0
    %345 = vmatpush2.bf16.msra.mxu0 0
    %346 = vmatprep.subr.bf16.mxu0 0
    %347 = vmatpush2.bf16.msra.mxu0 0
    %348 = vmatprep.subr.bf16.mxu0 0
    %349 = vmatpush2.bf16.msra.mxu0 0
    %350 = vmatprep.subr.bf16.mxu0 0
    %351 = vmatpush2.bf16.msra.mxu0 0
    %352 = vmatprep.subr.bf16.mxu0 0
    %353 = vmatpush2.bf16.msra.mxu0 0
    %354 = vmatprep.subr.bf16.mxu0 0
    %355 = vmatpush2.bf16.msra.mxu0 0
    %356 = vmatprep.subr.bf16.mxu0 0
    %357 = vmatpush2.bf16.msra.mxu0 0
    %358 = vmatprep.mubr.bf16.mxu0 0
    %359 = vmatmul.mubr.bf16.gmra.mxu0 %v117
    %v360 = vpop.f32.mrf.mxu0
    %v361 = vadd.f32 %v133, %v360
    %v362 = vpop.f32.mrf.mxu0
    %v363 = vpop.f32.mrf.mxu0
    %v364 = vadd.f32 %v133, %v363
    %v365 = vpop.f32.mrf.mxu0
    %366 = vmatprep.mubr.bf16.mxu0 0
    %367 = vmatmul.mubr.bf16.gmra.mxu0 %v118
    %v368 = vpop.f32.mrf.mxu0
    %v369 = vadd.f32 %v133, %v368
    %v370 = vpop.f32.mrf.mxu0
    %v371 = vpop.f32.mrf.mxu0
    %v372 = vadd.f32 %v133, %v371
    %v373 = vpop.f32.mrf.mxu0
    %374 = vmatprep.mubr.bf16.mxu0 0
    %375 = vmatmul.mubr.bf16.gmra.mxu0 %v119
    %v376 = vpop.f32.mrf.mxu0
    %v377 = vadd.f32 %v133, %v376
    %v378 = vpop.f32.mrf.mxu0
    %v379 = vpop.f32.mrf.mxu0
    %v380 = vpop.f32.mrf.mxu0
    %381 = vdwg.mxu0
    %382 = vmatprep.subr.mxu0 0.0
    %383 = vmatpush1.xpose.msra.mxu0 0.0
    %384 = vmatprep.subr.mxu0 0.0
    %385 = vmatpush1.xpose.msra.mxu0 0.0
    %386 = vmatprep.subr.mxu0 0.0
    %387 = vmatpush1.xpose.msra.mxu0 0.0
    %388 = vmatprep.subr.mxu0 0.0
    %389 = vmatpush1.xpose.msra.mxu0 0.0
    %390 = vmatprep.subr.mxu0 0.0
    %391 = vmatpush1.xpose.msra.mxu0 0.0
    %392 = vmatprep.subr.mxu0 0.0
    %393 = vmatpush1.xpose.msra.mxu0 0.0
    %394 = vmatprep.subr.mxu0 0.0
    %395 = vmatpush1.xpose.msra.mxu0 0.0
    %396 = vmatprep.subr.mxu0 0.0
    %397 = vmatpush1.xpose.msra.mxu0 0.0
    %398 = vmatprep.subr.mxu0 0.0
    %399 = vmatpush1.xpose.msra.mxu0 0.0
    %400 = vmatprep.subr.mxu0 0.0
    %401 = vmatpush1.xpose.msra.mxu0 0.0
    %402 = vmatprep.subr.mxu0 0.0
    %403 = vmatpush1.xpose.msra.mxu0 0.0
    %404 = vmatprep.subr.mxu0 0.0
    %405 = vmatpush1.xpose.msra.mxu0 %v322
    %406 = vmatprep.subr.mxu0 0.0
    %407 = vmatpush1.xpose.msra.mxu0 %v316
    %408 = vmatprep.subr.mxu0 0.0
    %409 = vmatpush1.xpose.msra.mxu0 %v312
    %410 = vmatprep.subr.mxu0 0.0
    %411 = vmatpush1.xpose.msra.mxu0 %v306
    %412 = vmatprep.subr.mxu0 0.0
    %413 = vmatpush1.xpose.msra.mxu0 %v302
    %414 = vmatprep.subr.mxu0 0.0
    %415 = vmatpush2.xpose.msra.mxu0 0.0
    %416 = vmatprep.subr.mxu0 0.0
    %417 = vmatpush2.xpose.msra.mxu0 0.0
    %418 = vmatprep.subr.mxu0 0.0
    %419 = vmatpush2.xpose.msra.mxu0 0.0
    %420 = vmatprep.subr.mxu0 0.0
    %421 = vmatpush2.xpose.msra.mxu0 0.0
    %422 = vmatprep.subr.mxu0 0.0
    %423 = vmatpush2.xpose.msra.mxu0 0.0
    %424 = vmatprep.subr.mxu0 0.0
    %425 = vmatpush2.xpose.msra.mxu0 0.0
    %426 = vmatprep.subr.mxu0 0.0
    %427 = vmatpush2.xpose.msra.mxu0 0.0
    %428 = vmatprep.subr.mxu0 0.0
    %429 = vmatpush2.xpose.msra.mxu0 0.0
    %430 = vmatprep.subr.mxu0 0.0
    %431 = vmatpush2.xpose.msra.mxu0 0.0
    %432 = vmatprep.subr.mxu0 0.0
    %433 = vmatpush2.xpose.msra.mxu0 0.0
    %434 = vmatprep.subr.mxu0 0.0
    %435 = vmatpush2.xpose.msra.mxu0 0.0
    %436 = vmatprep.subr.mxu0 0.0
    %437 = vmatpush2.xpose.msra.mxu0 0.0
    %438 = vmatprep.subr.mxu0 0.0
    %439 = vmatpush2.xpose.msra.mxu0 0.0
    %440 = vmatprep.subr.mxu0 0.0
    %441 = vmatpush2.xpose.msra.mxu0 0.0
    %442 = vmatprep.subr.mxu0 0.0
    %443 = vmatpush2.xpose.msra.mxu0 0.0
    %444 = vmatprep.subr.mxu0 0.0
    %445 = vmatpush2.xpose.msra.mxu0 0.0
    %446 = vmatprep.mubr.f32.mxu0 0.0
    %447 = vmatmul.mubr.f32.gmra.mxu0 %v300
    %v448 = vpop.f32.mrf.mxu0
    %v449 = vadd.f32 %v80, %v448
    %v450 = vpop.f32.mrf.mxu0
    %451 = vmatprep.mubr.f32.mxu0 0.0
    %452 = vmatmul.mubr.f32.gmra.mxu0 %v304
    %v453 = vpop.f32.mrf.mxu0
    %v454 = vadd.f32 %v81, %v453
    %v455 = vpop.f32.mrf.mxu0
    %456 = vmatprep.mubr.f32.mxu0 0.0
    %457 = vmatmul.mubr.f32.gmra.mxu0 %v310
    %v458 = vpop.f32.mrf.mxu0
    %v459 = vadd.f32 %v82, %v458
    %v460 = vpop.f32.mrf.mxu0
    %461 = vmatprep.mubr.f32.mxu0 0.0
    %462 = vmatmul.mubr.f32.gmra.mxu0 %v314
    %v463 = vpop.f32.mrf.mxu0
    %v464 = vadd.f32 %v83, %v463
    %v465 = vpop.f32.mrf.mxu0
    %466 = vmatprep.mubr.f32.mxu0 0.0
    %467 = vmatmul.mubr.f32.gmra.mxu0 %v320
    %v468 = vpop.f32.mrf.mxu0
    %v469 = vadd.f32 %v84, %v468
    %v470 = vpop.f32.mrf.mxu0
    %471 = vdwg.mxu0
    %vm472 = vcmask 326656
    %v473 = vsel %vm472, %v449, -inf
    %474 = vmax.xlane.f32.xlu0 %v473
    %v475 = vpop.xlane.xlu0 %474
    %v476 = vsel %vm472, %v454, -inf
    %477 = vmax.xlane.f32.xlu0 %v476
    %v478 = vpop.xlane.xlu0 %477
    %v479 = vsel %vm472, %v459, -inf
    %480 = vmax.xlane.f32.xlu0 %v479
    %v481 = vpop.xlane.xlu0 %480
    %v482 = vsel %vm472, %v464, -inf
    %483 = vmax.xlane.f32.xlu0 %v482
    %v484 = vpop.xlane.xlu0 %483
    %v485 = vsel %vm472, %v469, -inf
    %486 = vmax.xlane.f32.xlu0 %v485
    %v487 = vpop.xlane.xlu0 %486
    %v488 = vsub.f32 %v449, %v475
    %v489 = vsub.f32 %v454, %v478
    %v490 = vsub.f32 %v459, %v481
    %v491 = vsub.f32 %v464, %v484
    %v492 = vsub.f32 %v469, %v487
    %v493 = vmul.f32 %v488, 1.442695
    %v494 = vpow.pop %v493
    %v495 = vmul.f32 %v489, 1.442695
    %v496 = vpow.pop %v495
    %v497 = vmul.f32 %v490, 1.442695
    %v498 = vpow.pop %v497
    %v499 = vmul.f32 %v491, 1.442695
    %v500 = vpow.pop %v499
    %v501 = vmul.f32 %v492, 1.442695
    %v502 = vpow.pop %v501
    %v503 = vsel %vm472, %v494, 0.0
    %504 = vadd.xlane.f32.xlu0 %v503
    %v505 = vpop.xlane.xlu0 %504
    %v506 = vsel %vm472, %v496, 0.0
    %507 = vadd.xlane.f32.xlu0 %v506
    %v508 = vpop.xlane.xlu0 %507
    %v509 = vsel %vm472, %v498, 0.0
    %510 = vadd.xlane.f32.xlu0 %v509
    %v511 = vpop.xlane.xlu0 %510
    %v512 = vsel %vm472, %v500, 0.0
    %513 = vadd.xlane.f32.xlu0 %v512
    %v514 = vpop.xlane.xlu0 %513
    %v515 = vsel %vm472, %v502, 0.0
    %516 = vadd.xlane.f32.xlu0 %v515
    %v517 = vpop.xlane.xlu0 %516
    %v518 = vrcp.pop %v505
    %v519 = vrcp.pop %v508
    %v520 = vrcp.pop %v511
    %v521 = vrcp.pop %v514
    %v522 = vrcp.pop %v517
    %v523 = vmul.f32 %v494, %v518
    %v524 = vmul.f32 %v496, %v519
    %v525 = vmul.f32 %v498, %v520
    %v526 = vmul.f32 %v500, %v521
    %v527 = vmul.f32 %v502, %v522
    %v529 = vsel %vm472, %v523, 0
    %v532 = vsel %vm472, %v524, 0
    %v535 = vsel %vm472, %v525, 0
    %v538 = vsel %vm472, %v526, 0
    %v541 = vsel %vm472, %v527, 0
    %543 = vmatprep.subr.mxu0 0.0
    %544 = vmatpush1.msra.mxu0 0.0
    %545 = vmatprep.subr.mxu0 0.0
    %546 = vmatpush1.msra.mxu0 0.0
    %547 = vmatprep.subr.mxu0 0.0
    %548 = vmatpush1.msra.mxu0 0.0
    %549 = vmatprep.subr.mxu0 0.0
    %550 = vmatpush1.msra.mxu0 0.0
    %551 = vmatprep.subr.mxu0 0.0
    %552 = vmatpush1.msra.mxu0 0.0
    %553 = vmatprep.subr.mxu0 0.0
    %554 = vmatpush1.msra.mxu0 0.0
    %555 = vmatprep.subr.mxu0 0.0
    %556 = vmatpush1.msra.mxu0 0.0
    %557 = vmatprep.subr.mxu0 0.0
    %558 = vmatpush1.msra.mxu0 0.0
    %559 = vmatprep.subr.mxu0 0.0
    %560 = vmatpush1.msra.mxu0 0.0
    %561 = vmatprep.subr.mxu0 0.0
    %562 = vmatpush1.msra.mxu0 0.0
    %563 = vmatprep.subr.mxu0 0.0
    %564 = vmatpush1.msra.mxu0 0.0
    %565 = vmatprep.subr.mxu0 0.0
    %566 = vmatpush1.msra.mxu0 %v377
    %567 = vmatprep.subr.mxu0 0.0
    %568 = vmatpush1.msra.mxu0 %v372
    %569 = vmatprep.subr.mxu0 0.0
    %570 = vmatpush1.msra.mxu0 %v369
    %571 = vmatprep.subr.mxu0 0.0
    %572 = vmatpush1.msra.mxu0 %v364
    %573 = vmatprep.subr.mxu0 0.0
    %574 = vmatpush1.msra.mxu0 %v361
    %575 = vmatprep.subr.mxu0 0.0
    %576 = vmatpush2.msra.mxu0 0.0
    %577 = vmatprep.subr.mxu0 0.0
    %578 = vmatpush2.msra.mxu0 0.0
    %579 = vmatprep.subr.mxu0 0.0
    %580 = vmatpush2.msra.mxu0 0.0
    %581 = vmatprep.subr.mxu0 0.0
    %582 = vmatpush2.msra.mxu0 0.0
    %583 = vmatprep.subr.mxu0 0.0
    %584 = vmatpush2.msra.mxu0 0.0
    %585 = vmatprep.subr.mxu0 0.0
    %586 = vmatpush2.msra.mxu0 0.0
    %587 = vmatprep.subr.mxu0 0.0
    %588 = vmatpush2.msra.mxu0 0.0
    %589 = vmatprep.subr.mxu0 0.0
    %590 = vmatpush2.msra.mxu0 0.0
    %591 = vmatprep.subr.mxu0 0.0
    %592 = vmatpush2.msra.mxu0 0.0
    %593 = vmatprep.subr.mxu0 0.0
    %594 = vmatpush2.msra.mxu0 0.0
    %595 = vmatprep.subr.mxu0 0.0
    %596 = vmatpush2.msra.mxu0 0.0
    %597 = vmatprep.subr.mxu0 0.0
    %598 = vmatpush2.msra.mxu0 0.0
    %599 = vmatprep.subr.mxu0 0.0
    %600 = vmatpush2.msra.mxu0 0.0
    %601 = vmatprep.subr.mxu0 0.0
    %602 = vmatpush2.msra.mxu0 0.0
    %603 = vmatprep.subr.mxu0 0.0
    %604 = vmatpush2.msra.mxu0 0.0
    %605 = vmatprep.subr.mxu0 0.0
    %606 = vmatpush2.msra.mxu0 0.0
    %607 = vmatprep.mubr.f32.mxu0 0.0
    %608 = vmatmul.mubr.f32.gmra.mxu0 %v529
    %v609 = vpop.f32.mrf.mxu0
    %v610 = vadd.f32 0.0, %v609
    %v611 = vpop.f32.mrf.mxu0
    %612 = vmatprep.mubr.f32.mxu0 0.0
    %613 = vmatmul.mubr.f32.gmra.mxu0 %v532
    %v614 = vpop.f32.mrf.mxu0
    %v615 = vadd.f32 0.0, %v614
    %v616 = vpop.f32.mrf.mxu0
    %617 = vmatprep.mubr.f32.mxu0 0.0
    %618 = vmatmul.mubr.f32.gmra.mxu0 %v535
    %v619 = vpop.f32.mrf.mxu0
    %v620 = vadd.f32 0.0, %v619
    %v621 = vpop.f32.mrf.mxu0
    %622 = vmatprep.mubr.f32.mxu0 0.0
    %623 = vmatmul.mubr.f32.gmra.mxu0 %v538
    %v624 = vpop.f32.mrf.mxu0
    %v625 = vadd.f32 0.0, %v624
    %v626 = vpop.f32.mrf.mxu0
    %627 = vmatprep.mubr.f32.mxu0 0.0
    %628 = vmatmul.mubr.f32.gmra.mxu0 %v541
    %v629 = vpop.f32.mrf.mxu0
    %v630 = vadd.f32 0.0, %v629
    %v631 = vpop.f32.mrf.mxu0
    %632 = vdwg.mxu0
    %v633 = vld [vmem:[%s5] sm:$0xff]
    %v635 = vsel %vm472, %v633, 0
    %637 = vmatprep.subr.mxu0 0.0
    %638 = vmatpush1.msra.mxu0 0.0
    %639 = vmatprep.subr.mxu0 0.0
    %640 = vmatpush1.msra.mxu0 0.0
    %641 = vmatprep.subr.mxu0 0.0
    %642 = vmatpush1.msra.mxu0 0.0
    %643 = vmatprep.subr.mxu0 0.0
    %644 = vmatpush1.msra.mxu0 0.0
    %645 = vmatprep.subr.mxu0 0.0
    %646 = vmatpush1.msra.mxu0 0.0
    %647 = vmatprep.subr.mxu0 0.0
    %648 = vmatpush1.msra.mxu0 0.0
    %649 = vmatprep.subr.mxu0 0.0
    %650 = vmatpush1.msra.mxu0 0.0
    %651 = vmatprep.subr.mxu0 0.0
    %652 = vmatpush1.msra.mxu0 0.0
    %653 = vmatprep.subr.mxu0 0.0
    %654 = vmatpush1.msra.mxu0 0.0
    %655 = vmatprep.subr.mxu0 0.0
    %656 = vmatpush1.msra.mxu0 0.0
    %657 = vmatprep.subr.mxu0 0.0
    %658 = vmatpush1.msra.mxu0 0.0
    %659 = vmatprep.subr.mxu0 0.0
    %660 = vmatpush1.msra.mxu0 %v630
    %661 = vmatprep.subr.mxu0 0.0
    %662 = vmatpush1.msra.mxu0 %v625
    %663 = vmatprep.subr.mxu0 0.0
    %664 = vmatpush1.msra.mxu0 %v620
    %665 = vmatprep.subr.mxu0 0.0
    %666 = vmatpush1.msra.mxu0 %v615
    %667 = vmatprep.subr.mxu0 0.0
    %668 = vmatpush1.msra.mxu0 %v610
    %669 = vmatprep.subr.mxu0 0.0
    %670 = vmatpush2.msra.mxu0 0.0
    %671 = vmatprep.subr.mxu0 0.0
    %672 = vmatpush2.msra.mxu0 0.0
    %673 = vmatprep.subr.mxu0 0.0
    %674 = vmatpush2.msra.mxu0 0.0
    %675 = vmatprep.subr.mxu0 0.0
    %676 = vmatpush2.msra.mxu0 0.0
    %677 = vmatprep.subr.mxu0 0.0
    %678 = vmatpush2.msra.mxu0 0.0
    %679 = vmatprep.subr.mxu0 0.0
    %680 = vmatpush2.msra.mxu0 0.0
    %681 = vmatprep.subr.mxu0 0.0
    %682 = vmatpush2.msra.mxu0 0.0
    %683 = vmatprep.subr.mxu0 0.0
    %684 = vmatpush2.msra.mxu0 0.0
    %685 = vmatprep.subr.mxu0 0.0
    %686 = vmatpush2.msra.mxu0 0.0
    %687 = vmatprep.subr.mxu0 0.0
    %688 = vmatpush2.msra.mxu0 0.0
    %689 = vmatprep.subr.mxu0 0.0
    %690 = vmatpush2.msra.mxu0 0.0
    %691 = vmatprep.subr.mxu0 0.0
    %692 = vmatpush2.msra.mxu0 0.0
    %693 = vmatprep.subr.mxu0 0.0
    %694 = vmatpush2.msra.mxu0 0.0
    %695 = vmatprep.subr.mxu0 0.0
    %696 = vmatpush2.msra.mxu0 0.0
    %697 = vmatprep.subr.mxu0 0.0
    %698 = vmatpush2.msra.mxu0 0.0
    %699 = vmatprep.subr.mxu0 0.0
    %700 = vmatpush2.msra.mxu0 0.0
    %701 = vmatprep.mubr.f32.mxu0 0.0
    %702 = vmatmul.mubr.f32.gmra.mxu0 %v635
    %v703 = vpop.f32.mrf.mxu0
    %v704 = vadd.f32 0.0, %v703
    %v705 = vpop.f32.mrf.mxu0
    %706 = vdwg.mxu0
    %v707 = vtanh.pop %v704
    %v708 = vld [vmem:[%s1] sm:$0xff]
    %v709 = vtanh.pop %v708
    %v710 = vld [vmem:[%s2] sm:$0xff]
    %v711 = vld [vmem:[#allocation4 + $0x180] sm:$0xff]
    %v712 = vld [vmem:[#allocation4 + $0x188] sm:$0xf]
    %v713 = vld [vmem:[#allocation4 + $0x18c] sm:$0xff]
    %v714 = vld [vmem:[#allocation4 + $0x194] sm:$0xf]
    %v715 = vld [vmem:[#allocation4 + $0x198] sm:$0xff]
    %v716 = vld [vmem:[#allocation4 + $0x1a0] sm:$0xf]
    %v717 = vld [vmem:[#allocation4 + $0x1a4] sm:$0xff]
    %v718 = vld [vmem:[#allocation4 + $0x1ac] sm:$0xf]
    %v719 = vld [vmem:[#allocation4 + $0x1b0] sm:$0xff]
    %v720 = vld [vmem:[#allocation4 + $0x1b8] sm:$0xf]
    %v721 = vld [vmem:[#allocation4 + $0x1bc] sm:$0xff]
    %v722 = vld [vmem:[#allocation4 + $0x1c4] sm:$0xf]
    %v723 = vld [vmem:[#allocation4 + $0x1c8] sm:$0xff]
    %v724 = vld [vmem:[#allocation4 + $0x1d0] sm:$0xf]
    %v725 = vld [vmem:[#allocation4 + $0x1d4] sm:$0xff]
    %v726 = vld [vmem:[#allocation4 + $0x1dc] sm:$0xf]
    %v727 = vld [vmem:[#allocation4 + $0x1e0] sm:$0xff]
    %v728 = vld [vmem:[#allocation4 + $0x1e8] sm:$0xf]
    %v729 = vld [vmem:[#allocation4 + $0x1ec] sm:$0xff]
    %v730 = vld [vmem:[#allocation4 + $0x1f4] sm:$0xf]
    %v731 = vld [vmem:[#allocation4 + $0x1f8] sm:$0xff]
    %v732 = vld [vmem:[#allocation4 + $0x200] sm:$0xf]
    %v733 = vld [vmem:[#allocation4 + $0x204] sm:$0xff]
    %v734 = vld [vmem:[#allocation4 + $0x20c] sm:$0xf]
    %v735 = vld [vmem:[#allocation4 + $0x210] sm:$0xff]
    %v736 = vld [vmem:[#allocation4 + $0x218] sm:$0xf]
    %v737 = vld [vmem:[#allocation4 + $0x21c] sm:$0xff]
    %v738 = vld [vmem:[#allocation4 + $0x224] sm:$0xf]
    %v739 = vld [vmem:[#allocation4 + $0x228] sm:$0xff]
    %v740 = vld [vmem:[#allocation4 + $0x230] sm:$0xf]
    %v741 = vld [vmem:[#allocation4 + $0x234] sm:$0xff]
    %v742 = vld [vmem:[#allocation4 + $0x23c] sm:$0xf]
    %v743 = vpack.c.bf16 %v710, %v710
    %s744 = scalar_lea.vmem %s11, 2
    %v745 = vld [vmem:[%s744] ss:$8 sm:$0x7]
    %v747 = vlaneseq
    %v748 = vshrl.u32 %v747, 7
    %v749 = vsub.s32 0, %v748
    %v750 = vrot.slane %v745, %v749
    %v751 = vlaneseq
    %v752 = vshrl.u32 %v751, 7
    %v753 = vsub.s32 1, %v752
    %v754 = vrot.slane %v745, %v753
    %v755 = vlaneseq
    %v756 = vshrl.u32 %v755, 7
    %v757 = vsub.s32 2, %v756
    %v758 = vrot.slane %v745, %v757
    %v794 = vunpack.c.l.b16 %v711
    %v795 = vunpack.c.h.b16 %v711
    %v796 = vunpack.c.l.b16 %v712
    %v797 = vunpack.c.l.b16 %v713
    %v798 = vunpack.c.h.b16 %v713
    %v799 = vunpack.c.l.b16 %v714
    %v800 = vunpack.c.l.b16 %v715
    %v801 = vunpack.c.h.b16 %v715
    %v802 = vunpack.c.l.b16 %v716
    %v803 = vunpack.c.l.b16 %v717
    %v804 = vunpack.c.h.b16 %v717
    %v805 = vunpack.c.l.b16 %v718
    %v806 = vunpack.c.l.b16 %v719
    %v807 = vunpack.c.h.b16 %v719
    %v808 = vunpack.c.l.b16 %v720
    %v809 = vunpack.c.l.b16 %v721
    %v810 = vunpack.c.h.b16 %v721
    %v811 = vunpack.c.l.b16 %v722
    %v812 = vunpack.c.l.b16 %v723
    %v813 = vunpack.c.h.b16 %v723
    %v814 = vunpack.c.l.b16 %v724
    %v815 = vunpack.c.l.b16 %v725
    %v816 = vunpack.c.h.b16 %v725
    %v817 = vunpack.c.l.b16 %v726
    %v818 = vunpack.c.l.b16 %v727
    %v819 = vunpack.c.h.b16 %v727
    %v820 = vunpack.c.l.b16 %v728
    %v821 = vunpack.c.l.b16 %v729
    %v822 = vunpack.c.h.b16 %v729
    %v823 = vunpack.c.l.b16 %v730
    %v824 = vunpack.c.l.b16 %v731
    %v825 = vunpack.c.h.b16 %v731
    %v826 = vunpack.c.l.b16 %v732
    %v827 = vunpack.c.l.b16 %v733
    %v828 = vunpack.c.h.b16 %v733
    %v829 = vunpack.c.l.b16 %v734
    %v830 = vunpack.c.l.b16 %v735
    %v831 = vunpack.c.h.b16 %v735
    %v832 = vunpack.c.l.b16 %v736
    %v833 = vunpack.c.l.b16 %v737
    %v834 = vunpack.c.h.b16 %v737
    %v835 = vunpack.c.l.b16 %v738
    %v836 = vunpack.c.l.b16 %v739
    %v837 = vunpack.c.h.b16 %v739
    %v838 = vunpack.c.l.b16 %v740
    %v839 = vunpack.c.l.b16 %v741
    %v840 = vunpack.c.h.b16 %v741
    %v841 = vunpack.c.l.b16 %v742
    %v842 = vpack.c.b16 %v797, %v794
    %v843 = vpack.c.b16 %v798, %v795
    %v844 = vpack.c.b16 %v799, %v796
    %v845 = vpack.c.b16 %v803, %v800
    %v846 = vpack.c.b16 %v804, %v801
    %v847 = vpack.c.b16 %v805, %v802
    %v848 = vpack.c.b16 %v809, %v806
    %v849 = vpack.c.b16 %v810, %v807
    %v850 = vpack.c.b16 %v811, %v808
    %v851 = vpack.c.b16 %v815, %v812
    %v852 = vpack.c.b16 %v816, %v813
    %v853 = vpack.c.b16 %v817, %v814
    %v854 = vpack.c.b16 %v821, %v818
    %v855 = vpack.c.b16 %v822, %v819
    %v856 = vpack.c.b16 %v823, %v820
    %v857 = vpack.c.b16 %v827, %v824
    %v858 = vpack.c.b16 %v828, %v825
    %v859 = vpack.c.b16 %v829, %v826
    %v860 = vpack.c.b16 %v833, %v830
    %v861 = vpack.c.b16 %v834, %v831
    %v862 = vpack.c.b16 %v835, %v832
    %v863 = vpack.c.b16 %v839, %v836
    %v864 = vpack.c.b16 %v840, %v837
    %v865 = vpack.c.b16 %v841, %v838
    %890 = vmatprep.subr.bf16.mxu0 %v864
    %891 = vmatpush1.bf16.msra.mxu0 %v863
    %892 = vmatprep.subr.bf16.mxu0 %v861
    %893 = vmatpush1.bf16.msra.mxu0 %v860
    %894 = vmatprep.subr.bf16.mxu0 %v858
    %895 = vmatpush1.bf16.msra.mxu0 %v857
    %896 = vmatprep.subr.bf16.mxu0 %v855
    %897 = vmatpush1.bf16.msra.mxu0 %v854
    %898 = vmatprep.subr.bf16.mxu0 %v852
    %899 = vmatpush1.bf16.msra.mxu0 %v851
    %900 = vmatprep.subr.bf16.mxu0 %v849
    %901 = vmatpush1.bf16.msra.mxu0 %v848
    %902 = vmatprep.subr.bf16.mxu0 %v846
    %903 = vmatpush1.bf16.msra.mxu0 %v845
    %904 = vmatprep.subr.bf16.mxu0 %v843
    %905 = vmatpush1.bf16.msra.mxu0 %v842
    %906 = vmatprep.subr.bf16.mxu0 0
    %907 = vmatpush2.bf16.msra.mxu0 0
    %908 = vmatprep.subr.bf16.mxu0 0
    %909 = vmatpush2.bf16.msra.mxu0 0
    %910 = vmatprep.subr.bf16.mxu0 0
    %911 = vmatpush2.bf16.msra.mxu0 0
    %912 = vmatprep.subr.bf16.mxu0 0
    %913 = vmatpush2.bf16.msra.mxu0 0
    %914 = vmatprep.subr.bf16.mxu0 0
    %915 = vmatpush2.bf16.msra.mxu0 0
    %916 = vmatprep.subr.bf16.mxu0 0
    %917 = vmatpush2.bf16.msra.mxu0 0
    %918 = vmatprep.subr.bf16.mxu0 0
    %919 = vmatpush2.bf16.msra.mxu0 0
    %920 = vmatprep.subr.bf16.mxu0 0
    %921 = vmatpush2.bf16.msra.mxu0 0
    %922 = vmatprep.mubr.bf16.mxu0 0
    %923 = vmatmul.mubr.bf16.gmra.mxu0 %v743
    %v924 = vpop.f32.mrf.mxu0
    %v925 = vadd.f32 %v750, %v924
    %v926 = vpop.f32.mrf.mxu0
    %v927 = vadd.f32 %v754, %v926
    %v928 = vpop.f32.mrf.mxu0
    %v929 = vpop.f32.mrf.mxu0
    %930 = vdwg.mxu0
    %931 = vmatprep.subr.bf16.mxu0 0
    %932 = vmatpush1.bf16.msra.mxu0 %v865
    %933 = vmatprep.subr.bf16.mxu0 0
    %934 = vmatpush1.bf16.msra.mxu0 %v862
    %935 = vmatprep.subr.bf16.mxu0 0
    %936 = vmatpush1.bf16.msra.mxu0 %v859
    %937 = vmatprep.subr.bf16.mxu0 0
    %938 = vmatpush1.bf16.msra.mxu0 %v856
    %939 = vmatprep.subr.bf16.mxu0 0
    %940 = vmatpush1.bf16.msra.mxu0 %v853
    %941 = vmatprep.subr.bf16.mxu0 0
    %942 = vmatpush1.bf16.msra.mxu0 %v850
    %943 = vmatprep.subr.bf16.mxu0 0
    %944 = vmatpush1.bf16.msra.mxu0 %v847
    %945 = vmatprep.subr.bf16.mxu0 0
    %946 = vmatpush1.bf16.msra.mxu0 %v844
    %947 = vmatprep.subr.bf16.mxu0 0
    %948 = vmatpush2.bf16.msra.mxu0 0
    %949 = vmatprep.subr.bf16.mxu0 0
    %950 = vmatpush2.bf16.msra.mxu0 0
    %951 = vmatprep.subr.bf16.mxu0 0
    %952 = vmatpush2.bf16.msra.mxu0 0
    %953 = vmatprep.subr.bf16.mxu0 0
    %954 = vmatpush2.bf16.msra.mxu0 0
    %955 = vmatprep.subr.bf16.mxu0 0
    %956 = vmatpush2.bf16.msra.mxu0 0
    %957 = vmatprep.subr.bf16.mxu0 0
    %958 = vmatpush2.bf16.msra.mxu0 0
    %959 = vmatprep.subr.bf16.mxu0 0
    %960 = vmatpush2.bf16.msra.mxu0 0
    %961 = vmatprep.subr.bf16.mxu0 0
    %962 = vmatpush2.bf16.msra.mxu0 0
    %963 = vmatprep.mubr.bf16.mxu0 0
    %964 = vmatmul.mubr.bf16.gmra.mxu0 %v743
    %v965 = vpop.f32.mrf.mxu0
    %v966 = vadd.f32 %v758, %v965
    %v967 = vpop.f32.mrf.mxu0
    %v968 = vpop.f32.mrf.mxu0
    %v969 = vpop.f32.mrf.mxu0
    %970 = vdwg.mxu0
    %v971 = vadd.f32 %v707, %v925
    %v972 = vadd.f32 %v707, %v927
    %v973 = vadd.f32 %v709, %v966
    %v974 = vld [vmem:[#allocation2] sm:$0xff]
    %v975 = vld [vmem:[#allocation2 + $0x8] sm:$0xff]
    %v976 = vld [vmem:[#allocation2 + $0x10] sm:$0xff]
    %v977 = vld [vmem:[#allocation2 + $0x18] sm:$0xff]
    %v978 = vld [vmem:[#allocation2 + $0x20] sm:$0xff]
    %v979 = vld [vmem:[#allocation2 + $0x28] sm:$0xff]
    %v980 = vld [vmem:[#allocation2 + $0x30] sm:$0xff]
    %v981 = vld [vmem:[#allocation2 + $0x38] sm:$0xff]
    %v982 = vld [vmem:[#allocation2 + $0x40] sm:$0xff]
    %v983 = vld [vmem:[#allocation2 + $0x48] sm:$0xff]
    %v984 = vld [vmem:[#allocation2 + $0x50] sm:$0xff]
    %v985 = vld [vmem:[#allocation2 + $0x58] sm:$0xff]
    %v986 = vld [vmem:[#allocation2 + $0x60] sm:$0xff]
    %v987 = vld [vmem:[#allocation2 + $0x68] sm:$0xff]
    %v988 = vld [vmem:[#allocation2 + $0x70] sm:$0xff]
    %v989 = vld [vmem:[#allocation2 + $0x78] sm:$0xff]
    %v990 = vld [vmem:[#allocation2 + $0x80] sm:$0xff]
    %v991 = vld [vmem:[#allocation2 + $0x88] sm:$0xff]
    %v992 = vld [vmem:[#allocation2 + $0x90] sm:$0xff]
    %v993 = vld [vmem:[#allocation2 + $0x98] sm:$0xff]
    %v994 = vld [vmem:[#allocation2 + $0xa0] sm:$0xff]
    %v995 = vld [vmem:[#allocation2 + $0xa8] sm:$0xff]
    %v996 = vld [vmem:[#allocation2 + $0xb0] sm:$0xff]
    %v997 = vld [vmem:[#allocation2 + $0xb8] sm:$0xff]
    %v998 = vld [vmem:[#allocation2 + $0xc0] sm:$0xff]
    %v999 = vld [vmem:[#allocation2 + $0xc8] sm:$0xff]
    %v1000 = vld [vmem:[#allocation2 + $0xd0] sm:$0xff]
    %v1001 = vld [vmem:[#allocation2 + $0xd8] sm:$0xff]
    %v1002 = vld [vmem:[#allocation2 + $0xe0] sm:$0xff]
    %v1003 = vld [vmem:[#allocation2 + $0xe8] sm:$0xff]
    %v1004 = vld [vmem:[#allocation2 + $0xf0] sm:$0xff]
    %v1005 = vld [vmem:[#allocation2 + $0xf8] sm:$0xff]
    %v1006 = vld [vmem:[#allocation2 + $0x100] sm:$0xff]
    %v1007 = vld [vmem:[#allocation2 + $0x108] sm:$0xff]
    %v1008 = vld [vmem:[#allocation2 + $0x110] sm:$0xff]
    %v1009 = vld [vmem:[#allocation2 + $0x118] sm:$0xff]
    %v1010 = vld [vmem:[#allocation2 + $0x120] sm:$0xff]
    %v1011 = vld [vmem:[#allocation2 + $0x128] sm:$0xff]
    %v1012 = vld [vmem:[#allocation2 + $0x130] sm:$0xff]
    %v1013 = vld [vmem:[#allocation2 + $0x138] sm:$0xff]
    %v1014 = vld [vmem:[#allocation2 + $0x140] sm:$0xff]
    %v1015 = vld [vmem:[#allocation2 + $0x148] sm:$0xff]
    %v1016 = vld [vmem:[#allocation2 + $0x150] sm:$0xff]
    %v1017 = vld [vmem:[#allocation2 + $0x158] sm:$0xff]
    %v1018 = vld [vmem:[#allocation2 + $0x160] sm:$0xff]
    %v1019 = vld [vmem:[#allocation2 + $0x168] sm:$0xff]
    %v1020 = vld [vmem:[#allocation2 + $0x170] sm:$0xff]
    %v1021 = vld [vmem:[#allocation2 + $0x178] sm:$0xff]
    %v1022 = vpack.c.bf16 %v971, %v971
    %v1023 = vpack.c.bf16 %v972, %v972
    %v1024 = vpack.c.bf16 %v973, %v973
    %s1025 = scalar_lea.vmem %s11, 3
    %v1026 = vld [vmem:[%s1025] ss:$8 sm:$0x3]
    %v1028 = vlaneseq
    %v1029 = vshrl.u32 %v1028, 7
    %v1030 = vsub.s32 0, %v1029
    %v1031 = vrot.slane %v1026, %v1030
    %v1032 = vlaneseq
    %v1033 = vshrl.u32 %v1032, 7
    %v1034 = vsub.s32 1, %v1033
    %v1035 = vrot.slane %v1026, %v1034
    %v1086 = vunpack.c.l.b16 %v974
    %v1087 = vunpack.c.h.b16 %v974
    %v1088 = vunpack.c.l.b16 %v975
    %v1089 = vunpack.c.h.b16 %v975
    %v1090 = vunpack.c.l.b16 %v976
    %v1091 = vunpack.c.h.b16 %v976
    %v1092 = vunpack.c.l.b16 %v977
    %v1093 = vunpack.c.h.b16 %v977
    %v1094 = vunpack.c.l.b16 %v978
    %v1095 = vunpack.c.h.b16 %v978
    %v1096 = vunpack.c.l.b16 %v979
    %v1097 = vunpack.c.h.b16 %v979
    %v1098 = vunpack.c.l.b16 %v980
    %v1099 = vunpack.c.h.b16 %v980
    %v1100 = vunpack.c.l.b16 %v981
    %v1101 = vunpack.c.h.b16 %v981
    %v1102 = vunpack.c.l.b16 %v982
    %v1103 = vunpack.c.h.b16 %v982
    %v1104 = vunpack.c.l.b16 %v983
    %v1105 = vunpack.c.h.b16 %v983
    %v1106 = vunpack.c.l.b16 %v984
    %v1107 = vunpack.c.h.b16 %v984
    %v1108 = vunpack.c.l.b16 %v985
    %v1109 = vunpack.c.h.b16 %v985
    %v1110 = vunpack.c.l.b16 %v986
    %v1111 = vunpack.c.h.b16 %v986
    %v1112 = vunpack.c.l.b16 %v987
    %v1113 = vunpack.c.h.b16 %v987
    %v1114 = vunpack.c.l.b16 %v988
    %v1115 = vunpack.c.h.b16 %v988
    %v1116 = vunpack.c.l.b16 %v989
    %v1117 = vunpack.c.h.b16 %v989
    %v1118 = vunpack.c.l.b16 %v990
    %v1119 = vunpack.c.h.b16 %v990
    %v1120 = vunpack.c.l.b16 %v991
    %v1121 = vunpack.c.h.b16 %v991
    %v1122 = vunpack.c.l.b16 %v992
    %v1123 = vunpack.c.h.b16 %v992
    %v1124 = vunpack.c.l.b16 %v993
    %v1125 = vunpack.c.h.b16 %v993
    %v1126 = vunpack.c.l.b16 %v994
    %v1127 = vunpack.c.h.b16 %v994
    %v1128 = vunpack.c.l.b16 %v995
    %v1129 = vunpack.c.h.b16 %v995
    %v1130 = vunpack.c.l.b16 %v996
    %v1131 = vunpack.c.h.b16 %v996
    %v1132 = vunpack.c.l.b16 %v997
    %v1133 = vunpack.c.h.b16 %v997
    %v1134 = vunpack.c.l.b16 %v998
    %v1135 = vunpack.c.h.b16 %v998
    %v1136 = vunpack.c.l.b16 %v999
    %v1137 = vunpack.c.h.b16 %v999
    %v1138 = vunpack.c.l.b16 %v1000
    %v1139 = vunpack.c.h.b16 %v1000
    %v1140 = vunpack.c.l.b16 %v1001
    %v1141 = vunpack.c.h.b16 %v1001
    %v1142 = vunpack.c.l.b16 %v1002
    %v1143 = vunpack.c.h.b16 %v1002
    %v1144 = vunpack.c.l.b16 %v1003
    %v1145 = vunpack.c.h.b16 %v1003
    %v1146 = vunpack.c.l.b16 %v1004
    %v1147 = vunpack.c.h.b16 %v1004
    %v1148 = vunpack.c.l.b16 %v1005
    %v1149 = vunpack.c.h.b16 %v1005
    %v1150 = vunpack.c.l.b16 %v1006
    %v1151 = vunpack.c.h.b16 %v1006
    %v1152 = vunpack.c.l.b16 %v1007
    %v1153 = vunpack.c.h.b16 %v1007
    %v1154 = vunpack.c.l.b16 %v1008
    %v1155 = vunpack.c.h.b16 %v1008
    %v1156 = vunpack.c.l.b16 %v1009
    %v1157 = vunpack.c.h.b16 %v1009
    %v1158 = vunpack.c.l.b16 %v1010
    %v1159 = vunpack.c.h.b16 %v1010
    %v1160 = vunpack.c.l.b16 %v1011
    %v1161 = vunpack.c.h.b16 %v1011
    %v1162 = vunpack.c.l.b16 %v1012
    %v1163 = vunpack.c.h.b16 %v1012
    %v1164 = vunpack.c.l.b16 %v1013
    %v1165 = vunpack.c.h.b16 %v1013
    %v1166 = vunpack.c.l.b16 %v1014
    %v1167 = vunpack.c.h.b16 %v1014
    %v1168 = vunpack.c.l.b16 %v1015
    %v1169 = vunpack.c.h.b16 %v1015
    %v1170 = vunpack.c.l.b16 %v1016
    %v1171 = vunpack.c.h.b16 %v1016
    %v1172 = vunpack.c.l.b16 %v1017
    %v1173 = vunpack.c.h.b16 %v1017
    %v1174 = vunpack.c.l.b16 %v1018
    %v1175 = vunpack.c.h.b16 %v1018
    %v1176 = vunpack.c.l.b16 %v1019
    %v1177 = vunpack.c.h.b16 %v1019
    %v1178 = vunpack.c.l.b16 %v1020
    %v1179 = vunpack.c.h.b16 %v1020
    %v1180 = vunpack.c.l.b16 %v1021
    %v1181 = vunpack.c.h.b16 %v1021
    %v1182 = vpack.c.b16 %v1088, %v1086
    %v1183 = vpack.c.b16 %v1089, %v1087
    %v1184 = vpack.c.b16 %v1092, %v1090
    %v1185 = vpack.c.b16 %v1093, %v1091
    %v1186 = vpack.c.b16 %v1096, %v1094
    %v1187 = vpack.c.b16 %v1097, %v1095
    %v1188 = vpack.c.b16 %v1100, %v1098
    %v1189 = vpack.c.b16 %v1101, %v1099
    %v1190 = vpack.c.b16 %v1104, %v1102
    %v1191 = vpack.c.b16 %v1105, %v1103
    %v1192 = vpack.c.b16 %v1108, %v1106
    %v1193 = vpack.c.b16 %v1109, %v1107
    %v1194 = vpack.c.b16 %v1112, %v1110
    %v1195 = vpack.c.b16 %v1113, %v1111
    %v1196 = vpack.c.b16 %v1116, %v1114
    %v1197 = vpack.c.b16 %v1117, %v1115
    %v1198 = vpack.c.b16 %v1120, %v1118
    %v1199 = vpack.c.b16 %v1121, %v1119
    %v1200 = vpack.c.b16 %v1124, %v1122
    %v1201 = vpack.c.b16 %v1125, %v1123
    %v1202 = vpack.c.b16 %v1128, %v1126
    %v1203 = vpack.c.b16 %v1129, %v1127
    %v1204 = vpack.c.b16 %v1132, %v1130
    %v1205 = vpack.c.b16 %v1133, %v1131
    %v1206 = vpack.c.b16 %v1136, %v1134
    %v1207 = vpack.c.b16 %v1137, %v1135
    %v1208 = vpack.c.b16 %v1140, %v1138
    %v1209 = vpack.c.b16 %v1141, %v1139
    %v1210 = vpack.c.b16 %v1144, %v1142
    %v1211 = vpack.c.b16 %v1145, %v1143
    %v1212 = vpack.c.b16 %v1148, %v1146
    %v1213 = vpack.c.b16 %v1149, %v1147
    %v1214 = vpack.c.b16 %v1152, %v1150
    %v1215 = vpack.c.b16 %v1153, %v1151
    %v1216 = vpack.c.b16 %v1156, %v1154
    %v1217 = vpack.c.b16 %v1157, %v1155
    %v1218 = vpack.c.b16 %v1160, %v1158
    %v1219 = vpack.c.b16 %v1161, %v1159
    %v1220 = vpack.c.b16 %v1164, %v1162
    %v1221 = vpack.c.b16 %v1165, %v1163
    %v1222 = vpack.c.b16 %v1168, %v1166
    %v1223 = vpack.c.b16 %v1169, %v1167
    %v1224 = vpack.c.b16 %v1172, %v1170
    %v1225 = vpack.c.b16 %v1173, %v1171
    %v1226 = vpack.c.b16 %v1176, %v1174
    %v1227 = vpack.c.b16 %v1177, %v1175
    %v1228 = vpack.c.b16 %v1180, %v1178
    %v1229 = vpack.c.b16 %v1181, %v1179
    %1278 = vmatprep.subr.bf16.mxu0 %v1197
    %1279 = vmatpush1.bf16.msra.mxu0 %v1196
    %1280 = vmatprep.subr.bf16.mxu0 %v1195
    %1281 = vmatpush1.bf16.msra.mxu0 %v1194
    %1282 = vmatprep.subr.bf16.mxu0 %v1193
    %1283 = vmatpush1.bf16.msra.mxu0 %v1192
    %1284 = vmatprep.subr.bf16.mxu0 %v1191
    %1285 = vmatpush1.bf16.msra.mxu0 %v1190
    %1286 = vmatprep.subr.bf16.mxu0 %v1189
    %1287 = vmatpush1.bf16.msra.mxu0 %v1188
    %1288 = vmatprep.subr.bf16.mxu0 %v1187
    %1289 = vmatpush1.bf16.msra.mxu0 %v1186
    %1290 = vmatprep.subr.bf16.mxu0 %v1185
    %1291 = vmatpush1.bf16.msra.mxu0 %v1184
    %1292 = vmatprep.subr.bf16.mxu0 %v1183
    %1293 = vmatpush1.bf16.msra.mxu0 %v1182
    %1294 = vmatprep.subr.bf16.mxu0 %v1213
    %1295 = vmatpush2.bf16.msra.mxu0 %v1212
    %1296 = vmatprep.subr.bf16.mxu0 %v1211
    %1297 = vmatpush2.bf16.msra.mxu0 %v1210
    %1298 = vmatprep.subr.bf16.mxu0 %v1209
    %1299 = vmatpush2.bf16.msra.mxu0 %v1208
    %1300 = vmatprep.subr.bf16.mxu0 %v1207
    %1301 = vmatpush2.bf16.msra.mxu0 %v1206
    %1302 = vmatprep.subr.bf16.mxu0 %v1205
    %1303 = vmatpush2.bf16.msra.mxu0 %v1204
    %1304 = vmatprep.subr.bf16.mxu0 %v1203
    %1305 = vmatpush2.bf16.msra.mxu0 %v1202
    %1306 = vmatprep.subr.bf16.mxu0 %v1201
    %1307 = vmatpush2.bf16.msra.mxu0 %v1200
    %1308 = vmatprep.subr.bf16.mxu0 %v1199
    %1309 = vmatpush2.bf16.msra.mxu0 %v1198
    %1310 = vmatprep.mubr.bf16.mxu0 %v1023
    %1311 = vmatmul.mubr.bf16.gmra.mxu0 %v1022
    %v1312 = vpop.f32.mrf.mxu0
    %v1313 = vadd.f32 %v1031, %v1312
    %v1314 = vpop.f32.mrf.mxu0
    %v1315 = vadd.f32 %v1035, %v1314
    %v1316 = vpop.f32.mrf.mxu0
    %v1317 = vpop.f32.mrf.mxu0
    %1318 = vdwg.mxu0
    %1319 = vmatprep.subr.bf16.mxu0 %v1229
    %1320 = vmatpush1.bf16.msra.mxu0 %v1228
    %1321 = vmatprep.subr.bf16.mxu0 %v1227
    %1322 = vmatpush1.bf16.msra.mxu0 %v1226
    %1323 = vmatprep.subr.bf16.mxu0 %v1225
    %1324 = vmatpush1.bf16.msra.mxu0 %v1224
    %1325 = vmatprep.subr.bf16.mxu0 %v1223
    %1326 = vmatpush1.bf16.msra.mxu0 %v1222
    %1327 = vmatprep.subr.bf16.mxu0 %v1221
    %1328 = vmatpush1.bf16.msra.mxu0 %v1220
    %1329 = vmatprep.subr.bf16.mxu0 %v1219
    %1330 = vmatpush1.bf16.msra.mxu0 %v1218
    %1331 = vmatprep.subr.bf16.mxu0 %v1217
    %1332 = vmatpush1.bf16.msra.mxu0 %v1216
    %1333 = vmatprep.subr.bf16.mxu0 %v1215
    %1334 = vmatpush1.bf16.msra.mxu0 %v1214
    %1335 = vmatprep.subr.bf16.mxu0 0
    %1336 = vmatpush2.bf16.msra.mxu0 0
    %1337 = vmatprep.subr.bf16.mxu0 0
    %1338 = vmatpush2.bf16.msra.mxu0 0
    %1339 = vmatprep.subr.bf16.mxu0 0
    %1340 = vmatpush2.bf16.msra.mxu0 0
    %1341 = vmatprep.subr.bf16.mxu0 0
    %1342 = vmatpush2.bf16.msra.mxu0 0
    %1343 = vmatprep.subr.bf16.mxu0 0
    %1344 = vmatpush2.bf16.msra.mxu0 0
    %1345 = vmatprep.subr.bf16.mxu0 0
    %1346 = vmatpush2.bf16.msra.mxu0 0
    %1347 = vmatprep.subr.bf16.mxu0 0
    %1348 = vmatpush2.bf16.msra.mxu0 0
    %1349 = vmatprep.subr.bf16.mxu0 0
    %1350 = vmatpush2.bf16.msra.mxu0 0
    %1351 = vmatprep.mubr.bf16.mxu0 0
    %1352 = vmatmul.mubr.bf16.gmra.mxu0 %v1024
    %v1353 = vpop.f32.mrf.mxu0
    %v1354 = vadd.f32 %v1313, %v1353
    %v1355 = vpop.f32.mrf.mxu0
    %v1356 = vadd.f32 %v1315, %v1355
    %v1357 = vpop.f32.mrf.mxu0
    %v1358 = vpop.f32.mrf.mxu0
    %1359 = vdwg.mxu0
    %vm1360 = vcmp.ge.f32.partialorder %v1354, 0.0
    %vm1361 = vcmp.ge.f32.partialorder %v1356, 0.0
    %v1362 = vmul.f32 %v1354, 0.01
    %v1363 = vmul.f32 %v1356, 0.01
    %v1364 = vsel %vm1360, %v1354, %v1362
    %v1365 = vsel %vm1361, %v1356, %v1363
    %v1366 = vld [vmem:[#allocation2 + $0x180] sm:$0xff]
    %v1367 = vld [vmem:[#allocation2 + $0x188] sm:$0xff]
    %v1368 = vld [vmem:[#allocation2 + $0x190] sm:$0xff]
    %v1369 = vld [vmem:[#allocation2 + $0x198] sm:$0xff]
    %v1370 = vld [vmem:[#allocation2 + $0x1a0] sm:$0xff]
    %v1371 = vld [vmem:[#allocation2 + $0x1a8] sm:$0xff]
    %v1372 = vld [vmem:[#allocation2 + $0x1b0] sm:$0xff]
    %v1373 = vld [vmem:[#allocation2 + $0x1b8] sm:$0xff]
    %v1374 = vld [vmem:[#allocation2 + $0x1c0] sm:$0xff]
    %v1375 = vld [vmem:[#allocation2 + $0x1c8] sm:$0xff]
    %v1376 = vld [vmem:[#allocation2 + $0x1d0] sm:$0xff]
    %v1377 = vld [vmem:[#allocation2 + $0x1d8] sm:$0xff]
    %v1378 = vld [vmem:[#allocation2 + $0x1e0] sm:$0xff]
    %v1379 = vld [vmem:[#allocation2 + $0x1e8] sm:$0xff]
    %v1380 = vld [vmem:[#allocation2 + $0x1f0] sm:$0xff]
    %v1381 = vld [vmem:[#allocation2 + $0x1f8] sm:$0xff]
    %v1382 = vld [vmem:[#allocation2 + $0x200] sm:$0xff]
    %v1383 = vld [vmem:[#allocation2 + $0x208] sm:$0xff]
    %v1384 = vld [vmem:[#allocation2 + $0x210] sm:$0xff]
    %v1385 = vld [vmem:[#allocation2 + $0x218] sm:$0xff]
    %v1386 = vld [vmem:[#allocation2 + $0x220] sm:$0xff]
    %v1387 = vld [vmem:[#allocation2 + $0x228] sm:$0xff]
    %v1388 = vld [vmem:[#allocation2 + $0x230] sm:$0xff]
    %v1389 = vld [vmem:[#allocation2 + $0x238] sm:$0xff]
    %v1390 = vld [vmem:[#allocation2 + $0x240] sm:$0xff]
    %v1391 = vld [vmem:[#allocation2 + $0x248] sm:$0xff]
    %v1392 = vld [vmem:[#allocation2 + $0x250] sm:$0xff]
    %v1393 = vld [vmem:[#allocation2 + $0x258] sm:$0xff]
    %v1394 = vld [vmem:[#allocation2 + $0x260] sm:$0xff]
    %v1395 = vld [vmem:[#allocation2 + $0x268] sm:$0xff]
    %v1396 = vld [vmem:[#allocation2 + $0x270] sm:$0xff]
    %v1397 = vld [vmem:[#allocation2 + $0x278] sm:$0xff]
    %v1398 = vpack.c.bf16 %v1364, %v1364
    %v1399 = vpack.c.bf16 %v1365, %v1365
    %s1400 = scalar_lea.vmem %s11, 4
    %v1401 = vld [vmem:[%s1400] ss:$8 sm:$0x3]
    %v1403 = vlaneseq
    %v1404 = vshrl.u32 %v1403, 7
    %v1405 = vsub.s32 0, %v1404
    %v1406 = vrot.slane %v1401, %v1405
    %v1407 = vlaneseq
    %v1408 = vshrl.u32 %v1407, 7
    %v1409 = vsub.s32 1, %v1408
    %v1410 = vrot.slane %v1401, %v1409
    %v1445 = vunpack.c.l.b16 %v1366
    %v1446 = vunpack.c.h.b16 %v1366
    %v1447 = vunpack.c.l.b16 %v1367
    %v1448 = vunpack.c.h.b16 %v1367
    %v1449 = vunpack.c.l.b16 %v1368
    %v1450 = vunpack.c.h.b16 %v1368
    %v1451 = vunpack.c.l.b16 %v1369
    %v1452 = vunpack.c.h.b16 %v1369
    %v1453 = vunpack.c.l.b16 %v1370
    %v1454 = vunpack.c.h.b16 %v1370
    %v1455 = vunpack.c.l.b16 %v1371
    %v1456 = vunpack.c.h.b16 %v1371
    %v1457 = vunpack.c.l.b16 %v1372
    %v1458 = vunpack.c.h.b16 %v1372
    %v1459 = vunpack.c.l.b16 %v1373
    %v1460 = vunpack.c.h.b16 %v1373
    %v1461 = vunpack.c.l.b16 %v1374
    %v1462 = vunpack.c.h.b16 %v1374
    %v1463 = vunpack.c.l.b16 %v1375
    %v1464 = vunpack.c.h.b16 %v1375
    %v1465 = vunpack.c.l.b16 %v1376
    %v1466 = vunpack.c.h.b16 %v1376
    %v1467 = vunpack.c.l.b16 %v1377
    %v1468 = vunpack.c.h.b16 %v1377
    %v1469 = vunpack.c.l.b16 %v1378
    %v1470 = vunpack.c.h.b16 %v1378
    %v1471 = vunpack.c.l.b16 %v1379
    %v1472 = vunpack.c.h.b16 %v1379
    %v1473 = vunpack.c.l.b16 %v1380
    %v1474 = vunpack.c.h.b16 %v1380
    %v1475 = vunpack.c.l.b16 %v1381
    %v1476 = vunpack.c.h.b16 %v1381
    %v1477 = vunpack.c.l.b16 %v1382
    %v1478 = vunpack.c.h.b16 %v1382
    %v1479 = vunpack.c.l.b16 %v1383
    %v1480 = vunpack.c.h.b16 %v1383
    %v1481 = vunpack.c.l.b16 %v1384
    %v1482 = vunpack.c.h.b16 %v1384
    %v1483 = vunpack.c.l.b16 %v1385
    %v1484 = vunpack.c.h.b16 %v1385
    %v1485 = vunpack.c.l.b16 %v1386
    %v1486 = vunpack.c.h.b16 %v1386
    %v1487 = vunpack.c.l.b16 %v1387
    %v1488 = vunpack.c.h.b16 %v1387
    %v1489 = vunpack.c.l.b16 %v1388
    %v1490 = vunpack.c.h.b16 %v1388
    %v1491 = vunpack.c.l.b16 %v1389
    %v1492 = vunpack.c.h.b16 %v1389
    %v1493 = vunpack.c.l.b16 %v1390
    %v1494 = vunpack.c.h.b16 %v1390
    %v1495 = vunpack.c.l.b16 %v1391
    %v1496 = vunpack.c.h.b16 %v1391
    %v1497 = vunpack.c.l.b16 %v1392
    %v1498 = vunpack.c.h.b16 %v1392
    %v1499 = vunpack.c.l.b16 %v1393
    %v1500 = vunpack.c.h.b16 %v1393
    %v1501 = vunpack.c.l.b16 %v1394
    %v1502 = vunpack.c.h.b16 %v1394
    %v1503 = vunpack.c.l.b16 %v1395
    %v1504 = vunpack.c.h.b16 %v1395
    %v1505 = vunpack.c.l.b16 %v1396
    %v1506 = vunpack.c.h.b16 %v1396
    %v1507 = vunpack.c.l.b16 %v1397
    %v1508 = vunpack.c.h.b16 %v1397
    %v1509 = vpack.c.b16 %v1447, %v1445
    %v1510 = vpack.c.b16 %v1448, %v1446
    %v1511 = vpack.c.b16 %v1451, %v1449
    %v1512 = vpack.c.b16 %v1452, %v1450
    %v1513 = vpack.c.b16 %v1455, %v1453
    %v1514 = vpack.c.b16 %v1456, %v1454
    %v1515 = vpack.c.b16 %v1459, %v1457
    %v1516 = vpack.c.b16 %v1460, %v1458
    %v1517 = vpack.c.b16 %v1463, %v1461
    %v1518 = vpack.c.b16 %v1464, %v1462
    %v1519 = vpack.c.b16 %v1467, %v1465
    %v1520 = vpack.c.b16 %v1468, %v1466
    %v1521 = vpack.c.b16 %v1471, %v1469
    %v1522 = vpack.c.b16 %v1472, %v1470
    %v1523 = vpack.c.b16 %v1475, %v1473
    %v1524 = vpack.c.b16 %v1476, %v1474
    %v1525 = vpack.c.b16 %v1479, %v1477
    %v1526 = vpack.c.b16 %v1480, %v1478
    %v1527 = vpack.c.b16 %v1483, %v1481
    %v1528 = vpack.c.b16 %v1484, %v1482
    %v1529 = vpack.c.b16 %v1487, %v1485
    %v1530 = vpack.c.b16 %v1488, %v1486
    %v1531 = vpack.c.b16 %v1491, %v1489
    %v1532 = vpack.c.b16 %v1492, %v1490
    %v1533 = vpack.c.b16 %v1495, %v1493
    %v1534 = vpack.c.b16 %v1496, %v1494
    %v1535 = vpack.c.b16 %v1499, %v1497
    %v1536 = vpack.c.b16 %v1500, %v1498
    %v1537 = vpack.c.b16 %v1503, %v1501
    %v1538 = vpack.c.b16 %v1504, %v1502
    %v1539 = vpack.c.b16 %v1507, %v1505
    %v1540 = vpack.c.b16 %v1508, %v1506
    %1573 = vmatprep.subr.bf16.mxu0 %v1524
    %1574 = vmatpush1.bf16.msra.mxu0 %v1523
    %1575 = vmatprep.subr.bf16.mxu0 %v1522
    %1576 = vmatpush1.bf16.msra.mxu0 %v1521
    %1577 = vmatprep.subr.bf16.mxu0 %v1520
    %1578 = vmatpush1.bf16.msra.mxu0 %v1519
    %1579 = vmatprep.subr.bf16.mxu0 %v1518
    %1580 = vmatpush1.bf16.msra.mxu0 %v1517
    %1581 = vmatprep.subr.bf16.mxu0 %v1516
    %1582 = vmatpush1.bf16.msra.mxu0 %v1515
    %1583 = vmatprep.subr.bf16.mxu0 %v1514
    %1584 = vmatpush1.bf16.msra.mxu0 %v1513
    %1585 = vmatprep.subr.bf16.mxu0 %v1512
    %1586 = vmatpush1.bf16.msra.mxu0 %v1511
    %1587 = vmatprep.subr.bf16.mxu0 %v1510
    %1588 = vmatpush1.bf16.msra.mxu0 %v1509
    %1589 = vmatprep.subr.bf16.mxu0 %v1540
    %1590 = vmatpush2.bf16.msra.mxu0 %v1539
    %1591 = vmatprep.subr.bf16.mxu0 %v1538
    %1592 = vmatpush2.bf16.msra.mxu0 %v1537
    %1593 = vmatprep.subr.bf16.mxu0 %v1536
    %1594 = vmatpush2.bf16.msra.mxu0 %v1535
    %1595 = vmatprep.subr.bf16.mxu0 %v1534
    %1596 = vmatpush2.bf16.msra.mxu0 %v1533
    %1597 = vmatprep.subr.bf16.mxu0 %v1532
    %1598 = vmatpush2.bf16.msra.mxu0 %v1531
    %1599 = vmatprep.subr.bf16.mxu0 %v1530
    %1600 = vmatpush2.bf16.msra.mxu0 %v1529
    %1601 = vmatprep.subr.bf16.mxu0 %v1528
    %1602 = vmatpush2.bf16.msra.mxu0 %v1527
    %1603 = vmatprep.subr.bf16.mxu0 %v1526
    %1604 = vmatpush2.bf16.msra.mxu0 %v1525
    %1605 = vmatprep.mubr.bf16.mxu0 %v1399
    %1606 = vmatmul.mubr.bf16.gmra.mxu0 %v1398
    %v1607 = vpop.f32.mrf.mxu0
    %v1608 = vadd.f32 %v1406, %v1607
    %v1609 = vpop.f32.mrf.mxu0
    %v1610 = vadd.f32 %v1410, %v1609
    %v1611 = vpop.f32.mrf.mxu0
    %v1612 = vpop.f32.mrf.mxu0
    %1613 = vdwg.mxu0
    %vm1614 = vcmp.ge.f32.partialorder %v1608, 0.0
    %vm1615 = vcmp.ge.f32.partialorder %v1610, 0.0
    %v1616 = vmul.f32 %v1608, 0.01
    %v1617 = vmul.f32 %v1610, 0.01
    %v1618 = vsel %vm1614, %v1608, %v1616
    %v1619 = vsel %vm1615, %v1610, %v1617
    %v1620 = vld [vmem:[%s8] sm:$0xf]
    %v1621 = vld [vmem:[%s8 + $0x4] sm:$0xf]
    %v1622 = vld [vmem:[%s8 + $0x8] sm:$0xf]
    %v1623 = vld [vmem:[%s8 + $0xc] sm:$0xf]
    %v1624 = vld [vmem:[%s8 + $0x10] sm:$0xf]
    %v1625 = vld [vmem:[%s8 + $0x14] sm:$0xf]
    %v1626 = vld [vmem:[%s8 + $0x18] sm:$0xf]
    %v1627 = vld [vmem:[%s8 + $0x1c] sm:$0xf]
    %v1628 = vld [vmem:[%s8 + $0x20] sm:$0xf]
    %v1629 = vld [vmem:[%s8 + $0x24] sm:$0xf]
    %v1630 = vld [vmem:[%s8 + $0x28] sm:$0xf]
    %v1631 = vld [vmem:[%s8 + $0x2c] sm:$0xf]
    %v1632 = vld [vmem:[%s8 + $0x30] sm:$0xf]
    %v1633 = vld [vmem:[%s8 + $0x34] sm:$0xf]
    %v1634 = vld [vmem:[%s8 + $0x38] sm:$0xf]
    %v1635 = vld [vmem:[%s8 + $0x3c] sm:$0xf]
    %v1636 = vld [vmem:[%s8 + $0x40] sm:$0xf]
    %v1637 = vld [vmem:[%s8 + $0x44] sm:$0xf]
    %v1638 = vld [vmem:[%s8 + $0x48] sm:$0xf]
    %v1639 = vld [vmem:[%s8 + $0x4c] sm:$0xf]
    %v1640 = vld [vmem:[%s8 + $0x50] sm:$0xf]
    %v1641 = vld [vmem:[%s8 + $0x54] sm:$0xf]
    %v1642 = vld [vmem:[%s8 + $0x58] sm:$0xf]
    %v1643 = vld [vmem:[%s8 + $0x5c] sm:$0xf]
    %v1644 = vld [vmem:[%s8 + $0x60] sm:$0xf]
    %v1645 = vld [vmem:[%s8 + $0x64] sm:$0xf]
    %v1646 = vld [vmem:[%s8 + $0x68] sm:$0xf]
    %v1647 = vld [vmem:[%s8 + $0x6c] sm:$0xf]
    %v1648 = vld [vmem:[%s8 + $0x70] sm:$0xf]
    %v1649 = vld [vmem:[%s8 + $0x74] sm:$0xf]
    %v1650 = vld [vmem:[%s8 + $0x78] sm:$0xf]
    %v1651 = vld [vmem:[%s8 + $0x7c] sm:$0xf]
    %v1652 = vpack.c.bf16 %v1618, %v1618
    %v1653 = vpack.c.bf16 %v1619, %v1619
    %v1654 = vld [vmem:[%s11 + $0x1a] ss:$0 sm:$0xff]
    %v1687 = vunpack.c.l.b16 %v1620
    %v1688 = vunpack.c.l.b16 %v1621
    %v1689 = vunpack.c.l.b16 %v1622
    %v1690 = vunpack.c.l.b16 %v1623
    %v1691 = vunpack.c.l.b16 %v1624
    %v1692 = vunpack.c.l.b16 %v1625
    %v1693 = vunpack.c.l.b16 %v1626
    %v1694 = vunpack.c.l.b16 %v1627
    %v1695 = vunpack.c.l.b16 %v1628
    %v1696 = vunpack.c.l.b16 %v1629
    %v1697 = vunpack.c.l.b16 %v1630
    %v1698 = vunpack.c.l.b16 %v1631
    %v1699 = vunpack.c.l.b16 %v1632
    %v1700 = vunpack.c.l.b16 %v1633
    %v1701 = vunpack.c.l.b16 %v1634
    %v1702 = vunpack.c.l.b16 %v1635
    %v1703 = vunpack.c.l.b16 %v1636
    %v1704 = vunpack.c.l.b16 %v1637
    %v1705 = vunpack.c.l.b16 %v1638
    %v1706 = vunpack.c.l.b16 %v1639
    %v1707 = vunpack.c.l.b16 %v1640
    %v1708 = vunpack.c.l.b16 %v1641
    %v1709 = vunpack.c.l.b16 %v1642
    %v1710 = vunpack.c.l.b16 %v1643
    %v1711 = vunpack.c.l.b16 %v1644
    %v1712 = vunpack.c.l.b16 %v1645
    %v1713 = vunpack.c.l.b16 %v1646
    %v1714 = vunpack.c.l.b16 %v1647
    %v1715 = vunpack.c.l.b16 %v1648
    %v1716 = vunpack.c.l.b16 %v1649
    %v1717 = vunpack.c.l.b16 %v1650
    %v1718 = vunpack.c.l.b16 %v1651
    %v1719 = vpack.c.b16 %v1688, %v1687
    %v1720 = vpack.c.b16 %v1690, %v1689
    %v1721 = vpack.c.b16 %v1692, %v1691
    %v1722 = vpack.c.b16 %v1694, %v1693
    %v1723 = vpack.c.b16 %v1696, %v1695
    %v1724 = vpack.c.b16 %v1698, %v1697
    %v1725 = vpack.c.b16 %v1700, %v1699
    %v1726 = vpack.c.b16 %v1702, %v1701
    %v1727 = vpack.c.b16 %v1704, %v1703
    %v1728 = vpack.c.b16 %v1706, %v1705
    %v1729 = vpack.c.b16 %v1708, %v1707
    %v1730 = vpack.c.b16 %v1710, %v1709
    %v1731 = vpack.c.b16 %v1712, %v1711
    %v1732 = vpack.c.b16 %v1714, %v1713
    %v1733 = vpack.c.b16 %v1716, %v1715
    %v1734 = vpack.c.b16 %v1718, %v1717
    %1751 = vmatprep.subr.bf16.mxu0 0
    %1752 = vmatpush1.bf16.msra.mxu0 %v1726
    %1753 = vmatprep.subr.bf16.mxu0 0
    %1754 = vmatpush1.bf16.msra.mxu0 %v1725
    %1755 = vmatprep.subr.bf16.mxu0 0
    %1756 = vmatpush1.bf16.msra.mxu0 %v1724
    %1757 = vmatprep.subr.bf16.mxu0 0
    %1758 = vmatpush1.bf16.msra.mxu0 %v1723
    %1759 = vmatprep.subr.bf16.mxu0 0
    %1760 = vmatpush1.bf16.msra.mxu0 %v1722
    %1761 = vmatprep.subr.bf16.mxu0 0
    %1762 = vmatpush1.bf16.msra.mxu0 %v1721
    %1763 = vmatprep.subr.bf16.mxu0 0
    %1764 = vmatpush1.bf16.msra.mxu0 %v1720
    %1765 = vmatprep.subr.bf16.mxu0 0
    %1766 = vmatpush1.bf16.msra.mxu0 %v1719
    %1767 = vmatprep.subr.bf16.mxu0 0
    %1768 = vmatpush2.bf16.msra.mxu0 %v1734
    %1769 = vmatprep.subr.bf16.mxu0 0
    %1770 = vmatpush2.bf16.msra.mxu0 %v1733
    %1771 = vmatprep.subr.bf16.mxu0 0
    %1772 = vmatpush2.bf16.msra.mxu0 %v1732
    %1773 = vmatprep.subr.bf16.mxu0 0
    %1774 = vmatpush2.bf16.msra.mxu0 %v1731
    %1775 = vmatprep.subr.bf16.mxu0 0
    %1776 = vmatpush2.bf16.msra.mxu0 %v1730
    %1777 = vmatprep.subr.bf16.mxu0 0
    %1778 = vmatpush2.bf16.msra.mxu0 %v1729
    %1779 = vmatprep.subr.bf16.mxu0 0
    %1780 = vmatpush2.bf16.msra.mxu0 %v1728
    %1781 = vmatprep.subr.bf16.mxu0 0
    %1782 = vmatpush2.bf16.msra.mxu0 %v1727
    %1783 = vmatprep.mubr.bf16.mxu0 %v1653
    %1784 = vmatmul.mubr.bf16.gmra.mxu0 %v1652
    %v1785 = vpop.f32.mrf.mxu0
    %v1786 = vadd.f32 %v1654, %v1785
    %v1787 = vpop.f32.mrf.mxu0
    %v1788 = vpop.f32.mrf.mxu0
    %v1789 = vpop.f32.mrf.mxu0
    %1790 = vdwg.mxu0
    %v1791 = vld [vmem:[#allocation2 + $0x580] sm:$0xff]
    %v1792 = vld [vmem:[#allocation2 + $0x588] sm:$0xff]
    %v1793 = vld [vmem:[#allocation2 + $0x590] sm:$0xff]
    %v1794 = vld [vmem:[#allocation2 + $0x598] sm:$0xff]
    %v1795 = vld [vmem:[#allocation2 + $0x5a0] sm:$0xff]
    %v1796 = vld [vmem:[#allocation2 + $0x5a8] sm:$0xff]
    %v1797 = vld [vmem:[#allocation2 + $0x5b0] sm:$0xff]
    %v1798 = vld [vmem:[#allocation2 + $0x5b8] sm:$0xff]
    %v1799 = vld [vmem:[#allocation2 + $0x5c0] sm:$0xff]
    %v1800 = vld [vmem:[#allocation2 + $0x5c8] sm:$0xff]
    %v1801 = vld [vmem:[#allocation2 + $0x5d0] sm:$0xff]
    %v1802 = vld [vmem:[#allocation2 + $0x5d8] sm:$0xff]
    %v1803 = vld [vmem:[#allocation2 + $0x5e0] sm:$0xff]
    %v1804 = vld [vmem:[#allocation2 + $0x5e8] sm:$0xff]
    %v1805 = vld [vmem:[#allocation2 + $0x5f0] sm:$0xff]
    %v1806 = vld [vmem:[#allocation2 + $0x5f8] sm:$0xff]
    %v1807 = vpack.c.bf16 %v1786, %v1786
    %s1808 = scalar_lea.vmem %s11, 25
    %v1809 = vld [vmem:[%s1808] ss:$8 sm:$0x3]
    %v1811 = vlaneseq
    %v1812 = vshrl.u32 %v1811, 7
    %v1813 = vsub.s32 0, %v1812
    %v1814 = vrot.slane %v1809, %v1813
    %v1815 = vlaneseq
    %v1816 = vshrl.u32 %v1815, 7
    %v1817 = vsub.s32 1, %v1816
    %v1818 = vrot.slane %v1809, %v1817
    %v1837 = vunpack.c.l.b16 %v1791
    %v1838 = vunpack.c.h.b16 %v1791
    %v1839 = vunpack.c.l.b16 %v1792
    %v1840 = vunpack.c.h.b16 %v1792
    %v1841 = vunpack.c.l.b16 %v1793
    %v1842 = vunpack.c.h.b16 %v1793
    %v1843 = vunpack.c.l.b16 %v1794
    %v1844 = vunpack.c.h.b16 %v1794
    %v1845 = vunpack.c.l.b16 %v1795
    %v1846 = vunpack.c.h.b16 %v1795
    %v1847 = vunpack.c.l.b16 %v1796
    %v1848 = vunpack.c.h.b16 %v1796
    %v1849 = vunpack.c.l.b16 %v1797
    %v1850 = vunpack.c.h.b16 %v1797
    %v1851 = vunpack.c.l.b16 %v1798
    %v1852 = vunpack.c.h.b16 %v1798
    %v1853 = vunpack.c.l.b16 %v1799
    %v1854 = vunpack.c.h.b16 %v1799
    %v1855 = vunpack.c.l.b16 %v1800
    %v1856 = vunpack.c.h.b16 %v1800
    %v1857 = vunpack.c.l.b16 %v1801
    %v1858 = vunpack.c.h.b16 %v1801
    %v1859 = vunpack.c.l.b16 %v1802
    %v1860 = vunpack.c.h.b16 %v1802
    %v1861 = vunpack.c.l.b16 %v1803
    %v1862 = vunpack.c.h.b16 %v1803
    %v1863 = vunpack.c.l.b16 %v1804
    %v1864 = vunpack.c.h.b16 %v1804
    %v1865 = vunpack.c.l.b16 %v1805
    %v1866 = vunpack.c.h.b16 %v1805
    %v1867 = vunpack.c.l.b16 %v1806
    %v1868 = vunpack.c.h.b16 %v1806
    %v1869 = vpack.c.b16 %v1839, %v1837
    %v1870 = vpack.c.b16 %v1840, %v1838
    %v1871 = vpack.c.b16 %v1843, %v1841
    %v1872 = vpack.c.b16 %v1844, %v1842
    %v1873 = vpack.c.b16 %v1847, %v1845
    %v1874 = vpack.c.b16 %v1848, %v1846
    %v1875 = vpack.c.b16 %v1851, %v1849
    %v1876 = vpack.c.b16 %v1852, %v1850
    %v1877 = vpack.c.b16 %v1855, %v1853
    %v1878 = vpack.c.b16 %v1856, %v1854
    %v1879 = vpack.c.b16 %v1859, %v1857
    %v1880 = vpack.c.b16 %v1860, %v1858
    %v1881 = vpack.c.b16 %v1863, %v1861
    %v1882 = vpack.c.b16 %v1864, %v1862
    %v1883 = vpack.c.b16 %v1867, %v1865
    %v1884 = vpack.c.b16 %v1868, %v1866
    %1901 = vmatprep.subr.bf16.mxu0 %v1884
    %1902 = vmatpush1.bf16.msra.mxu0 %v1883
    %1903 = vmatprep.subr.bf16.mxu0 %v1882
    %1904 = vmatpush1.bf16.msra.mxu0 %v1881
    %1905 = vmatprep.subr.bf16.mxu0 %v1880
    %1906 = vmatpush1.bf16.msra.mxu0 %v1879
    %1907 = vmatprep.subr.bf16.mxu0 %v1878
    %1908 = vmatpush1.bf16.msra.mxu0 %v1877
    %1909 = vmatprep.subr.bf16.mxu0 %v1876
    %1910 = vmatpush1.bf16.msra.mxu0 %v1875
    %1911 = vmatprep.subr.bf16.mxu0 %v1874
    %1912 = vmatpush1.bf16.msra.mxu0 %v1873
    %1913 = vmatprep.subr.bf16.mxu0 %v1872
    %1914 = vmatpush1.bf16.msra.mxu0 %v1871
    %1915 = vmatprep.subr.bf16.mxu0 %v1870
    %1916 = vmatpush1.bf16.msra.mxu0 %v1869
    %1917 = vmatprep.subr.bf16.mxu0 0
    %1918 = vmatpush2.bf16.msra.mxu0 0
    %1919 = vmatprep.subr.bf16.mxu0 0
    %1920 = vmatpush2.bf16.msra.mxu0 0
    %1921 = vmatprep.subr.bf16.mxu0 0
    %1922 = vmatpush2.bf16.msra.mxu0 0
    %1923 = vmatprep.subr.bf16.mxu0 0
    %1924 = vmatpush2.bf16.msra.mxu0 0
    %1925 = vmatprep.subr.bf16.mxu0 0
    %1926 = vmatpush2.bf16.msra.mxu0 0
    %1927 = vmatprep.subr.bf16.mxu0 0
    %1928 = vmatpush2.bf16.msra.mxu0 0
    %1929 = vmatprep.subr.bf16.mxu0 0
    %1930 = vmatpush2.bf16.msra.mxu0 0
    %1931 = vmatprep.subr.bf16.mxu0 0
    %1932 = vmatpush2.bf16.msra.mxu0 0
    %1933 = vmatprep.mubr.bf16.mxu0 0
    %1934 = vmatmul.mubr.bf16.gmra.mxu0 %v1807
    %v1935 = vpop.f32.mrf.mxu0
    %v1936 = vadd.f32 %v1814, %v1935
    %v1937 = vpop.f32.mrf.mxu0
    %v1938 = vadd.f32 %v1818, %v1937
    %v1939 = vpop.f32.mrf.mxu0
    %v1940 = vpop.f32.mrf.mxu0
    %1941 = vdwg.mxu0
    %1942 = vst [vmem:[%s12] sm:$0xff] %v1936
    %1943 = vst [vmem:[%s12 + $0x8] sm:$0xff] %v1938
    %v1944 = vmul.f32 %v1938, 0.5
    %v1945 = vmul.f32 %v1944, 1.442695
    %v1946 = vpow.pop %v1945
    %v1947 = vld [vmem:[%s3] sm:$0xff]
    %v1948 = vmul.f32 %v1946, %v1947
    %v1949 = vadd.f32 %v1936, %v1948
    %v1950 = vld [vmem:[#allocation2 + $0x280] sm:$0xff]
    %v1951 = vld [vmem:[#allocation2 + $0x288] sm:$0xff]
    %v1952 = vld [vmem:[#allocation2 + $0x290] sm:$0xff]
    %v1953 = vld [vmem:[#allocation2 + $0x298] sm:$0xff]
    %v1954 = vld [vmem:[#allocation2 + $0x2a0] sm:$0xff]
    %v1955 = vld [vmem:[#allocation2 + $0x2a8] sm:$0xff]
    %v1956 = vld [vmem:[#allocation2 + $0x2b0] sm:$0xff]
    %v1957 = vld [vmem:[#allocation2 + $0x2b8] sm:$0xff]
    %v1958 = vld [vmem:[#allocation2 + $0x2c0] sm:$0xff]
    %v1959 = vld [vmem:[#allocation2 + $0x2c8] sm:$0xff]
    %v1960 = vld [vmem:[#allocation2 + $0x2d0] sm:$0xff]
    %v1961 = vld [vmem:[#allocation2 + $0x2d8] sm:$0xff]
    %v1962 = vld [vmem:[#allocation2 + $0x2e0] sm:$0xff]
    %v1963 = vld [vmem:[#allocation2 + $0x2e8] sm:$0xff]
    %v1964 = vld [vmem:[#allocation2 + $0x2f0] sm:$0xff]
    %v1965 = vld [vmem:[#allocation2 + $0x2f8] sm:$0xff]
    %v1966 = vpack.c.bf16 %v1949, %v1949
    %s1967 = scalar_lea.vmem %s11, 5
    %v1968 = vld [vmem:[%s1967] ss:$8 sm:$0x3]
    %v1970 = vlaneseq
    %v1971 = vshrl.u32 %v1970, 7
    %v1972 = vsub.s32 0, %v1971
    %v1973 = vrot.slane %v1968, %v1972
    %v1974 = vlaneseq
    %v1975 = vshrl.u32 %v1974, 7
    %v1976 = vsub.s32 1, %v1975
    %v1977 = vrot.slane %v1968, %v1976
    %v1996 = vunpack.c.l.b16 %v1950
    %v1997 = vunpack.c.h.b16 %v1950
    %v1998 = vunpack.c.l.b16 %v1951
    %v1999 = vunpack.c.h.b16 %v1951
    %v2000 = vunpack.c.l.b16 %v1952
    %v2001 = vunpack.c.h.b16 %v1952
    %v2002 = vunpack.c.l.b16 %v1953
    %v2003 = vunpack.c.h.b16 %v1953
    %v2004 = vunpack.c.l.b16 %v1954
    %v2005 = vunpack.c.h.b16 %v1954
    %v2006 = vunpack.c.l.b16 %v1955
    %v2007 = vunpack.c.h.b16 %v1955
    %v2008 = vunpack.c.l.b16 %v1956
    %v2009 = vunpack.c.h.b16 %v1956
    %v2010 = vunpack.c.l.b16 %v1957
    %v2011 = vunpack.c.h.b16 %v1957
    %v2012 = vunpack.c.l.b16 %v1958
    %v2013 = vunpack.c.h.b16 %v1958
    %v2014 = vunpack.c.l.b16 %v1959
    %v2015 = vunpack.c.h.b16 %v1959
    %v2016 = vunpack.c.l.b16 %v1960
    %v2017 = vunpack.c.h.b16 %v1960
    %v2018 = vunpack.c.l.b16 %v1961
    %v2019 = vunpack.c.h.b16 %v1961
    %v2020 = vunpack.c.l.b16 %v1962
    %v2021 = vunpack.c.h.b16 %v1962
    %v2022 = vunpack.c.l.b16 %v1963
    %v2023 = vunpack.c.h.b16 %v1963
    %v2024 = vunpack.c.l.b16 %v1964
    %v2025 = vunpack.c.h.b16 %v1964
    %v2026 = vunpack.c.l.b16 %v1965
    %v2027 = vunpack.c.h.b16 %v1965
    %v2028 = vpack.c.b16 %v1998, %v1996
    %v2029 = vpack.c.b16 %v1999, %v1997
    %v2030 = vpack.c.b16 %v2002, %v2000
    %v2031 = vpack.c.b16 %v2003, %v2001
    %v2032 = vpack.c.b16 %v2006, %v2004
    %v2033 = vpack.c.b16 %v2007, %v2005
    %v2034 = vpack.c.b16 %v2010, %v2008
    %v2035 = vpack.c.b16 %v2011, %v2009
    %v2036 = vpack.c.b16 %v2014, %v2012
    %v2037 = vpack.c.b16 %v2015, %v2013
    %v2038 = vpack.c.b16 %v2018, %v2016
    %v2039 = vpack.c.b16 %v2019, %v2017
    %v2040 = vpack.c.b16 %v2022, %v2020
    %v2041 = vpack.c.b16 %v2023, %v2021
    %v2042 = vpack.c.b16 %v2026, %v2024
    %v2043 = vpack.c.b16 %v2027, %v2025
    %2060 = vmatprep.subr.bf16.mxu0 %v2043
    %2061 = vmatpush1.bf16.msra.mxu0 %v2042
    %2062 = vmatprep.subr.bf16.mxu0 %v2041
    %2063 = vmatpush1.bf16.msra.mxu0 %v2040
    %2064 = vmatprep.subr.bf16.mxu0 %v2039
    %2065 = vmatpush1.bf16.msra.mxu0 %v2038
    %2066 = vmatprep.subr.bf16.mxu0 %v2037
    %2067 = vmatpush1.bf16.msra.mxu0 %v2036
    %2068 = vmatprep.subr.bf16.mxu0 %v2035
    %2069 = vmatpush1.bf16.msra.mxu0 %v2034
    %2070 = vmatprep.subr.bf16.mxu0 %v2033
    %2071 = vmatpush1.bf16.msra.mxu0 %v2032
    %2072 = vmatprep.subr.bf16.mxu0 %v2031
    %2073 = vmatpush1.bf16.msra.mxu0 %v2030
    %2074 = vmatprep.subr.bf16.mxu0 %v2029
    %2075 = vmatpush1.bf16.msra.mxu0 %v2028
    %2076 = vmatprep.subr.bf16.mxu0 0
    %2077 = vmatpush2.bf16.msra.mxu0 0
    %2078 = vmatprep.subr.bf16.mxu0 0
    %2079 = vmatpush2.bf16.msra.mxu0 0
    %2080 = vmatprep.subr.bf16.mxu0 0
    %2081 = vmatpush2.bf16.msra.mxu0 0
    %2082 = vmatprep.subr.bf16.mxu0 0
    %2083 = vmatpush2.bf16.msra.mxu0 0
    %2084 = vmatprep.subr.bf16.mxu0 0
    %2085 = vmatpush2.bf16.msra.mxu0 0
    %2086 = vmatprep.subr.bf16.mxu0 0
    %2087 = vmatpush2.bf16.msra.mxu0 0
    %2088 = vmatprep.subr.bf16.mxu0 0
    %2089 = vmatpush2.bf16.msra.mxu0 0
    %2090 = vmatprep.subr.bf16.mxu0 0
    %2091 = vmatpush2.bf16.msra.mxu0 0
    %2092 = vmatprep.mubr.bf16.mxu0 0
    %2093 = vmatmul.mubr.bf16.gmra.mxu0 %v1966
    %v2094 = vpop.f32.mrf.mxu0
    %v2095 = vadd.f32 %v1973, %v2094
    %v2096 = vpop.f32.mrf.mxu0
    %v2097 = vadd.f32 %v1977, %v2096
    %v2098 = vpop.f32.mrf.mxu0
    %v2099 = vpop.f32.mrf.mxu0
    %2100 = vdwg.mxu0
    %vm2101 = vcmp.ge.f32.partialorder %v2095, 0.0
    %vm2102 = vcmp.ge.f32.partialorder %v2097, 0.0
    %v2103 = vmul.f32 %v2095, 0.01
    %v2104 = vmul.f32 %v2097, 0.01
    %v2105 = vsel %vm2101, %v2095, %v2103
    %v2106 = vsel %vm2102, %v2097, %v2104
    %v2107 = vld [vmem:[#allocation2 + $0x300] sm:$0xff]
    %v2108 = vld [vmem:[#allocation2 + $0x308] sm:$0xff]
    %v2109 = vld [vmem:[#allocation2 + $0x310] sm:$0xff]
    %v2110 = vld [vmem:[#allocation2 + $0x318] sm:$0xff]
    %v2111 = vld [vmem:[#allocation2 + $0x320] sm:$0xff]
    %v2112 = vld [vmem:[#allocation2 + $0x328] sm:$0xff]
    %v2113 = vld [vmem:[#allocation2 + $0x330] sm:$0xff]
    %v2114 = vld [vmem:[#allocation2 + $0x338] sm:$0xff]
    %v2115 = vld [vmem:[#allocation2 + $0x340] sm:$0xff]
    %v2116 = vld [vmem:[#allocation2 + $0x348] sm:$0xff]
    %v2117 = vld [vmem:[#allocation2 + $0x350] sm:$0xff]
    %v2118 = vld [vmem:[#allocation2 + $0x358] sm:$0xff]
    %v2119 = vld [vmem:[#allocation2 + $0x360] sm:$0xff]
    %v2120 = vld [vmem:[#allocation2 + $0x368] sm:$0xff]
    %v2121 = vld [vmem:[#allocation2 + $0x370] sm:$0xff]
    %v2122 = vld [vmem:[#allocation2 + $0x378] sm:$0xff]
    %v2123 = vld [vmem:[#allocation2 + $0x380] sm:$0xff]
    %v2124 = vld [vmem:[#allocation2 + $0x388] sm:$0xff]
    %v2125 = vld [vmem:[#allocation2 + $0x390] sm:$0xff]
    %v2126 = vld [vmem:[#allocation2 + $0x398] sm:$0xff]
    %v2127 = vld [vmem:[#allocation2 + $0x3a0] sm:$0xff]
    %v2128 = vld [vmem:[#allocation2 + $0x3a8] sm:$0xff]
    %v2129 = vld [vmem:[#allocation2 + $0x3b0] sm:$0xff]
    %v2130 = vld [vmem:[#allocation2 + $0x3b8] sm:$0xff]
    %v2131 = vld [vmem:[#allocation2 + $0x3c0] sm:$0xff]
    %v2132 = vld [vmem:[#allocation2 + $0x3c8] sm:$0xff]
    %v2133 = vld [vmem:[#allocation2 + $0x3d0] sm:$0xff]
    %v2134 = vld [vmem:[#allocation2 + $0x3d8] sm:$0xff]
    %v2135 = vld [vmem:[#allocation2 + $0x3e0] sm:$0xff]
    %v2136 = vld [vmem:[#allocation2 + $0x3e8] sm:$0xff]
    %v2137 = vld [vmem:[#allocation2 + $0x3f0] sm:$0xff]
    %v2138 = vld [vmem:[#allocation2 + $0x3f8] sm:$0xff]
    %v2139 = vpack.c.bf16 %v2105, %v2105
    %v2140 = vpack.c.bf16 %v2106, %v2106
    %s2141 = scalar_lea.vmem %s11, 6
    %v2142 = vld [vmem:[%s2141] ss:$8 sm:$0x3]
    %v2144 = vlaneseq
    %v2145 = vshrl.u32 %v2144, 7
    %v2146 = vsub.s32 0, %v2145
    %v2147 = vrot.slane %v2142, %v2146
    %v2148 = vlaneseq
    %v2149 = vshrl.u32 %v2148, 7
    %v2150 = vsub.s32 1, %v2149
    %v2151 = vrot.slane %v2142, %v2150
    %v2186 = vunpack.c.l.b16 %v2107
    %v2187 = vunpack.c.h.b16 %v2107
    %v2188 = vunpack.c.l.b16 %v2108
    %v2189 = vunpack.c.h.b16 %v2108
    %v2190 = vunpack.c.l.b16 %v2109
    %v2191 = vunpack.c.h.b16 %v2109
    %v2192 = vunpack.c.l.b16 %v2110
    %v2193 = vunpack.c.h.b16 %v2110
    %v2194 = vunpack.c.l.b16 %v2111
    %v2195 = vunpack.c.h.b16 %v2111
    %v2196 = vunpack.c.l.b16 %v2112
    %v2197 = vunpack.c.h.b16 %v2112
    %v2198 = vunpack.c.l.b16 %v2113
    %v2199 = vunpack.c.h.b16 %v2113
    %v2200 = vunpack.c.l.b16 %v2114
    %v2201 = vunpack.c.h.b16 %v2114
    %v2202 = vunpack.c.l.b16 %v2115
    %v2203 = vunpack.c.h.b16 %v2115
    %v2204 = vunpack.c.l.b16 %v2116
    %v2205 = vunpack.c.h.b16 %v2116
    %v2206 = vunpack.c.l.b16 %v2117
    %v2207 = vunpack.c.h.b16 %v2117
    %v2208 = vunpack.c.l.b16 %v2118
    %v2209 = vunpack.c.h.b16 %v2118
    %v2210 = vunpack.c.l.b16 %v2119
    %v2211 = vunpack.c.h.b16 %v2119
    %v2212 = vunpack.c.l.b16 %v2120
    %v2213 = vunpack.c.h.b16 %v2120
    %v2214 = vunpack.c.l.b16 %v2121
    %v2215 = vunpack.c.h.b16 %v2121
    %v2216 = vunpack.c.l.b16 %v2122
    %v2217 = vunpack.c.h.b16 %v2122
    %v2218 = vunpack.c.l.b16 %v2123
    %v2219 = vunpack.c.h.b16 %v2123
    %v2220 = vunpack.c.l.b16 %v2124
    %v2221 = vunpack.c.h.b16 %v2124
    %v2222 = vunpack.c.l.b16 %v2125
    %v2223 = vunpack.c.h.b16 %v2125
    %v2224 = vunpack.c.l.b16 %v2126
    %v2225 = vunpack.c.h.b16 %v2126
    %v2226 = vunpack.c.l.b16 %v2127
    %v2227 = vunpack.c.h.b16 %v2127
    %v2228 = vunpack.c.l.b16 %v2128
    %v2229 = vunpack.c.h.b16 %v2128
    %v2230 = vunpack.c.l.b16 %v2129
    %v2231 = vunpack.c.h.b16 %v2129
    %v2232 = vunpack.c.l.b16 %v2130
    %v2233 = vunpack.c.h.b16 %v2130
    %v2234 = vunpack.c.l.b16 %v2131
    %v2235 = vunpack.c.h.b16 %v2131
    %v2236 = vunpack.c.l.b16 %v2132
    %v2237 = vunpack.c.h.b16 %v2132
    %v2238 = vunpack.c.l.b16 %v2133
    %v2239 = vunpack.c.h.b16 %v2133
    %v2240 = vunpack.c.l.b16 %v2134
    %v2241 = vunpack.c.h.b16 %v2134
    %v2242 = vunpack.c.l.b16 %v2135
    %v2243 = vunpack.c.h.b16 %v2135
    %v2244 = vunpack.c.l.b16 %v2136
    %v2245 = vunpack.c.h.b16 %v2136
    %v2246 = vunpack.c.l.b16 %v2137
    %v2247 = vunpack.c.h.b16 %v2137
    %v2248 = vunpack.c.l.b16 %v2138
    %v2249 = vunpack.c.h.b16 %v2138
    %v2250 = vpack.c.b16 %v2188, %v2186
    %v2251 = vpack.c.b16 %v2189, %v2187
    %v2252 = vpack.c.b16 %v2192, %v2190
    %v2253 = vpack.c.b16 %v2193, %v2191
    %v2254 = vpack.c.b16 %v2196, %v2194
    %v2255 = vpack.c.b16 %v2197, %v2195
    %v2256 = vpack.c.b16 %v2200, %v2198
    %v2257 = vpack.c.b16 %v2201, %v2199
    %v2258 = vpack.c.b16 %v2204, %v2202
    %v2259 = vpack.c.b16 %v2205, %v2203
    %v2260 = vpack.c.b16 %v2208, %v2206
    %v2261 = vpack.c.b16 %v2209, %v2207
    %v2262 = vpack.c.b16 %v2212, %v2210
    %v2263 = vpack.c.b16 %v2213, %v2211
    %v2264 = vpack.c.b16 %v2216, %v2214
    %v2265 = vpack.c.b16 %v2217, %v2215
    %v2266 = vpack.c.b16 %v2220, %v2218
    %v2267 = vpack.c.b16 %v2221, %v2219
    %v2268 = vpack.c.b16 %v2224, %v2222
    %v2269 = vpack.c.b16 %v2225, %v2223
    %v2270 = vpack.c.b16 %v2228, %v2226
    %v2271 = vpack.c.b16 %v2229, %v2227
    %v2272 = vpack.c.b16 %v2232, %v2230
    %v2273 = vpack.c.b16 %v2233, %v2231
    %v2274 = vpack.c.b16 %v2236, %v2234
    %v2275 = vpack.c.b16 %v2237, %v2235
    %v2276 = vpack.c.b16 %v2240, %v2238
    %v2277 = vpack.c.b16 %v2241, %v2239
    %v2278 = vpack.c.b16 %v2244, %v2242
    %v2279 = vpack.c.b16 %v2245, %v2243
    %v2280 = vpack.c.b16 %v2248, %v2246
    %v2281 = vpack.c.b16 %v2249, %v2247
    %2314 = vmatprep.subr.bf16.mxu0 %v2265
    %2315 = vmatpush1.bf16.msra.mxu0 %v2264
    %2316 = vmatprep.subr.bf16.mxu0 %v2263
    %2317 = vmatpush1.bf16.msra.mxu0 %v2262
    %2318 = vmatprep.subr.bf16.mxu0 %v2261
    %2319 = vmatpush1.bf16.msra.mxu0 %v2260
    %2320 = vmatprep.subr.bf16.mxu0 %v2259
    %2321 = vmatpush1.bf16.msra.mxu0 %v2258
    %2322 = vmatprep.subr.bf16.mxu0 %v2257
    %2323 = vmatpush1.bf16.msra.mxu0 %v2256
    %2324 = vmatprep.subr.bf16.mxu0 %v2255
    %2325 = vmatpush1.bf16.msra.mxu0 %v2254
    %2326 = vmatprep.subr.bf16.mxu0 %v2253
    %2327 = vmatpush1.bf16.msra.mxu0 %v2252
    %2328 = vmatprep.subr.bf16.mxu0 %v2251
    %2329 = vmatpush1.bf16.msra.mxu0 %v2250
    %2330 = vmatprep.subr.bf16.mxu0 %v2281
    %2331 = vmatpush2.bf16.msra.mxu0 %v2280
    %2332 = vmatprep.subr.bf16.mxu0 %v2279
    %2333 = vmatpush2.bf16.msra.mxu0 %v2278
    %2334 = vmatprep.subr.bf16.mxu0 %v2277
    %2335 = vmatpush2.bf16.msra.mxu0 %v2276
    %2336 = vmatprep.subr.bf16.mxu0 %v2275
    %2337 = vmatpush2.bf16.msra.mxu0 %v2274
    %2338 = vmatprep.subr.bf16.mxu0 %v2273
    %2339 = vmatpush2.bf16.msra.mxu0 %v2272
    %2340 = vmatprep.subr.bf16.mxu0 %v2271
    %2341 = vmatpush2.bf16.msra.mxu0 %v2270
    %2342 = vmatprep.subr.bf16.mxu0 %v2269
    %2343 = vmatpush2.bf16.msra.mxu0 %v2268
    %2344 = vmatprep.subr.bf16.mxu0 %v2267
    %2345 = vmatpush2.bf16.msra.mxu0 %v2266
    %2346 = vmatprep.mubr.bf16.mxu0 %v2140
    %2347 = vmatmul.mubr.bf16.gmra.mxu0 %v2139
    %v2348 = vpop.f32.mrf.mxu0
    %v2349 = vadd.f32 %v2147, %v2348
    %v2350 = vpop.f32.mrf.mxu0
    %v2351 = vadd.f32 %v2151, %v2350
    %v2352 = vpop.f32.mrf.mxu0
    %v2353 = vpop.f32.mrf.mxu0
    %2354 = vdwg.mxu0
    %vm2355 = vcmp.ge.f32.partialorder %v2349, 0.0
    %vm2356 = vcmp.ge.f32.partialorder %v2351, 0.0
    %v2357 = vmul.f32 %v2349, 0.01
    %v2358 = vmul.f32 %v2351, 0.01
    %v2359 = vsel %vm2355, %v2349, %v2357
    %v2360 = vsel %vm2356, %v2351, %v2358
    %v2361 = vld [vmem:[%s8 + $0x80] sm:$0xf]
    %v2362 = vld [vmem:[%s8 + $0x84] sm:$0xf]
    %v2363 = vld [vmem:[%s8 + $0x88] sm:$0xf]
    %v2364 = vld [vmem:[%s8 + $0x8c] sm:$0xf]
    %v2365 = vld [vmem:[%s8 + $0x90] sm:$0xf]
    %v2366 = vld [vmem:[%s8 + $0x94] sm:$0xf]
    %v2367 = vld [vmem:[%s8 + $0x98] sm:$0xf]
    %v2368 = vld [vmem:[%s8 + $0x9c] sm:$0xf]
    %v2369 = vld [vmem:[%s8 + $0xa0] sm:$0xf]
    %v2370 = vld [vmem:[%s8 + $0xa4] sm:$0xf]
    %v2371 = vld [vmem:[%s8 + $0xa8] sm:$0xf]
    %v2372 = vld [vmem:[%s8 + $0xac] sm:$0xf]
    %v2373 = vld [vmem:[%s8 + $0xb0] sm:$0xf]
    %v2374 = vld [vmem:[%s8 + $0xb4] sm:$0xf]
    %v2375 = vld [vmem:[%s8 + $0xb8] sm:$0xf]
    %v2376 = vld [vmem:[%s8 + $0xbc] sm:$0xf]
    %v2377 = vld [vmem:[%s8 + $0xc0] sm:$0xf]
    %v2378 = vld [vmem:[%s8 + $0xc4] sm:$0xf]
    %v2379 = vld [vmem:[%s8 + $0xc8] sm:$0xf]
    %v2380 = vld [vmem:[%s8 + $0xcc] sm:$0xf]
    %v2381 = vld [vmem:[%s8 + $0xd0] sm:$0xf]
    %v2382 = vld [vmem:[%s8 + $0xd4] sm:$0xf]
    %v2383 = vld [vmem:[%s8 + $0xd8] sm:$0xf]
    %v2384 = vld [vmem:[%s8 + $0xdc] sm:$0xf]
    %v2385 = vld [vmem:[%s8 + $0xe0] sm:$0xf]
    %v2386 = vld [vmem:[%s8 + $0xe4] sm:$0xf]
    %v2387 = vld [vmem:[%s8 + $0xe8] sm:$0xf]
    %v2388 = vld [vmem:[%s8 + $0xec] sm:$0xf]
    %v2389 = vld [vmem:[%s8 + $0xf0] sm:$0xf]
    %v2390 = vld [vmem:[%s8 + $0xf4] sm:$0xf]
    %v2391 = vld [vmem:[%s8 + $0xf8] sm:$0xf]
    %v2392 = vld [vmem:[%s8 + $0xfc] sm:$0xf]
    %v2393 = vpack.c.bf16 %v2359, %v2359
    %v2394 = vpack.c.bf16 %v2360, %v2360
    %v2395 = vld [vmem:[%s11 + $0x1b] ss:$0 sm:$0xff]
    %v2428 = vunpack.c.l.b16 %v2361
    %v2429 = vunpack.c.l.b16 %v2362
    %v2430 = vunpack.c.l.b16 %v2363
    %v2431 = vunpack.c.l.b16 %v2364
    %v2432 = vunpack.c.l.b16 %v2365
    %v2433 = vunpack.c.l.b16 %v2366
    %v2434 = vunpack.c.l.b16 %v2367
    %v2435 = vunpack.c.l.b16 %v2368
    %v2436 = vunpack.c.l.b16 %v2369
    %v2437 = vunpack.c.l.b16 %v2370
    %v2438 = vunpack.c.l.b16 %v2371
    %v2439 = vunpack.c.l.b16 %v2372
    %v2440 = vunpack.c.l.b16 %v2373
    %v2441 = vunpack.c.l.b16 %v2374
    %v2442 = vunpack.c.l.b16 %v2375
    %v2443 = vunpack.c.l.b16 %v2376
    %v2444 = vunpack.c.l.b16 %v2377
    %v2445 = vunpack.c.l.b16 %v2378
    %v2446 = vunpack.c.l.b16 %v2379
    %v2447 = vunpack.c.l.b16 %v2380
    %v2448 = vunpack.c.l.b16 %v2381
    %v2449 = vunpack.c.l.b16 %v2382
    %v2450 = vunpack.c.l.b16 %v2383
    %v2451 = vunpack.c.l.b16 %v2384
    %v2452 = vunpack.c.l.b16 %v2385
    %v2453 = vunpack.c.l.b16 %v2386
    %v2454 = vunpack.c.l.b16 %v2387
    %v2455 = vunpack.c.l.b16 %v2388
    %v2456 = vunpack.c.l.b16 %v2389
    %v2457 = vunpack.c.l.b16 %v2390
    %v2458 = vunpack.c.l.b16 %v2391
    %v2459 = vunpack.c.l.b16 %v2392
    %v2460 = vpack.c.b16 %v2429, %v2428
    %v2461 = vpack.c.b16 %v2431, %v2430
    %v2462 = vpack.c.b16 %v2433, %v2432
    %v2463 = vpack.c.b16 %v2435, %v2434
    %v2464 = vpack.c.b16 %v2437, %v2436
    %v2465 = vpack.c.b16 %v2439, %v2438
    %v2466 = vpack.c.b16 %v2441, %v2440
    %v2467 = vpack.c.b16 %v2443, %v2442
    %v2468 = vpack.c.b16 %v2445, %v2444
    %v2469 = vpack.c.b16 %v2447, %v2446
    %v2470 = vpack.c.b16 %v2449, %v2448
    %v2471 = vpack.c.b16 %v2451, %v2450
    %v2472 = vpack.c.b16 %v2453, %v2452
    %v2473 = vpack.c.b16 %v2455, %v2454
    %v2474 = vpack.c.b16 %v2457, %v2456
    %v2475 = vpack.c.b16 %v2459, %v2458
    %2492 = vmatprep.subr.bf16.mxu0 0
    %2493 = vmatpush1.bf16.msra.mxu0 %v2467
    %2494 = vmatprep.subr.bf16.mxu0 0
    %2495 = vmatpush1.bf16.msra.mxu0 %v2466
    %2496 = vmatprep.subr.bf16.mxu0 0
    %2497 = vmatpush1.bf16.msra.mxu0 %v2465
    %2498 = vmatprep.subr.bf16.mxu0 0
    %2499 = vmatpush1.bf16.msra.mxu0 %v2464
    %2500 = vmatprep.subr.bf16.mxu0 0
    %2501 = vmatpush1.bf16.msra.mxu0 %v2463
    %2502 = vmatprep.subr.bf16.mxu0 0
    %2503 = vmatpush1.bf16.msra.mxu0 %v2462
    %2504 = vmatprep.subr.bf16.mxu0 0
    %2505 = vmatpush1.bf16.msra.mxu0 %v2461
    %2506 = vmatprep.subr.bf16.mxu0 0
    %2507 = vmatpush1.bf16.msra.mxu0 %v2460
    %2508 = vmatprep.subr.bf16.mxu0 0
    %2509 = vmatpush2.bf16.msra.mxu0 %v2475
    %2510 = vmatprep.subr.bf16.mxu0 0
    %2511 = vmatpush2.bf16.msra.mxu0 %v2474
    %2512 = vmatprep.subr.bf16.mxu0 0
    %2513 = vmatpush2.bf16.msra.mxu0 %v2473
    %2514 = vmatprep.subr.bf16.mxu0 0
    %2515 = vmatpush2.bf16.msra.mxu0 %v2472
    %2516 = vmatprep.subr.bf16.mxu0 0
    %2517 = vmatpush2.bf16.msra.mxu0 %v2471
    %2518 = vmatprep.subr.bf16.mxu0 0
    %2519 = vmatpush2.bf16.msra.mxu0 %v2470
    %2520 = vmatprep.subr.bf16.mxu0 0
    %2521 = vmatpush2.bf16.msra.mxu0 %v2469
    %2522 = vmatprep.subr.bf16.mxu0 0
    %2523 = vmatpush2.bf16.msra.mxu0 %v2468
    %2524 = vmatprep.mubr.bf16.mxu0 %v2394
    %2525 = vmatmul.mubr.bf16.gmra.mxu0 %v2393
    %v2526 = vpop.f32.mrf.mxu0
    %v2527 = vadd.f32 %v2395, %v2526
    %v2528 = vpop.f32.mrf.mxu0
    %v2529 = vpop.f32.mrf.mxu0
    %v2530 = vpop.f32.mrf.mxu0
    %2531 = vdwg.mxu0
    %v2532 = vld [vmem:[%s8 + $0x100] sm:$0xf]
    %v2533 = vld [vmem:[%s8 + $0x104] sm:$0xf]
    %v2534 = vld [vmem:[%s8 + $0x108] sm:$0xf]
    %v2535 = vld [vmem:[%s8 + $0x10c] sm:$0xf]
    %v2536 = vld [vmem:[%s8 + $0x110] sm:$0xf]
    %v2537 = vld [vmem:[%s8 + $0x114] sm:$0xf]
    %v2538 = vld [vmem:[%s8 + $0x118] sm:$0xf]
    %v2539 = vld [vmem:[%s8 + $0x11c] sm:$0xf]
    %v2540 = vld [vmem:[%s8 + $0x120] sm:$0xf]
    %v2541 = vld [vmem:[%s8 + $0x124] sm:$0xf]
    %v2542 = vld [vmem:[%s8 + $0x128] sm:$0xf]
    %v2543 = vld [vmem:[%s8 + $0x12c] sm:$0xf]
    %v2544 = vld [vmem:[%s8 + $0x130] sm:$0xf]
    %v2545 = vld [vmem:[%s8 + $0x134] sm:$0xf]
    %v2546 = vld [vmem:[%s8 + $0x138] sm:$0xf]
    %v2547 = vld [vmem:[%s8 + $0x13c] sm:$0xf]
    %v2548 = vpack.c.bf16 %v2527, %v2527
    %v2549 = vld [vmem:[%s11 + $0x1c] ss:$0 sm:$0xff]
    %v2566 = vunpack.c.l.b16 %v2532
    %v2567 = vunpack.c.l.b16 %v2533
    %v2568 = vunpack.c.l.b16 %v2534
    %v2569 = vunpack.c.l.b16 %v2535
    %v2570 = vunpack.c.l.b16 %v2536
    %v2571 = vunpack.c.l.b16 %v2537
    %v2572 = vunpack.c.l.b16 %v2538
    %v2573 = vunpack.c.l.b16 %v2539
    %v2574 = vunpack.c.l.b16 %v2540
    %v2575 = vunpack.c.l.b16 %v2541
    %v2576 = vunpack.c.l.b16 %v2542
    %v2577 = vunpack.c.l.b16 %v2543
    %v2578 = vunpack.c.l.b16 %v2544
    %v2579 = vunpack.c.l.b16 %v2545
    %v2580 = vunpack.c.l.b16 %v2546
    %v2581 = vunpack.c.l.b16 %v2547
    %v2582 = vpack.c.b16 %v2567, %v2566
    %v2583 = vpack.c.b16 %v2569, %v2568
    %v2584 = vpack.c.b16 %v2571, %v2570
    %v2585 = vpack.c.b16 %v2573, %v2572
    %v2586 = vpack.c.b16 %v2575, %v2574
    %v2587 = vpack.c.b16 %v2577, %v2576
    %v2588 = vpack.c.b16 %v2579, %v2578
    %v2589 = vpack.c.b16 %v2581, %v2580
    %2598 = vmatprep.subr.bf16.mxu0 0
    %2599 = vmatpush1.bf16.msra.mxu0 %v2589
    %2600 = vmatprep.subr.bf16.mxu0 0
    %2601 = vmatpush1.bf16.msra.mxu0 %v2588
    %2602 = vmatprep.subr.bf16.mxu0 0
    %2603 = vmatpush1.bf16.msra.mxu0 %v2587
    %2604 = vmatprep.subr.bf16.mxu0 0
    %2605 = vmatpush1.bf16.msra.mxu0 %v2586
    %2606 = vmatprep.subr.bf16.mxu0 0
    %2607 = vmatpush1.bf16.msra.mxu0 %v2585
    %2608 = vmatprep.subr.bf16.mxu0 0
    %2609 = vmatpush1.bf16.msra.mxu0 %v2584
    %2610 = vmatprep.subr.bf16.mxu0 0
    %2611 = vmatpush1.bf16.msra.mxu0 %v2583
    %2612 = vmatprep.subr.bf16.mxu0 0
    %2613 = vmatpush1.bf16.msra.mxu0 %v2582
    %2614 = vmatprep.subr.bf16.mxu0 0
    %2615 = vmatpush2.bf16.msra.mxu0 0
    %2616 = vmatprep.subr.bf16.mxu0 0
    %2617 = vmatpush2.bf16.msra.mxu0 0
    %2618 = vmatprep.subr.bf16.mxu0 0
    %2619 = vmatpush2.bf16.msra.mxu0 0
    %2620 = vmatprep.subr.bf16.mxu0 0
    %2621 = vmatpush2.bf16.msra.mxu0 0
    %2622 = vmatprep.subr.bf16.mxu0 0
    %2623 = vmatpush2.bf16.msra.mxu0 0
    %2624 = vmatprep.subr.bf16.mxu0 0
    %2625 = vmatpush2.bf16.msra.mxu0 0
    %2626 = vmatprep.subr.bf16.mxu0 0
    %2627 = vmatpush2.bf16.msra.mxu0 0
    %2628 = vmatprep.subr.bf16.mxu0 0
    %2629 = vmatpush2.bf16.msra.mxu0 0
    %2630 = vmatprep.mubr.bf16.mxu0 0
    %2631 = vmatmul.mubr.bf16.gmra.mxu0 %v2548
    %v2632 = vpop.f32.mrf.mxu0
    %v2633 = vadd.f32 %v2549, %v2632
    %v2634 = vpop.f32.mrf.mxu0
    %v2635 = vpop.f32.mrf.mxu0
    %v2636 = vpop.f32.mrf.mxu0
    %2637 = vdwg.mxu0
    %v2638 = vsub.f32 %v2527, %v2633
    %v2639 = vld [vmem:[%s8 + $0x140] sm:$0xf]
    %v2640 = vld [vmem:[%s8 + $0x144] sm:$0xf]
    %v2641 = vld [vmem:[%s8 + $0x148] sm:$0xf]
    %v2642 = vld [vmem:[%s8 + $0x14c] sm:$0xf]
    %v2643 = vld [vmem:[%s8 + $0x150] sm:$0xf]
    %v2644 = vld [vmem:[%s8 + $0x154] sm:$0xf]
    %v2645 = vld [vmem:[%s8 + $0x158] sm:$0xf]
    %v2646 = vld [vmem:[%s8 + $0x15c] sm:$0xf]
    %v2647 = vld [vmem:[%s8 + $0x160] sm:$0xf]
    %v2648 = vld [vmem:[%s8 + $0x164] sm:$0xf]
    %v2649 = vld [vmem:[%s8 + $0x168] sm:$0xf]
    %v2650 = vld [vmem:[%s8 + $0x16c] sm:$0xf]
    %v2651 = vld [vmem:[%s8 + $0x170] sm:$0xf]
    %v2652 = vld [vmem:[%s8 + $0x174] sm:$0xf]
    %v2653 = vld [vmem:[%s8 + $0x178] sm:$0xf]
    %v2654 = vld [vmem:[%s8 + $0x17c] sm:$0xf]
    %v2655 = vpack.c.bf16 %v2633, %v2633
    %v2656 = vld [vmem:[%s11 + $0x1d] ss:$0 sm:$0xff]
    %v2673 = vunpack.c.l.b16 %v2639
    %v2674 = vunpack.c.l.b16 %v2640
    %v2675 = vunpack.c.l.b16 %v2641
    %v2676 = vunpack.c.l.b16 %v2642
    %v2677 = vunpack.c.l.b16 %v2643
    %v2678 = vunpack.c.l.b16 %v2644
    %v2679 = vunpack.c.l.b16 %v2645
    %v2680 = vunpack.c.l.b16 %v2646
    %v2681 = vunpack.c.l.b16 %v2647
    %v2682 = vunpack.c.l.b16 %v2648
    %v2683 = vunpack.c.l.b16 %v2649
    %v2684 = vunpack.c.l.b16 %v2650
    %v2685 = vunpack.c.l.b16 %v2651
    %v2686 = vunpack.c.l.b16 %v2652
    %v2687 = vunpack.c.l.b16 %v2653
    %v2688 = vunpack.c.l.b16 %v2654
    %v2689 = vpack.c.b16 %v2674, %v2673
    %v2690 = vpack.c.b16 %v2676, %v2675
    %v2691 = vpack.c.b16 %v2678, %v2677
    %v2692 = vpack.c.b16 %v2680, %v2679
    %v2693 = vpack.c.b16 %v2682, %v2681
    %v2694 = vpack.c.b16 %v2684, %v2683
    %v2695 = vpack.c.b16 %v2686, %v2685
    %v2696 = vpack.c.b16 %v2688, %v2687
    %2705 = vmatprep.subr.bf16.mxu0 0
    %2706 = vmatpush1.bf16.msra.mxu0 %v2696
    %2707 = vmatprep.subr.bf16.mxu0 0
    %2708 = vmatpush1.bf16.msra.mxu0 %v2695
    %2709 = vmatprep.subr.bf16.mxu0 0
    %2710 = vmatpush1.bf16.msra.mxu0 %v2694
    %2711 = vmatprep.subr.bf16.mxu0 0
    %2712 = vmatpush1.bf16.msra.mxu0 %v2693
    %2713 = vmatprep.subr.bf16.mxu0 0
    %2714 = vmatpush1.bf16.msra.mxu0 %v2692
    %2715 = vmatprep.subr.bf16.mxu0 0
    %2716 = vmatpush1.bf16.msra.mxu0 %v2691
    %2717 = vmatprep.subr.bf16.mxu0 0
    %2718 = vmatpush1.bf16.msra.mxu0 %v2690
    %2719 = vmatprep.subr.bf16.mxu0 0
    %2720 = vmatpush1.bf16.msra.mxu0 %v2689
    %2721 = vmatprep.subr.bf16.mxu0 0
    %2722 = vmatpush2.bf16.msra.mxu0 0
    %2723 = vmatprep.subr.bf16.mxu0 0
    %2724 = vmatpush2.bf16.msra.mxu0 0
    %2725 = vmatprep.subr.bf16.mxu0 0
    %2726 = vmatpush2.bf16.msra.mxu0 0
    %2727 = vmatprep.subr.bf16.mxu0 0
    %2728 = vmatpush2.bf16.msra.mxu0 0
    %2729 = vmatprep.subr.bf16.mxu0 0
    %2730 = vmatpush2.bf16.msra.mxu0 0
    %2731 = vmatprep.subr.bf16.mxu0 0
    %2732 = vmatpush2.bf16.msra.mxu0 0
    %2733 = vmatprep.subr.bf16.mxu0 0
    %2734 = vmatpush2.bf16.msra.mxu0 0
    %2735 = vmatprep.subr.bf16.mxu0 0
    %2736 = vmatpush2.bf16.msra.mxu0 0
    %2737 = vmatprep.mubr.bf16.mxu0 0
    %2738 = vmatmul.mubr.bf16.gmra.mxu0 %v2655
    %v2739 = vpop.f32.mrf.mxu0
    %v2740 = vadd.f32 %v2656, %v2739
    %v2741 = vpop.f32.mrf.mxu0
    %v2742 = vpop.f32.mrf.mxu0
    %v2743 = vpop.f32.mrf.mxu0
    %2744 = vdwg.mxu0
    %2745 = vst [vmem:[%s13] sm:$0xff] %v2740
    %v2746 = vld [vmem:[%s6] sm:$0xff]
    %v2747 = vld [vmem:[%s6 + $0x8] sm:$0xff]
    %v2748 = vld [vmem:[%s6 + $0x10] sm:$0xff]
    %vm2749 = vcmask 64512
    %v2751 = vsel %vm2749, %v2746, 0
    %v2754 = vsel %vm2749, %v2747, 0
    %v2757 = vsel %vm2749, %v2748, 0
    %2759 = vmatprep.subr.mxu0 0.0
    %2760 = vmatpush1.msra.mxu0 0.0
    %2761 = vmatprep.subr.mxu0 0.0
    %2762 = vmatpush1.msra.mxu0 0.0
    %2763 = vmatprep.subr.mxu0 0.0
    %2764 = vmatpush1.msra.mxu0 0.0
    %2765 = vmatprep.subr.mxu0 0.0
    %2766 = vmatpush1.msra.mxu0 0.0
    %2767 = vmatprep.subr.mxu0 0.0
    %2768 = vmatpush1.msra.mxu0 0.0
    %2769 = vmatprep.subr.mxu0 0.0
    %2770 = vmatpush1.msra.mxu0 0.0
    %2771 = vmatprep.subr.mxu0 0.0
    %2772 = vmatpush1.msra.mxu0 0.0
    %2773 = vmatprep.subr.mxu0 0.0
    %2774 = vmatpush1.msra.mxu0 0.0
    %2775 = vmatprep.subr.mxu0 0.0
    %2776 = vmatpush1.msra.mxu0 0.0
    %2777 = vmatprep.subr.mxu0 0.0
    %2778 = vmatpush1.msra.mxu0 0.0
    %2779 = vmatprep.subr.mxu0 0.0
    %2780 = vmatpush1.msra.mxu0 0.0
    %2781 = vmatprep.subr.mxu0 0.0
    %2782 = vmatpush1.msra.mxu0 0.0
    %2783 = vmatprep.subr.mxu0 0.0
    %2784 = vmatpush1.msra.mxu0 0.0
    %2785 = vmatprep.subr.mxu0 0.0
    %2786 = vmatpush1.msra.mxu0 0.0
    %2787 = vmatprep.subr.mxu0 0.0
    %2788 = vmatpush1.msra.mxu0 0.0
    %2789 = vmatprep.subr.mxu0 0.0
    %2790 = vmatpush1.msra.mxu0 %v2638
    %2791 = vmatprep.subr.mxu0 0.0
    %2792 = vmatpush2.msra.mxu0 0.0
    %2793 = vmatprep.subr.mxu0 0.0
    %2794 = vmatpush2.msra.mxu0 0.0
    %2795 = vmatprep.subr.mxu0 0.0
    %2796 = vmatpush2.msra.mxu0 0.0
    %2797 = vmatprep.subr.mxu0 0.0
    %2798 = vmatpush2.msra.mxu0 0.0
    %2799 = vmatprep.subr.mxu0 0.0
    %2800 = vmatpush2.msra.mxu0 0.0
    %2801 = vmatprep.subr.mxu0 0.0
    %2802 = vmatpush2.msra.mxu0 0.0
    %2803 = vmatprep.subr.mxu0 0.0
    %2804 = vmatpush2.msra.mxu0 0.0
    %2805 = vmatprep.subr.mxu0 0.0
    %2806 = vmatpush2.msra.mxu0 0.0
    %2807 = vmatprep.subr.mxu0 0.0
    %2808 = vmatpush2.msra.mxu0 0.0
    %2809 = vmatprep.subr.mxu0 0.0
    %2810 = vmatpush2.msra.mxu0 0.0
    %2811 = vmatprep.subr.mxu0 0.0
    %2812 = vmatpush2.msra.mxu0 0.0
    %2813 = vmatprep.subr.mxu0 0.0
    %2814 = vmatpush2.msra.mxu0 0.0
    %2815 = vmatprep.subr.mxu0 0.0
    %2816 = vmatpush2.msra.mxu0 0.0
    %2817 = vmatprep.subr.mxu0 0.0
    %2818 = vmatpush2.msra.mxu0 0.0
    %2819 = vmatprep.subr.mxu0 0.0
    %2820 = vmatpush2.msra.mxu0 0.0
    %2821 = vmatprep.subr.mxu0 0.0
    %2822 = vmatpush2.msra.mxu0 0.0
    %2823 = vmatprep.mubr.f32.mxu0 0.0
    %2824 = vmatmul.mubr.f32.gmra.mxu0 %v2751
    %v2825 = vpop.f32.mrf.mxu0
    %v2826 = vadd.f32 0.0, %v2825
    %v2827 = vpop.f32.mrf.mxu0
    %2828 = vmatprep.mubr.f32.mxu0 0.0
    %2829 = vmatmul.mubr.f32.gmra.mxu0 %v2754
    %v2830 = vpop.f32.mrf.mxu0
    %v2831 = vadd.f32 0.0, %v2830
    %v2832 = vpop.f32.mrf.mxu0
    %2833 = vmatprep.mubr.f32.mxu0 0.0
    %2834 = vmatmul.mubr.f32.gmra.mxu0 %v2757
    %v2835 = vpop.f32.mrf.mxu0
    %v2836 = vadd.f32 0.0, %v2835
    %v2837 = vpop.f32.mrf.mxu0
    %2838 = vdwg.mxu0
    %v2839 = vld [vmem:[%s8 + $0x200] sm:$0xf]
    %v2840 = vld [vmem:[%s8 + $0x204] sm:$0xf]
    %v2841 = vld [vmem:[%s8 + $0x208] sm:$0xf]
    %v2842 = vld [vmem:[%s8 + $0x20c] sm:$0xf]
    %v2843 = vld [vmem:[%s8 + $0x210] sm:$0xf]
    %v2844 = vld [vmem:[%s8 + $0x214] sm:$0xf]
    %v2845 = vld [vmem:[%s8 + $0x218] sm:$0xf]
    %v2846 = vld [vmem:[%s8 + $0x21c] sm:$0xf]
    %v2847 = vld [vmem:[%s8 + $0x220] sm:$0xf]
    %v2848 = vld [vmem:[%s8 + $0x224] sm:$0xf]
    %v2849 = vld [vmem:[%s8 + $0x228] sm:$0xf]
    %v2850 = vld [vmem:[%s8 + $0x22c] sm:$0xf]
    %v2851 = vld [vmem:[%s8 + $0x230] sm:$0xf]
    %v2852 = vld [vmem:[%s8 + $0x234] sm:$0xf]
    %v2853 = vld [vmem:[%s8 + $0x238] sm:$0xf]
    %v2854 = vld [vmem:[%s8 + $0x23c] sm:$0xf]
    %v2855 = vld [vmem:[%s8 + $0x240] sm:$0xf]
    %v2856 = vld [vmem:[%s8 + $0x244] sm:$0xf]
    %v2857 = vld [vmem:[%s8 + $0x248] sm:$0xf]
    %v2858 = vld [vmem:[%s8 + $0x24c] sm:$0xf]
    %v2859 = vld [vmem:[%s8 + $0x250] sm:$0xf]
    %v2860 = vld [vmem:[%s8 + $0x254] sm:$0xf]
    %v2861 = vld [vmem:[%s8 + $0x258] sm:$0xf]
    %v2862 = vld [vmem:[%s8 + $0x25c] sm:$0xf]
    %v2863 = vld [vmem:[%s8 + $0x260] sm:$0xf]
    %v2864 = vld [vmem:[%s8 + $0x264] sm:$0xf]
    %v2865 = vld [vmem:[%s8 + $0x268] sm:$0xf]
    %v2866 = vld [vmem:[%s8 + $0x26c] sm:$0xf]
    %v2867 = vld [vmem:[%s8 + $0x270] sm:$0xf]
    %v2868 = vld [vmem:[%s8 + $0x274] sm:$0xf]
    %v2869 = vld [vmem:[%s8 + $0x278] sm:$0xf]
    %v2870 = vld [vmem:[%s8 + $0x27c] sm:$0xf]
    %v2871 = vpack.c.bf16 %v2826, %v2826
    %v2872 = vpack.c.bf16 %v2831, %v2831
    %v2873 = vld [vmem:[%s11 + $0x1f] ss:$0 sm:$0xff]
    %v2906 = vunpack.c.l.b16 %v2839
    %v2907 = vunpack.c.l.b16 %v2840
    %v2908 = vunpack.c.l.b16 %v2841
    %v2909 = vunpack.c.l.b16 %v2842
    %v2910 = vunpack.c.l.b16 %v2843
    %v2911 = vunpack.c.l.b16 %v2844
    %v2912 = vunpack.c.l.b16 %v2845
    %v2913 = vunpack.c.l.b16 %v2846
    %v2914 = vunpack.c.l.b16 %v2847
    %v2915 = vunpack.c.l.b16 %v2848
    %v2916 = vunpack.c.l.b16 %v2849
    %v2917 = vunpack.c.l.b16 %v2850
    %v2918 = vunpack.c.l.b16 %v2851
    %v2919 = vunpack.c.l.b16 %v2852
    %v2920 = vunpack.c.l.b16 %v2853
    %v2921 = vunpack.c.l.b16 %v2854
    %v2922 = vunpack.c.l.b16 %v2855
    %v2923 = vunpack.c.l.b16 %v2856
    %v2924 = vunpack.c.l.b16 %v2857
    %v2925 = vunpack.c.l.b16 %v2858
    %v2926 = vunpack.c.l.b16 %v2859
    %v2927 = vunpack.c.l.b16 %v2860
    %v2928 = vunpack.c.l.b16 %v2861
    %v2929 = vunpack.c.l.b16 %v2862
    %v2930 = vunpack.c.l.b16 %v2863
    %v2931 = vunpack.c.l.b16 %v2864
    %v2932 = vunpack.c.l.b16 %v2865
    %v2933 = vunpack.c.l.b16 %v2866
    %v2934 = vunpack.c.l.b16 %v2867
    %v2935 = vunpack.c.l.b16 %v2868
    %v2936 = vunpack.c.l.b16 %v2869
    %v2937 = vunpack.c.l.b16 %v2870
    %v2938 = vpack.c.b16 %v2907, %v2906
    %v2939 = vpack.c.b16 %v2909, %v2908
    %v2940 = vpack.c.b16 %v2911, %v2910
    %v2941 = vpack.c.b16 %v2913, %v2912
    %v2942 = vpack.c.b16 %v2915, %v2914
    %v2943 = vpack.c.b16 %v2917, %v2916
    %v2944 = vpack.c.b16 %v2919, %v2918
    %v2945 = vpack.c.b16 %v2921, %v2920
    %v2946 = vpack.c.b16 %v2923, %v2922
    %v2947 = vpack.c.b16 %v2925, %v2924
    %v2948 = vpack.c.b16 %v2927, %v2926
    %v2949 = vpack.c.b16 %v2929, %v2928
    %v2950 = vpack.c.b16 %v2931, %v2930
    %v2951 = vpack.c.b16 %v2933, %v2932
    %v2952 = vpack.c.b16 %v2935, %v2934
    %v2953 = vpack.c.b16 %v2937, %v2936
    %2970 = vmatprep.subr.bf16.mxu0 0
    %2971 = vmatpush1.bf16.msra.mxu0 %v2945
    %2972 = vmatprep.subr.bf16.mxu0 0
    %2973 = vmatpush1.bf16.msra.mxu0 %v2944
    %2974 = vmatprep.subr.bf16.mxu0 0
    %2975 = vmatpush1.bf16.msra.mxu0 %v2943
    %2976 = vmatprep.subr.bf16.mxu0 0
    %2977 = vmatpush1.bf16.msra.mxu0 %v2942
    %2978 = vmatprep.subr.bf16.mxu0 0
    %2979 = vmatpush1.bf16.msra.mxu0 %v2941
    %2980 = vmatprep.subr.bf16.mxu0 0
    %2981 = vmatpush1.bf16.msra.mxu0 %v2940
    %2982 = vmatprep.subr.bf16.mxu0 0
    %2983 = vmatpush1.bf16.msra.mxu0 %v2939
    %2984 = vmatprep.subr.bf16.mxu0 0
    %2985 = vmatpush1.bf16.msra.mxu0 %v2938
    %2986 = vmatprep.subr.bf16.mxu0 0
    %2987 = vmatpush2.bf16.msra.mxu0 %v2953
    %2988 = vmatprep.subr.bf16.mxu0 0
    %2989 = vmatpush2.bf16.msra.mxu0 %v2952
    %2990 = vmatprep.subr.bf16.mxu0 0
    %2991 = vmatpush2.bf16.msra.mxu0 %v2951
    %2992 = vmatprep.subr.bf16.mxu0 0
    %2993 = vmatpush2.bf16.msra.mxu0 %v2950
    %2994 = vmatprep.subr.bf16.mxu0 0
    %2995 = vmatpush2.bf16.msra.mxu0 %v2949
    %2996 = vmatprep.subr.bf16.mxu0 0
    %2997 = vmatpush2.bf16.msra.mxu0 %v2948
    %2998 = vmatprep.subr.bf16.mxu0 0
    %2999 = vmatpush2.bf16.msra.mxu0 %v2947
    %3000 = vmatprep.subr.bf16.mxu0 0
    %3001 = vmatpush2.bf16.msra.mxu0 %v2946
    %3002 = vmatprep.mubr.bf16.mxu0 %v2872
    %3003 = vmatmul.mubr.bf16.gmra.mxu0 %v2871
    %v3004 = vpop.f32.mrf.mxu0
    %v3005 = vadd.f32 %v2873, %v3004
    %v3006 = vpop.f32.mrf.mxu0
    %v3007 = vpop.f32.mrf.mxu0
    %v3008 = vpop.f32.mrf.mxu0
    %3009 = vdwg.mxu0
    %vm3010 = vcmp.ge.f32.partialorder %v3005, 0.0
    %v3011 = vmul.f32 %v3005, 0.01
    %v3012 = vsel %vm3010, %v3005, %v3011
    %v3013 = vld [vmem:[%s8 + $0x280] sm:$0xf]
    %v3014 = vld [vmem:[%s8 + $0x284] sm:$0xf]
    %v3015 = vld [vmem:[%s8 + $0x288] sm:$0xf]
    %v3016 = vld [vmem:[%s8 + $0x28c] sm:$0xf]
    %v3017 = vld [vmem:[%s8 + $0x290] sm:$0xf]
    %v3018 = vld [vmem:[%s8 + $0x294] sm:$0xf]
    %v3019 = vld [vmem:[%s8 + $0x298] sm:$0xf]
    %v3020 = vld [vmem:[%s8 + $0x29c] sm:$0xf]
    %v3021 = vld [vmem:[%s8 + $0x2a0] sm:$0xf]
    %v3022 = vld [vmem:[%s8 + $0x2a4] sm:$0xf]
    %v3023 = vld [vmem:[%s8 + $0x2a8] sm:$0xf]
    %v3024 = vld [vmem:[%s8 + $0x2ac] sm:$0xf]
    %v3025 = vld [vmem:[%s8 + $0x2b0] sm:$0xf]
    %v3026 = vld [vmem:[%s8 + $0x2b4] sm:$0xf]
    %v3027 = vld [vmem:[%s8 + $0x2b8] sm:$0xf]
    %v3028 = vld [vmem:[%s8 + $0x2bc] sm:$0xf]
    %v3029 = vpack.c.bf16 %v3012, %v3012
    %v3030 = vld [vmem:[%s11 + $0x30] ss:$0 sm:$0xff]
    %v3047 = vunpack.c.l.b16 %v3013
    %v3048 = vunpack.c.l.b16 %v3014
    %v3049 = vunpack.c.l.b16 %v3015
    %v3050 = vunpack.c.l.b16 %v3016
    %v3051 = vunpack.c.l.b16 %v3017
    %v3052 = vunpack.c.l.b16 %v3018
    %v3053 = vunpack.c.l.b16 %v3019
    %v3054 = vunpack.c.l.b16 %v3020
    %v3055 = vunpack.c.l.b16 %v3021
    %v3056 = vunpack.c.l.b16 %v3022
    %v3057 = vunpack.c.l.b16 %v3023
    %v3058 = vunpack.c.l.b16 %v3024
    %v3059 = vunpack.c.l.b16 %v3025
    %v3060 = vunpack.c.l.b16 %v3026
    %v3061 = vunpack.c.l.b16 %v3027
    %v3062 = vunpack.c.l.b16 %v3028
    %v3063 = vpack.c.b16 %v3048, %v3047
    %v3064 = vpack.c.b16 %v3050, %v3049
    %v3065 = vpack.c.b16 %v3052, %v3051
    %v3066 = vpack.c.b16 %v3054, %v3053
    %v3067 = vpack.c.b16 %v3056, %v3055
    %v3068 = vpack.c.b16 %v3058, %v3057
    %v3069 = vpack.c.b16 %v3060, %v3059
    %v3070 = vpack.c.b16 %v3062, %v3061
    %3079 = vmatprep.subr.bf16.mxu0 0
    %3080 = vmatpush1.bf16.msra.mxu0 %v3070
    %3081 = vmatprep.subr.bf16.mxu0 0
    %3082 = vmatpush1.bf16.msra.mxu0 %v3069
    %3083 = vmatprep.subr.bf16.mxu0 0
    %3084 = vmatpush1.bf16.msra.mxu0 %v3068
    %3085 = vmatprep.subr.bf16.mxu0 0
    %3086 = vmatpush1.bf16.msra.mxu0 %v3067
    %3087 = vmatprep.subr.bf16.mxu0 0
    %3088 = vmatpush1.bf16.msra.mxu0 %v3066
    %3089 = vmatprep.subr.bf16.mxu0 0
    %3090 = vmatpush1.bf16.msra.mxu0 %v3065
    %3091 = vmatprep.subr.bf16.mxu0 0
    %3092 = vmatpush1.bf16.msra.mxu0 %v3064
    %3093 = vmatprep.subr.bf16.mxu0 0
    %3094 = vmatpush1.bf16.msra.mxu0 %v3063
    %3095 = vmatprep.subr.bf16.mxu0 0
    %3096 = vmatpush2.bf16.msra.mxu0 0
    %3097 = vmatprep.subr.bf16.mxu0 0
    %3098 = vmatpush2.bf16.msra.mxu0 0
    %3099 = vmatprep.subr.bf16.mxu0 0
    %3100 = vmatpush2.bf16.msra.mxu0 0
    %3101 = vmatprep.subr.bf16.mxu0 0
    %3102 = vmatpush2.bf16.msra.mxu0 0
    %3103 = vmatprep.subr.bf16.mxu0 0
    %3104 = vmatpush2.bf16.msra.mxu0 0
    %3105 = vmatprep.subr.bf16.mxu0 0
    %3106 = vmatpush2.bf16.msra.mxu0 0
    %3107 = vmatprep.subr.bf16.mxu0 0
    %3108 = vmatpush2.bf16.msra.mxu0 0
    %3109 = vmatprep.subr.bf16.mxu0 0
    %3110 = vmatpush2.bf16.msra.mxu0 0
    %3111 = vmatprep.mubr.bf16.mxu0 0
    %3112 = vmatmul.mubr.bf16.gmra.mxu0 %v3029
    %v3113 = vpop.f32.mrf.mxu0
    %v3114 = vadd.f32 %v3030, %v3113
    %v3115 = vpop.f32.mrf.mxu0
    %v3116 = vpop.f32.mrf.mxu0
    %v3117 = vpop.f32.mrf.mxu0
    %3118 = vdwg.mxu0
    %vm3119 = vcmp.ge.f32.partialorder %v3114, 0.0
    %v3120 = vmul.f32 %v3114, 0.01
    %v3121 = vsel %vm3119, %v3114, %v3120
    %v3122 = vld [vmem:[%s8 + $0x2c0] sm:$0xf]
    %v3123 = vld [vmem:[%s8 + $0x2c4] sm:$0xf]
    %v3124 = vld [vmem:[%s8 + $0x2c8] sm:$0xf]
    %v3125 = vld [vmem:[%s8 + $0x2cc] sm:$0xf]
    %v3126 = vld [vmem:[%s8 + $0x2d0] sm:$0xf]
    %v3127 = vld [vmem:[%s8 + $0x2d4] sm:$0xf]
    %v3128 = vld [vmem:[%s8 + $0x2d8] sm:$0xf]
    %v3129 = vld [vmem:[%s8 + $0x2dc] sm:$0xf]
    %v3130 = vld [vmem:[%s8 + $0x2e0] sm:$0xf]
    %v3131 = vld [vmem:[%s8 + $0x2e4] sm:$0xf]
    %v3132 = vld [vmem:[%s8 + $0x2e8] sm:$0xf]
    %v3133 = vld [vmem:[%s8 + $0x2ec] sm:$0xf]
    %v3134 = vld [vmem:[%s8 + $0x2f0] sm:$0xf]
    %v3135 = vld [vmem:[%s8 + $0x2f4] sm:$0xf]
    %v3136 = vld [vmem:[%s8 + $0x2f8] sm:$0xf]
    %v3137 = vld [vmem:[%s8 + $0x2fc] sm:$0xf]
    %v3138 = vpack.c.bf16 %v3121, %v3121
    %v3139 = vld [vmem:[%s11 + $0x31] ss:$0 sm:$0xff]
    %v3156 = vunpack.c.l.b16 %v3122
    %v3157 = vunpack.c.l.b16 %v3123
    %v3158 = vunpack.c.l.b16 %v3124
    %v3159 = vunpack.c.l.b16 %v3125
    %v3160 = vunpack.c.l.b16 %v3126
    %v3161 = vunpack.c.l.b16 %v3127
    %v3162 = vunpack.c.l.b16 %v3128
    %v3163 = vunpack.c.l.b16 %v3129
    %v3164 = vunpack.c.l.b16 %v3130
    %v3165 = vunpack.c.l.b16 %v3131
    %v3166 = vunpack.c.l.b16 %v3132
    %v3167 = vunpack.c.l.b16 %v3133
    %v3168 = vunpack.c.l.b16 %v3134
    %v3169 = vunpack.c.l.b16 %v3135
    %v3170 = vunpack.c.l.b16 %v3136
    %v3171 = vunpack.c.l.b16 %v3137
    %v3172 = vpack.c.b16 %v3157, %v3156
    %v3173 = vpack.c.b16 %v3159, %v3158
    %v3174 = vpack.c.b16 %v3161, %v3160
    %v3175 = vpack.c.b16 %v3163, %v3162
    %v3176 = vpack.c.b16 %v3165, %v3164
    %v3177 = vpack.c.b16 %v3167, %v3166
    %v3178 = vpack.c.b16 %v3169, %v3168
    %v3179 = vpack.c.b16 %v3171, %v3170
    %3188 = vmatprep.subr.bf16.mxu0 0
    %3189 = vmatpush1.bf16.msra.mxu0 %v3179
    %3190 = vmatprep.subr.bf16.mxu0 0
    %3191 = vmatpush1.bf16.msra.mxu0 %v3178
    %3192 = vmatprep.subr.bf16.mxu0 0
    %3193 = vmatpush1.bf16.msra.mxu0 %v3177
    %3194 = vmatprep.subr.bf16.mxu0 0
    %3195 = vmatpush1.bf16.msra.mxu0 %v3176
    %3196 = vmatprep.subr.bf16.mxu0 0
    %3197 = vmatpush1.bf16.msra.mxu0 %v3175
    %3198 = vmatprep.subr.bf16.mxu0 0
    %3199 = vmatpush1.bf16.msra.mxu0 %v3174
    %3200 = vmatprep.subr.bf16.mxu0 0
    %3201 = vmatpush1.bf16.msra.mxu0 %v3173
    %3202 = vmatprep.subr.bf16.mxu0 0
    %3203 = vmatpush1.bf16.msra.mxu0 %v3172
    %3204 = vmatprep.subr.bf16.mxu0 0
    %3205 = vmatpush2.bf16.msra.mxu0 0
    %3206 = vmatprep.subr.bf16.mxu0 0
    %3207 = vmatpush2.bf16.msra.mxu0 0
    %3208 = vmatprep.subr.bf16.mxu0 0
    %3209 = vmatpush2.bf16.msra.mxu0 0
    %3210 = vmatprep.subr.bf16.mxu0 0
    %3211 = vmatpush2.bf16.msra.mxu0 0
    %3212 = vmatprep.subr.bf16.mxu0 0
    %3213 = vmatpush2.bf16.msra.mxu0 0
    %3214 = vmatprep.subr.bf16.mxu0 0
    %3215 = vmatpush2.bf16.msra.mxu0 0
    %3216 = vmatprep.subr.bf16.mxu0 0
    %3217 = vmatpush2.bf16.msra.mxu0 0
    %3218 = vmatprep.subr.bf16.mxu0 0
    %3219 = vmatpush2.bf16.msra.mxu0 0
    %3220 = vmatprep.mubr.bf16.mxu0 0
    %3221 = vmatmul.mubr.bf16.gmra.mxu0 %v3138
    %v3222 = vpop.f32.mrf.mxu0
    %v3223 = vadd.f32 %v3139, %v3222
    %v3224 = vpop.f32.mrf.mxu0
    %v3225 = vpop.f32.mrf.mxu0
    %v3226 = vpop.f32.mrf.mxu0
    %3227 = vdwg.mxu0
    %v3228 = vlaneseq
    %v3229 = vand.u32 %v3228, 127
    %vm3230 = vcmp.lt.s32.totalorder %v3229, 15
    %v3231 = vsel %vm3230, %v3223, -1e+30
    %3232 = vmax.xlane.f32.xlu0 %v3231
    %v3233 = vpop.xlane.xlu0 %3232
    %v3234 = vsub.f32 %v3231, %v3233
    %v3235 = vmul.f32 %v3234, 1.442695
    %v3236 = vpow.pop %v3235
    %3237 = vadd.xlane.f32.xlu0 %v3236
    %v3238 = vpop.xlane.xlu0 %3237
    %v3239 = vrcp.pop %v3238
    %v3240 = vmul.f32 %v3236, %v3239
    %3241 = vst [vmem:[%s14] sm:$0xff] %v3240
    %v3242 = vld [vmem:[%s7] sm:$0xff]
    %v3243 = vld [vmem:[%s7 + $0x8] sm:$0xff]
    %v3244 = vld [vmem:[#allocation4 + $0xc0] sm:$0xff]
    %v3245 = vld [vmem:[#allocation4 + $0xc8] sm:$0xf]
    %v3246 = vld [vmem:[#allocation4 + $0xcc] sm:$0xff]
    %v3247 = vld [vmem:[#allocation4 + $0xd4] sm:$0xf]
    %v3248 = vld [vmem:[#allocation4 + $0xd8] sm:$0xff]
    %v3249 = vld [vmem:[#allocation4 + $0xe0] sm:$0xf]
    %v3250 = vld [vmem:[#allocation4 + $0xe4] sm:$0xff]
    %v3251 = vld [vmem:[#allocation4 + $0xec] sm:$0xf]
    %v3252 = vld [vmem:[#allocation4 + $0xf0] sm:$0xff]
    %v3253 = vld [vmem:[#allocation4 + $0xf8] sm:$0xf]
    %v3254 = vld [vmem:[#allocation4 + $0xfc] sm:$0xff]
    %v3255 = vld [vmem:[#allocation4 + $0x104] sm:$0xf]
    %v3256 = vld [vmem:[#allocation4 + $0x108] sm:$0xff]
    %v3257 = vld [vmem:[#allocation4 + $0x110] sm:$0xf]
    %v3258 = vld [vmem:[#allocation4 + $0x114] sm:$0xff]
    %v3259 = vld [vmem:[#allocation4 + $0x11c] sm:$0xf]
    %v3260 = vld [vmem:[#allocation4 + $0x120] sm:$0xff]
    %v3261 = vld [vmem:[#allocation4 + $0x128] sm:$0xf]
    %v3262 = vld [vmem:[#allocation4 + $0x12c] sm:$0xff]
    %v3263 = vld [vmem:[#allocation4 + $0x134] sm:$0xf]
    %v3264 = vld [vmem:[#allocation4 + $0x138] sm:$0xff]
    %v3265 = vld [vmem:[#allocation4 + $0x140] sm:$0xf]
    %v3266 = vld [vmem:[#allocation4 + $0x144] sm:$0xff]
    %v3267 = vld [vmem:[#allocation4 + $0x14c] sm:$0xf]
    %v3268 = vld [vmem:[#allocation4 + $0x150] sm:$0xff]
    %v3269 = vld [vmem:[#allocation4 + $0x158] sm:$0xf]
    %v3270 = vld [vmem:[#allocation4 + $0x15c] sm:$0xff]
    %v3271 = vld [vmem:[#allocation4 + $0x164] sm:$0xf]
    %v3272 = vld [vmem:[#allocation4 + $0x168] sm:$0xff]
    %v3273 = vld [vmem:[#allocation4 + $0x170] sm:$0xf]
    %v3274 = vld [vmem:[#allocation4 + $0x174] sm:$0xff]
    %v3275 = vld [vmem:[#allocation4 + $0x17c] sm:$0xf]
    %v3276 = vpack.c.bf16 %v2831, %v2826
    %s3277 = scalar_lea.vmem %s11, 1
    %v3278 = vld [vmem:[%s3277] ss:$8 sm:$0x7]
    %v3280 = vlaneseq
    %v3281 = vshrl.u32 %v3280, 7
    %v3282 = vsub.s32 0, %v3281
    %v3283 = vrot.slane %v3278, %v3282
    %v3284 = vlaneseq
    %v3285 = vshrl.u32 %v3284, 7
    %v3286 = vsub.s32 1, %v3285
    %v3287 = vrot.slane %v3278, %v3286
    %v3288 = vlaneseq
    %v3289 = vshrl.u32 %v3288, 7
    %v3290 = vsub.s32 2, %v3289
    %v3291 = vrot.slane %v3278, %v3290
    %v3327 = vunpack.c.l.b16 %v3244
    %v3328 = vunpack.c.h.b16 %v3244
    %v3329 = vunpack.c.l.b16 %v3245
    %v3330 = vunpack.c.l.b16 %v3246
    %v3331 = vunpack.c.h.b16 %v3246
    %v3332 = vunpack.c.l.b16 %v3247
    %v3333 = vunpack.c.l.b16 %v3248
    %v3334 = vunpack.c.h.b16 %v3248
    %v3335 = vunpack.c.l.b16 %v3249
    %v3336 = vunpack.c.l.b16 %v3250
    %v3337 = vunpack.c.h.b16 %v3250
    %v3338 = vunpack.c.l.b16 %v3251
    %v3339 = vunpack.c.l.b16 %v3252
    %v3340 = vunpack.c.h.b16 %v3252
    %v3341 = vunpack.c.l.b16 %v3253
    %v3342 = vunpack.c.l.b16 %v3254
    %v3343 = vunpack.c.h.b16 %v3254
    %v3344 = vunpack.c.l.b16 %v3255
    %v3345 = vunpack.c.l.b16 %v3256
    %v3346 = vunpack.c.h.b16 %v3256
    %v3347 = vunpack.c.l.b16 %v3257
    %v3348 = vunpack.c.l.b16 %v3258
    %v3349 = vunpack.c.h.b16 %v3258
    %v3350 = vunpack.c.l.b16 %v3259
    %v3351 = vunpack.c.l.b16 %v3260
    %v3352 = vunpack.c.h.b16 %v3260
    %v3353 = vunpack.c.l.b16 %v3261
    %v3354 = vunpack.c.l.b16 %v3262
    %v3355 = vunpack.c.h.b16 %v3262
    %v3356 = vunpack.c.l.b16 %v3263
    %v3357 = vunpack.c.l.b16 %v3264
    %v3358 = vunpack.c.h.b16 %v3264
    %v3359 = vunpack.c.l.b16 %v3265
    %v3360 = vunpack.c.l.b16 %v3266
    %v3361 = vunpack.c.h.b16 %v3266
    %v3362 = vunpack.c.l.b16 %v3267
    %v3363 = vunpack.c.l.b16 %v3268
    %v3364 = vunpack.c.h.b16 %v3268
    %v3365 = vunpack.c.l.b16 %v3269
    %v3366 = vunpack.c.l.b16 %v3270
    %v3367 = vunpack.c.h.b16 %v3270
    %v3368 = vunpack.c.l.b16 %v3271
    %v3369 = vunpack.c.l.b16 %v3272
    %v3370 = vunpack.c.h.b16 %v3272
    %v3371 = vunpack.c.l.b16 %v3273
    %v3372 = vunpack.c.l.b16 %v3274
    %v3373 = vunpack.c.h.b16 %v3274
    %v3374 = vunpack.c.l.b16 %v3275
    %v3375 = vpack.c.b16 %v3330, %v3327
    %v3376 = vpack.c.b16 %v3331, %v3328
    %v3377 = vpack.c.b16 %v3332, %v3329
    %v3378 = vpack.c.b16 %v3336, %v3333
    %v3379 = vpack.c.b16 %v3337, %v3334
    %v3380 = vpack.c.b16 %v3338, %v3335
    %v3381 = vpack.c.b16 %v3342, %v3339
    %v3382 = vpack.c.b16 %v3343, %v3340
    %v3383 = vpack.c.b16 %v3344, %v3341
    %v3384 = vpack.c.b16 %v3348, %v3345
    %v3385 = vpack.c.b16 %v3349, %v3346
    %v3386 = vpack.c.b16 %v3350, %v3347
    %v3387 = vpack.c.b16 %v3354, %v3351
    %v3388 = vpack.c.b16 %v3355, %v3352
    %v3389 = vpack.c.b16 %v3356, %v3353
    %v3390 = vpack.c.b16 %v3360, %v3357
    %v3391 = vpack.c.b16 %v3361, %v3358
    %v3392 = vpack.c.b16 %v3362, %v3359
    %v3393 = vpack.c.b16 %v3366, %v3363
    %v3394 = vpack.c.b16 %v3367, %v3364
    %v3395 = vpack.c.b16 %v3368, %v3365
    %v3396 = vpack.c.b16 %v3372, %v3369
    %v3397 = vpack.c.b16 %v3373, %v3370
    %v3398 = vpack.c.b16 %v3374, %v3371
    %3423 = vmatprep.subr.bf16.mxu0 %v3397
    %3424 = vmatpush1.bf16.msra.mxu0 %v3396
    %3425 = vmatprep.subr.bf16.mxu0 %v3394
    %3426 = vmatpush1.bf16.msra.mxu0 %v3393
    %3427 = vmatprep.subr.bf16.mxu0 %v3391
    %3428 = vmatpush1.bf16.msra.mxu0 %v3390
    %3429 = vmatprep.subr.bf16.mxu0 %v3388
    %3430 = vmatpush1.bf16.msra.mxu0 %v3387
    %3431 = vmatprep.subr.bf16.mxu0 %v3385
    %3432 = vmatpush1.bf16.msra.mxu0 %v3384
    %3433 = vmatprep.subr.bf16.mxu0 %v3382
    %3434 = vmatpush1.bf16.msra.mxu0 %v3381
    %3435 = vmatprep.subr.bf16.mxu0 %v3379
    %3436 = vmatpush1.bf16.msra.mxu0 %v3378
    %3437 = vmatprep.subr.bf16.mxu0 %v3376
    %3438 = vmatpush1.bf16.msra.mxu0 %v3375
    %3439 = vmatprep.subr.bf16.mxu0 0
    %3440 = vmatpush2.bf16.msra.mxu0 0
    %3441 = vmatprep.subr.bf16.mxu0 0
    %3442 = vmatpush2.bf16.msra.mxu0 0
    %3443 = vmatprep.subr.bf16.mxu0 0
    %3444 = vmatpush2.bf16.msra.mxu0 0
    %3445 = vmatprep.subr.bf16.mxu0 0
    %3446 = vmatpush2.bf16.msra.mxu0 0
    %3447 = vmatprep.subr.bf16.mxu0 0
    %3448 = vmatpush2.bf16.msra.mxu0 0
    %3449 = vmatprep.subr.bf16.mxu0 0
    %3450 = vmatpush2.bf16.msra.mxu0 0
    %3451 = vmatprep.subr.bf16.mxu0 0
    %3452 = vmatpush2.bf16.msra.mxu0 0
    %3453 = vmatprep.subr.bf16.mxu0 0
    %3454 = vmatpush2.bf16.msra.mxu0 0
    %3455 = vmatprep.mubr.bf16.mxu0 0
    %3456 = vmatmul.mubr.bf16.gmra.mxu0 %v3276
    %v3457 = vpop.f32.mrf.mxu0
    %v3458 = vadd.f32 %v3283, %v3457
    %v3459 = vpop.f32.mrf.mxu0
    %v3460 = vadd.f32 %v3287, %v3459
    %v3461 = vpop.f32.mrf.mxu0
    %v3462 = vadd.f32 %v3283, %v3461
    %v3463 = vpop.f32.mrf.mxu0
    %v3464 = vadd.f32 %v3287, %v3463
    %3465 = vdwg.mxu0
    %3466 = vmatprep.subr.bf16.mxu0 0
    %3467 = vmatpush1.bf16.msra.mxu0 %v3398
    %3468 = vmatprep.subr.bf16.mxu0 0
    %3469 = vmatpush1.bf16.msra.mxu0 %v3395
    %3470 = vmatprep.subr.bf16.mxu0 0
    %3471 = vmatpush1.bf16.msra.mxu0 %v3392
    %3472 = vmatprep.subr.bf16.mxu0 0
    %3473 = vmatpush1.bf16.msra.mxu0 %v3389
    %3474 = vmatprep.subr.bf16.mxu0 0
    %3475 = vmatpush1.bf16.msra.mxu0 %v3386
    %3476 = vmatprep.subr.bf16.mxu0 0
    %3477 = vmatpush1.bf16.msra.mxu0 %v3383
    %3478 = vmatprep.subr.bf16.mxu0 0
    %3479 = vmatpush1.bf16.msra.mxu0 %v3380
    %3480 = vmatprep.subr.bf16.mxu0 0
    %3481 = vmatpush1.bf16.msra.mxu0 %v3377
    %3482 = vmatprep.subr.bf16.mxu0 0
    %3483 = vmatpush2.bf16.msra.mxu0 0
    %3484 = vmatprep.subr.bf16.mxu0 0
    %3485 = vmatpush2.bf16.msra.mxu0 0
    %3486 = vmatprep.subr.bf16.mxu0 0
    %3487 = vmatpush2.bf16.msra.mxu0 0
    %3488 = vmatprep.subr.bf16.mxu0 0
    %3489 = vmatpush2.bf16.msra.mxu0 0
    %3490 = vmatprep.subr.bf16.mxu0 0
    %3491 = vmatpush2.bf16.msra.mxu0 0
    %3492 = vmatprep.subr.bf16.mxu0 0
    %3493 = vmatpush2.bf16.msra.mxu0 0
    %3494 = vmatprep.subr.bf16.mxu0 0
    %3495 = vmatpush2.bf16.msra.mxu0 0
    %3496 = vmatprep.subr.bf16.mxu0 0
    %3497 = vmatpush2.bf16.msra.mxu0 0
    %3498 = vmatprep.mubr.bf16.mxu0 0
    %3499 = vmatmul.mubr.bf16.gmra.mxu0 %v3276
    %v3500 = vpop.f32.mrf.mxu0
    %v3501 = vadd.f32 %v3291, %v3500
    %v3502 = vpop.f32.mrf.mxu0
    %v3503 = vpop.f32.mrf.mxu0
    %v3504 = vadd.f32 %v3291, %v3503
    %v3505 = vpop.f32.mrf.mxu0
    %3506 = vdwg.mxu0
    %3507 = vmatprep.subr.mxu0 0.0
    %3508 = vmatpush1.xpose.msra.mxu0 0.0
    %3509 = vmatprep.subr.mxu0 0.0
    %3510 = vmatpush1.xpose.msra.mxu0 0.0
    %3511 = vmatprep.subr.mxu0 0.0
    %3512 = vmatpush1.xpose.msra.mxu0 0.0
    %3513 = vmatprep.subr.mxu0 0.0
    %3514 = vmatpush1.xpose.msra.mxu0 0.0
    %3515 = vmatprep.subr.mxu0 0.0
    %3516 = vmatpush1.xpose.msra.mxu0 0.0
    %3517 = vmatprep.subr.mxu0 0.0
    %3518 = vmatpush1.xpose.msra.mxu0 0.0
    %3519 = vmatprep.subr.mxu0 0.0
    %3520 = vmatpush1.xpose.msra.mxu0 0.0
    %3521 = vmatprep.subr.mxu0 0.0
    %3522 = vmatpush1.xpose.msra.mxu0 0.0
    %3523 = vmatprep.subr.mxu0 0.0
    %3524 = vmatpush1.xpose.msra.mxu0 0.0
    %3525 = vmatprep.subr.mxu0 0.0
    %3526 = vmatpush1.xpose.msra.mxu0 0.0
    %3527 = vmatprep.subr.mxu0 0.0
    %3528 = vmatpush1.xpose.msra.mxu0 0.0
    %3529 = vmatprep.subr.mxu0 0.0
    %3530 = vmatpush1.xpose.msra.mxu0 0.0
    %3531 = vmatprep.subr.mxu0 0.0
    %3532 = vmatpush1.xpose.msra.mxu0 0.0
    %3533 = vmatprep.subr.mxu0 0.0
    %3534 = vmatpush1.xpose.msra.mxu0 0.0
    %3535 = vmatprep.subr.mxu0 0.0
    %3536 = vmatpush1.xpose.msra.mxu0 %v3464
    %3537 = vmatprep.subr.mxu0 0.0
    %3538 = vmatpush1.xpose.msra.mxu0 %v3460
    %3539 = vmatprep.subr.mxu0 0.0
    %3540 = vmatpush2.xpose.msra.mxu0 0.0
    %3541 = vmatprep.subr.mxu0 0.0
    %3542 = vmatpush2.xpose.msra.mxu0 0.0
    %3543 = vmatprep.subr.mxu0 0.0
    %3544 = vmatpush2.xpose.msra.mxu0 0.0
    %3545 = vmatprep.subr.mxu0 0.0
    %3546 = vmatpush2.xpose.msra.mxu0 0.0
    %3547 = vmatprep.subr.mxu0 0.0
    %3548 = vmatpush2.xpose.msra.mxu0 0.0
    %3549 = vmatprep.subr.mxu0 0.0
    %3550 = vmatpush2.xpose.msra.mxu0 0.0
    %3551 = vmatprep.subr.mxu0 0.0
    %3552 = vmatpush2.xpose.msra.mxu0 0.0
    %3553 = vmatprep.subr.mxu0 0.0
    %3554 = vmatpush2.xpose.msra.mxu0 0.0
    %3555 = vmatprep.subr.mxu0 0.0
    %3556 = vmatpush2.xpose.msra.mxu0 0.0
    %3557 = vmatprep.subr.mxu0 0.0
    %3558 = vmatpush2.xpose.msra.mxu0 0.0
    %3559 = vmatprep.subr.mxu0 0.0
    %3560 = vmatpush2.xpose.msra.mxu0 0.0
    %3561 = vmatprep.subr.mxu0 0.0
    %3562 = vmatpush2.xpose.msra.mxu0 0.0
    %3563 = vmatprep.subr.mxu0 0.0
    %3564 = vmatpush2.xpose.msra.mxu0 0.0
    %3565 = vmatprep.subr.mxu0 0.0
    %3566 = vmatpush2.xpose.msra.mxu0 0.0
    %3567 = vmatprep.subr.mxu0 0.0
    %3568 = vmatpush2.xpose.msra.mxu0 0.0
    %3569 = vmatprep.subr.mxu0 0.0
    %3570 = vmatpush2.xpose.msra.mxu0 0.0
    %3571 = vmatprep.mubr.f32.mxu0 0.0
    %3572 = vmatmul.mubr.f32.gmra.mxu0 %v3458
    %v3573 = vpop.f32.mrf.mxu0
    %v3574 = vadd.f32 %v3242, %v3573
    %v3575 = vpop.f32.mrf.mxu0
    %3576 = vmatprep.mubr.f32.mxu0 0.0
    %3577 = vmatmul.mubr.f32.gmra.mxu0 %v3462
    %v3578 = vpop.f32.mrf.mxu0
    %v3579 = vadd.f32 %v3243, %v3578
    %v3580 = vpop.f32.mrf.mxu0
    %3581 = vdwg.mxu0
    %vm3582 = vcmask 130048
    %v3583 = vsel %vm3582, %v3574, -inf
    %3584 = vmax.xlane.f32.xlu0 %v3583
    %v3585 = vpop.xlane.xlu0 %3584
    %v3586 = vsel %vm3582, %v3579, -inf
    %3587 = vmax.xlane.f32.xlu0 %v3586
    %v3588 = vpop.xlane.xlu0 %3587
    %v3589 = vsub.f32 %v3574, %v3585
    %v3590 = vsub.f32 %v3579, %v3588
    %v3591 = vmul.f32 %v3589, 1.442695
    %v3592 = vpow.pop %v3591
    %v3593 = vmul.f32 %v3590, 1.442695
    %v3594 = vpow.pop %v3593
    %v3595 = vsel %vm3582, %v3592, 0.0
    %3596 = vadd.xlane.f32.xlu0 %v3595
    %v3597 = vpop.xlane.xlu0 %3596
    %v3598 = vsel %vm3582, %v3594, 0.0
    %3599 = vadd.xlane.f32.xlu0 %v3598
    %v3600 = vpop.xlane.xlu0 %3599
    %v3601 = vrcp.pop %v3597
    %v3602 = vrcp.pop %v3600
    %v3603 = vmul.f32 %v3592, %v3601
    %v3604 = vmul.f32 %v3594, %v3602
    %v3606 = vsel %vm3582, %v3603, 0
    %v3609 = vsel %vm3582, %v3604, 0
    %3611 = vmatprep.subr.mxu0 0.0
    %3612 = vmatpush1.msra.mxu0 0.0
    %3613 = vmatprep.subr.mxu0 0.0
    %3614 = vmatpush1.msra.mxu0 0.0
    %3615 = vmatprep.subr.mxu0 0.0
    %3616 = vmatpush1.msra.mxu0 0.0
    %3617 = vmatprep.subr.mxu0 0.0
    %3618 = vmatpush1.msra.mxu0 0.0
    %3619 = vmatprep.subr.mxu0 0.0
    %3620 = vmatpush1.msra.mxu0 0.0
    %3621 = vmatprep.subr.mxu0 0.0
    %3622 = vmatpush1.msra.mxu0 0.0
    %3623 = vmatprep.subr.mxu0 0.0
    %3624 = vmatpush1.msra.mxu0 0.0
    %3625 = vmatprep.subr.mxu0 0.0
    %3626 = vmatpush1.msra.mxu0 0.0
    %3627 = vmatprep.subr.mxu0 0.0
    %3628 = vmatpush1.msra.mxu0 0.0
    %3629 = vmatprep.subr.mxu0 0.0
    %3630 = vmatpush1.msra.mxu0 0.0
    %3631 = vmatprep.subr.mxu0 0.0
    %3632 = vmatpush1.msra.mxu0 0.0
    %3633 = vmatprep.subr.mxu0 0.0
    %3634 = vmatpush1.msra.mxu0 0.0
    %3635 = vmatprep.subr.mxu0 0.0
    %3636 = vmatpush1.msra.mxu0 0.0
    %3637 = vmatprep.subr.mxu0 0.0
    %3638 = vmatpush1.msra.mxu0 0.0
    %3639 = vmatprep.subr.mxu0 0.0
    %3640 = vmatpush1.msra.mxu0 %v3504
    %3641 = vmatprep.subr.mxu0 0.0
    %3642 = vmatpush1.msra.mxu0 %v3501
    %3643 = vmatprep.subr.mxu0 0.0
    %3644 = vmatpush2.msra.mxu0 0.0
    %3645 = vmatprep.subr.mxu0 0.0
    %3646 = vmatpush2.msra.mxu0 0.0
    %3647 = vmatprep.subr.mxu0 0.0
    %3648 = vmatpush2.msra.mxu0 0.0
    %3649 = vmatprep.subr.mxu0 0.0
    %3650 = vmatpush2.msra.mxu0 0.0
    %3651 = vmatprep.subr.mxu0 0.0
    %3652 = vmatpush2.msra.mxu0 0.0
    %3653 = vmatprep.subr.mxu0 0.0
    %3654 = vmatpush2.msra.mxu0 0.0
    %3655 = vmatprep.subr.mxu0 0.0
    %3656 = vmatpush2.msra.mxu0 0.0
    %3657 = vmatprep.subr.mxu0 0.0
    %3658 = vmatpush2.msra.mxu0 0.0
    %3659 = vmatprep.subr.mxu0 0.0
    %3660 = vmatpush2.msra.mxu0 0.0
    %3661 = vmatprep.subr.mxu0 0.0
    %3662 = vmatpush2.msra.mxu0 0.0
    %3663 = vmatprep.subr.mxu0 0.0
    %3664 = vmatpush2.msra.mxu0 0.0
    %3665 = vmatprep.subr.mxu0 0.0
    %3666 = vmatpush2.msra.mxu0 0.0
    %3667 = vmatprep.subr.mxu0 0.0
    %3668 = vmatpush2.msra.mxu0 0.0
    %3669 = vmatprep.subr.mxu0 0.0
    %3670 = vmatpush2.msra.mxu0 0.0
    %3671 = vmatprep.subr.mxu0 0.0
    %3672 = vmatpush2.msra.mxu0 0.0
    %3673 = vmatprep.subr.mxu0 0.0
    %3674 = vmatpush2.msra.mxu0 0.0
    %3675 = vmatprep.mubr.f32.mxu0 0.0
    %3676 = vmatmul.mubr.f32.gmra.mxu0 %v3606
    %v3677 = vpop.f32.mrf.mxu0
    %v3678 = vadd.f32 0.0, %v3677
    %v3679 = vpop.f32.mrf.mxu0
    %3680 = vmatprep.mubr.f32.mxu0 0.0
    %3681 = vmatmul.mubr.f32.gmra.mxu0 %v3609
    %v3682 = vpop.f32.mrf.mxu0
    %v3683 = vadd.f32 0.0, %v3682
    %v3684 = vpop.f32.mrf.mxu0
    %3685 = vdwg.mxu0
    %v3686 = vld [vmem:[#allocation2 + $0x400] sm:$0xff]
    %v3687 = vld [vmem:[#allocation2 + $0x408] sm:$0xff]
    %v3688 = vld [vmem:[#allocation2 + $0x410] sm:$0xff]
    %v3689 = vld [vmem:[#allocation2 + $0x418] sm:$0xff]
    %v3690 = vld [vmem:[#allocation2 + $0x420] sm:$0xff]
    %v3691 = vld [vmem:[#allocation2 + $0x428] sm:$0xff]
    %v3692 = vld [vmem:[#allocation2 + $0x430] sm:$0xff]
    %v3693 = vld [vmem:[#allocation2 + $0x438] sm:$0xff]
    %v3694 = vld [vmem:[#allocation2 + $0x440] sm:$0xff]
    %v3695 = vld [vmem:[#allocation2 + $0x448] sm:$0xff]
    %v3696 = vld [vmem:[#allocation2 + $0x450] sm:$0xff]
    %v3697 = vld [vmem:[#allocation2 + $0x458] sm:$0xff]
    %v3698 = vld [vmem:[#allocation2 + $0x460] sm:$0xff]
    %v3699 = vld [vmem:[#allocation2 + $0x468] sm:$0xff]
    %v3700 = vld [vmem:[#allocation2 + $0x470] sm:$0xff]
    %v3701 = vld [vmem:[#allocation2 + $0x478] sm:$0xff]
    %v3702 = vpack.c.bf16 %v3683, %v3678
    %s3703 = scalar_lea.vmem %s11, 7
    %v3704 = vld [vmem:[%s3703] ss:$8 sm:$0x3]
    %v3706 = vlaneseq
    %v3707 = vshrl.u32 %v3706, 7
    %v3708 = vsub.s32 0, %v3707
    %v3709 = vrot.slane %v3704, %v3708
    %v3710 = vlaneseq
    %v3711 = vshrl.u32 %v3710, 7
    %v3712 = vsub.s32 1, %v3711
    %v3713 = vrot.slane %v3704, %v3712
    %v3732 = vunpack.c.l.b16 %v3686
    %v3733 = vunpack.c.h.b16 %v3686
    %v3734 = vunpack.c.l.b16 %v3687
    %v3735 = vunpack.c.h.b16 %v3687
    %v3736 = vunpack.c.l.b16 %v3688
    %v3737 = vunpack.c.h.b16 %v3688
    %v3738 = vunpack.c.l.b16 %v3689
    %v3739 = vunpack.c.h.b16 %v3689
    %v3740 = vunpack.c.l.b16 %v3690
    %v3741 = vunpack.c.h.b16 %v3690
    %v3742 = vunpack.c.l.b16 %v3691
    %v3743 = vunpack.c.h.b16 %v3691
    %v3744 = vunpack.c.l.b16 %v3692
    %v3745 = vunpack.c.h.b16 %v3692
    %v3746 = vunpack.c.l.b16 %v3693
    %v3747 = vunpack.c.h.b16 %v3693
    %v3748 = vunpack.c.l.b16 %v3694
    %v3749 = vunpack.c.h.b16 %v3694
    %v3750 = vunpack.c.l.b16 %v3695
    %v3751 = vunpack.c.h.b16 %v3695
    %v3752 = vunpack.c.l.b16 %v3696
    %v3753 = vunpack.c.h.b16 %v3696
    %v3754 = vunpack.c.l.b16 %v3697
    %v3755 = vunpack.c.h.b16 %v3697
    %v3756 = vunpack.c.l.b16 %v3698
    %v3757 = vunpack.c.h.b16 %v3698
    %v3758 = vunpack.c.l.b16 %v3699
    %v3759 = vunpack.c.h.b16 %v3699
    %v3760 = vunpack.c.l.b16 %v3700
    %v3761 = vunpack.c.h.b16 %v3700
    %v3762 = vunpack.c.l.b16 %v3701
    %v3763 = vunpack.c.h.b16 %v3701
    %v3764 = vpack.c.b16 %v3734, %v3732
    %v3765 = vpack.c.b16 %v3735, %v3733
    %v3766 = vpack.c.b16 %v3738, %v3736
    %v3767 = vpack.c.b16 %v3739, %v3737
    %v3768 = vpack.c.b16 %v3742, %v3740
    %v3769 = vpack.c.b16 %v3743, %v3741
    %v3770 = vpack.c.b16 %v3746, %v3744
    %v3771 = vpack.c.b16 %v3747, %v3745
    %v3772 = vpack.c.b16 %v3750, %v3748
    %v3773 = vpack.c.b16 %v3751, %v3749
    %v3774 = vpack.c.b16 %v3754, %v3752
    %v3775 = vpack.c.b16 %v3755, %v3753
    %v3776 = vpack.c.b16 %v3758, %v3756
    %v3777 = vpack.c.b16 %v3759, %v3757
    %v3778 = vpack.c.b16 %v3762, %v3760
    %v3779 = vpack.c.b16 %v3763, %v3761
    %3796 = vmatprep.subr.bf16.mxu0 %v3779
    %3797 = vmatpush1.bf16.msra.mxu0 %v3778
    %3798 = vmatprep.subr.bf16.mxu0 %v3777
    %3799 = vmatpush1.bf16.msra.mxu0 %v3776
    %3800 = vmatprep.subr.bf16.mxu0 %v3775
    %3801 = vmatpush1.bf16.msra.mxu0 %v3774
    %3802 = vmatprep.subr.bf16.mxu0 %v3773
    %3803 = vmatpush1.bf16.msra.mxu0 %v3772
    %3804 = vmatprep.subr.bf16.mxu0 %v3771
    %3805 = vmatpush1.bf16.msra.mxu0 %v3770
    %3806 = vmatprep.subr.bf16.mxu0 %v3769
    %3807 = vmatpush1.bf16.msra.mxu0 %v3768
    %3808 = vmatprep.subr.bf16.mxu0 %v3767
    %3809 = vmatpush1.bf16.msra.mxu0 %v3766
    %3810 = vmatprep.subr.bf16.mxu0 %v3765
    %3811 = vmatpush1.bf16.msra.mxu0 %v3764
    %3812 = vmatprep.subr.bf16.mxu0 0
    %3813 = vmatpush2.bf16.msra.mxu0 0
    %3814 = vmatprep.subr.bf16.mxu0 0
    %3815 = vmatpush2.bf16.msra.mxu0 0
    %3816 = vmatprep.subr.bf16.mxu0 0
    %3817 = vmatpush2.bf16.msra.mxu0 0
    %3818 = vmatprep.subr.bf16.mxu0 0
    %3819 = vmatpush2.bf16.msra.mxu0 0
    %3820 = vmatprep.subr.bf16.mxu0 0
    %3821 = vmatpush2.bf16.msra.mxu0 0
    %3822 = vmatprep.subr.bf16.mxu0 0
    %3823 = vmatpush2.bf16.msra.mxu0 0
    %3824 = vmatprep.subr.bf16.mxu0 0
    %3825 = vmatpush2.bf16.msra.mxu0 0
    %3826 = vmatprep.subr.bf16.mxu0 0
    %3827 = vmatpush2.bf16.msra.mxu0 0
    %3828 = vmatprep.mubr.bf16.mxu0 0
    %3829 = vmatmul.mubr.bf16.gmra.mxu0 %v3702
    %v3830 = vpop.f32.mrf.mxu0
    %v3831 = vadd.f32 %v3709, %v3830
    %v3832 = vpop.f32.mrf.mxu0
    %v3833 = vadd.f32 %v3713, %v3832
    %v3834 = vpop.f32.mrf.mxu0
    %v3835 = vadd.f32 %v3709, %v3834
    %v3836 = vpop.f32.mrf.mxu0
    %v3837 = vadd.f32 %v3713, %v3836
    %3838 = vdwg.mxu0
    %vm3839 = vcmp.ge.f32.partialorder %v3831, 0.0
    %vm3840 = vcmp.ge.f32.partialorder %v3833, 0.0
    %vm3841 = vcmp.ge.f32.partialorder %v3835, 0.0
    %vm3842 = vcmp.ge.f32.partialorder %v3837, 0.0
    %v3843 = vmul.f32 %v3831, 0.01
    %v3844 = vmul.f32 %v3833, 0.01
    %v3845 = vmul.f32 %v3835, 0.01
    %v3846 = vmul.f32 %v3837, 0.01
    %v3847 = vsel %vm3839, %v3831, %v3843
    %v3848 = vsel %vm3840, %v3833, %v3844
    %v3849 = vsel %vm3841, %v3835, %v3845
    %v3850 = vsel %vm3842, %v3837, %v3846
    %v3851 = vld [vmem:[#allocation2 + $0x480] sm:$0xff]
    %v3852 = vld [vmem:[#allocation2 + $0x488] sm:$0xff]
    %v3853 = vld [vmem:[#allocation2 + $0x490] sm:$0xff]
    %v3854 = vld [vmem:[#allocation2 + $0x498] sm:$0xff]
    %v3855 = vld [vmem:[#allocation2 + $0x4a0] sm:$0xff]
    %v3856 = vld [vmem:[#allocation2 + $0x4a8] sm:$0xff]
    %v3857 = vld [vmem:[#allocation2 + $0x4b0] sm:$0xff]
    %v3858 = vld [vmem:[#allocation2 + $0x4b8] sm:$0xff]
    %v3859 = vld [vmem:[#allocation2 + $0x4c0] sm:$0xff]
    %v3860 = vld [vmem:[#allocation2 + $0x4c8] sm:$0xff]
    %v3861 = vld [vmem:[#allocation2 + $0x4d0] sm:$0xff]
    %v3862 = vld [vmem:[#allocation2 + $0x4d8] sm:$0xff]
    %v3863 = vld [vmem:[#allocation2 + $0x4e0] sm:$0xff]
    %v3864 = vld [vmem:[#allocation2 + $0x4e8] sm:$0xff]
    %v3865 = vld [vmem:[#allocation2 + $0x4f0] sm:$0xff]
    %v3866 = vld [vmem:[#allocation2 + $0x4f8] sm:$0xff]
    %v3867 = vld [vmem:[#allocation2 + $0x500] sm:$0xff]
    %v3868 = vld [vmem:[#allocation2 + $0x508] sm:$0xff]
    %v3869 = vld [vmem:[#allocation2 + $0x510] sm:$0xff]
    %v3870 = vld [vmem:[#allocation2 + $0x518] sm:$0xff]
    %v3871 = vld [vmem:[#allocation2 + $0x520] sm:$0xff]
    %v3872 = vld [vmem:[#allocation2 + $0x528] sm:$0xff]
    %v3873 = vld [vmem:[#allocation2 + $0x530] sm:$0xff]
    %v3874 = vld [vmem:[#allocation2 + $0x538] sm:$0xff]
    %v3875 = vld [vmem:[#allocation2 + $0x540] sm:$0xff]
    %v3876 = vld [vmem:[#allocation2 + $0x548] sm:$0xff]
    %v3877 = vld [vmem:[#allocation2 + $0x550] sm:$0xff]
    %v3878 = vld [vmem:[#allocation2 + $0x558] sm:$0xff]
    %v3879 = vld [vmem:[#allocation2 + $0x560] sm:$0xff]
    %v3880 = vld [vmem:[#allocation2 + $0x568] sm:$0xff]
    %v3881 = vld [vmem:[#allocation2 + $0x570] sm:$0xff]
    %v3882 = vld [vmem:[#allocation2 + $0x578] sm:$0xff]
    %v3883 = vpack.c.bf16 %v3849, %v3847
    %v3884 = vpack.c.bf16 %v3850, %v3848
    %s3885 = scalar_lea.vmem %s11, 24
    %v3886 = vld [vmem:[%s3885] ss:$8 sm:$0x3]
    %v3888 = vlaneseq
    %v3889 = vshrl.u32 %v3888, 7
    %v3890 = vsub.s32 0, %v3889
    %v3891 = vrot.slane %v3886, %v3890
    %v3892 = vlaneseq
    %v3893 = vshrl.u32 %v3892, 7
    %v3894 = vsub.s32 1, %v3893
    %v3895 = vrot.slane %v3886, %v3894
    %v3930 = vunpack.c.l.b16 %v3851
    %v3931 = vunpack.c.h.b16 %v3851
    %v3932 = vunpack.c.l.b16 %v3852
    %v3933 = vunpack.c.h.b16 %v3852
    %v3934 = vunpack.c.l.b16 %v3853
    %v3935 = vunpack.c.h.b16 %v3853
    %v3936 = vunpack.c.l.b16 %v3854
    %v3937 = vunpack.c.h.b16 %v3854
    %v3938 = vunpack.c.l.b16 %v3855
    %v3939 = vunpack.c.h.b16 %v3855
    %v3940 = vunpack.c.l.b16 %v3856
    %v3941 = vunpack.c.h.b16 %v3856
    %v3942 = vunpack.c.l.b16 %v3857
    %v3943 = vunpack.c.h.b16 %v3857
    %v3944 = vunpack.c.l.b16 %v3858
    %v3945 = vunpack.c.h.b16 %v3858
    %v3946 = vunpack.c.l.b16 %v3859
    %v3947 = vunpack.c.h.b16 %v3859
    %v3948 = vunpack.c.l.b16 %v3860
    %v3949 = vunpack.c.h.b16 %v3860
    %v3950 = vunpack.c.l.b16 %v3861
    %v3951 = vunpack.c.h.b16 %v3861
    %v3952 = vunpack.c.l.b16 %v3862
    %v3953 = vunpack.c.h.b16 %v3862
    %v3954 = vunpack.c.l.b16 %v3863
    %v3955 = vunpack.c.h.b16 %v3863
    %v3956 = vunpack.c.l.b16 %v3864
    %v3957 = vunpack.c.h.b16 %v3864
    %v3958 = vunpack.c.l.b16 %v3865
    %v3959 = vunpack.c.h.b16 %v3865
    %v3960 = vunpack.c.l.b16 %v3866
    %v3961 = vunpack.c.h.b16 %v3866
    %v3962 = vunpack.c.l.b16 %v3867
    %v3963 = vunpack.c.h.b16 %v3867
    %v3964 = vunpack.c.l.b16 %v3868
    %v3965 = vunpack.c.h.b16 %v3868
    %v3966 = vunpack.c.l.b16 %v3869
    %v3967 = vunpack.c.h.b16 %v3869
    %v3968 = vunpack.c.l.b16 %v3870
    %v3969 = vunpack.c.h.b16 %v3870
    %v3970 = vunpack.c.l.b16 %v3871
    %v3971 = vunpack.c.h.b16 %v3871
    %v3972 = vunpack.c.l.b16 %v3872
    %v3973 = vunpack.c.h.b16 %v3872
    %v3974 = vunpack.c.l.b16 %v3873
    %v3975 = vunpack.c.h.b16 %v3873
    %v3976 = vunpack.c.l.b16 %v3874
    %v3977 = vunpack.c.h.b16 %v3874
    %v3978 = vunpack.c.l.b16 %v3875
    %v3979 = vunpack.c.h.b16 %v3875
    %v3980 = vunpack.c.l.b16 %v3876
    %v3981 = vunpack.c.h.b16 %v3876
    %v3982 = vunpack.c.l.b16 %v3877
    %v3983 = vunpack.c.h.b16 %v3877
    %v3984 = vunpack.c.l.b16 %v3878
    %v3985 = vunpack.c.h.b16 %v3878
    %v3986 = vunpack.c.l.b16 %v3879
    %v3987 = vunpack.c.h.b16 %v3879
    %v3988 = vunpack.c.l.b16 %v3880
    %v3989 = vunpack.c.h.b16 %v3880
    %v3990 = vunpack.c.l.b16 %v3881
    %v3991 = vunpack.c.h.b16 %v3881
    %v3992 = vunpack.c.l.b16 %v3882
    %v3993 = vunpack.c.h.b16 %v3882
    %v3994 = vpack.c.b16 %v3932, %v3930
    %v3995 = vpack.c.b16 %v3933, %v3931
    %v3996 = vpack.c.b16 %v3936, %v3934
    %v3997 = vpack.c.b16 %v3937, %v3935
    %v3998 = vpack.c.b16 %v3940, %v3938
    %v3999 = vpack.c.b16 %v3941, %v3939
    %v4000 = vpack.c.b16 %v3944, %v3942
    %v4001 = vpack.c.b16 %v3945, %v3943
    %v4002 = vpack.c.b16 %v3948, %v3946
    %v4003 = vpack.c.b16 %v3949, %v3947
    %v4004 = vpack.c.b16 %v3952, %v3950
    %v4005 = vpack.c.b16 %v3953, %v3951
    %v4006 = vpack.c.b16 %v3956, %v3954
    %v4007 = vpack.c.b16 %v3957, %v3955
    %v4008 = vpack.c.b16 %v3960, %v3958
    %v4009 = vpack.c.b16 %v3961, %v3959
    %v4010 = vpack.c.b16 %v3964, %v3962
    %v4011 = vpack.c.b16 %v3965, %v3963
    %v4012 = vpack.c.b16 %v3968, %v3966
    %v4013 = vpack.c.b16 %v3969, %v3967
    %v4014 = vpack.c.b16 %v3972, %v3970
    %v4015 = vpack.c.b16 %v3973, %v3971
    %v4016 = vpack.c.b16 %v3976, %v3974
    %v4017 = vpack.c.b16 %v3977, %v3975
    %v4018 = vpack.c.b16 %v3980, %v3978
    %v4019 = vpack.c.b16 %v3981, %v3979
    %v4020 = vpack.c.b16 %v3984, %v3982
    %v4021 = vpack.c.b16 %v3985, %v3983
    %v4022 = vpack.c.b16 %v3988, %v3986
    %v4023 = vpack.c.b16 %v3989, %v3987
    %v4024 = vpack.c.b16 %v3992, %v3990
    %v4025 = vpack.c.b16 %v3993, %v3991
    %4058 = vmatprep.subr.bf16.mxu0 %v4009
    %4059 = vmatpush1.bf16.msra.mxu0 %v4008
    %4060 = vmatprep.subr.bf16.mxu0 %v4007
    %4061 = vmatpush1.bf16.msra.mxu0 %v4006
    %4062 = vmatprep.subr.bf16.mxu0 %v4005
    %4063 = vmatpush1.bf16.msra.mxu0 %v4004
    %4064 = vmatprep.subr.bf16.mxu0 %v4003
    %4065 = vmatpush1.bf16.msra.mxu0 %v4002
    %4066 = vmatprep.subr.bf16.mxu0 %v4001
    %4067 = vmatpush1.bf16.msra.mxu0 %v4000
    %4068 = vmatprep.subr.bf16.mxu0 %v3999
    %4069 = vmatpush1.bf16.msra.mxu0 %v3998
    %4070 = vmatprep.subr.bf16.mxu0 %v3997
    %4071 = vmatpush1.bf16.msra.mxu0 %v3996
    %4072 = vmatprep.subr.bf16.mxu0 %v3995
    %4073 = vmatpush1.bf16.msra.mxu0 %v3994
    %4074 = vmatprep.subr.bf16.mxu0 %v4025
    %4075 = vmatpush2.bf16.msra.mxu0 %v4024
    %4076 = vmatprep.subr.bf16.mxu0 %v4023
    %4077 = vmatpush2.bf16.msra.mxu0 %v4022
    %4078 = vmatprep.subr.bf16.mxu0 %v4021
    %4079 = vmatpush2.bf16.msra.mxu0 %v4020
    %4080 = vmatprep.subr.bf16.mxu0 %v4019
    %4081 = vmatpush2.bf16.msra.mxu0 %v4018
    %4082 = vmatprep.subr.bf16.mxu0 %v4017
    %4083 = vmatpush2.bf16.msra.mxu0 %v4016
    %4084 = vmatprep.subr.bf16.mxu0 %v4015
    %4085 = vmatpush2.bf16.msra.mxu0 %v4014
    %4086 = vmatprep.subr.bf16.mxu0 %v4013
    %4087 = vmatpush2.bf16.msra.mxu0 %v4012
    %4088 = vmatprep.subr.bf16.mxu0 %v4011
    %4089 = vmatpush2.bf16.msra.mxu0 %v4010
    %4090 = vmatprep.mubr.bf16.mxu0 %v3884
    %4091 = vmatmul.mubr.bf16.gmra.mxu0 %v3883
    %v4092 = vpop.f32.mrf.mxu0
    %v4093 = vadd.f32 %v3891, %v4092
    %v4094 = vpop.f32.mrf.mxu0
    %v4095 = vadd.f32 %v3895, %v4094
    %v4096 = vpop.f32.mrf.mxu0
    %v4097 = vadd.f32 %v3891, %v4096
    %v4098 = vpop.f32.mrf.mxu0
    %v4099 = vadd.f32 %v3895, %v4098
    %4100 = vdwg.mxu0
    %vm4101 = vcmp.ge.f32.partialorder %v4093, 0.0
    %vm4102 = vcmp.ge.f32.partialorder %v4095, 0.0
    %vm4103 = vcmp.ge.f32.partialorder %v4097, 0.0
    %vm4104 = vcmp.ge.f32.partialorder %v4099, 0.0
    %v4105 = vmul.f32 %v4093, 0.01
    %v4106 = vmul.f32 %v4095, 0.01
    %v4107 = vmul.f32 %v4097, 0.01
    %v4108 = vmul.f32 %v4099, 0.01
    %v4109 = vsel %vm4101, %v4093, %v4105
    %v4110 = vsel %vm4102, %v4095, %v4106
    %v4111 = vsel %vm4103, %v4097, %v4107
    %v4112 = vsel %vm4104, %v4099, %v4108
    %v4113 = vld [vmem:[%s8 + $0x180] sm:$0xf]
    %v4114 = vld [vmem:[%s8 + $0x184] sm:$0xf]
    %v4115 = vld [vmem:[%s8 + $0x188] sm:$0xf]
    %v4116 = vld [vmem:[%s8 + $0x18c] sm:$0xf]
    %v4117 = vld [vmem:[%s8 + $0x190] sm:$0xf]
    %v4118 = vld [vmem:[%s8 + $0x194] sm:$0xf]
    %v4119 = vld [vmem:[%s8 + $0x198] sm:$0xf]
    %v4120 = vld [vmem:[%s8 + $0x19c] sm:$0xf]
    %v4121 = vld [vmem:[%s8 + $0x1a0] sm:$0xf]
    %v4122 = vld [vmem:[%s8 + $0x1a4] sm:$0xf]
    %v4123 = vld [vmem:[%s8 + $0x1a8] sm:$0xf]
    %v4124 = vld [vmem:[%s8 + $0x1ac] sm:$0xf]
    %v4125 = vld [vmem:[%s8 + $0x1b0] sm:$0xf]
    %v4126 = vld [vmem:[%s8 + $0x1b4] sm:$0xf]
    %v4127 = vld [vmem:[%s8 + $0x1b8] sm:$0xf]
    %v4128 = vld [vmem:[%s8 + $0x1bc] sm:$0xf]
    %v4129 = vld [vmem:[%s8 + $0x1c0] sm:$0xf]
    %v4130 = vld [vmem:[%s8 + $0x1c4] sm:$0xf]
    %v4131 = vld [vmem:[%s8 + $0x1c8] sm:$0xf]
    %v4132 = vld [vmem:[%s8 + $0x1cc] sm:$0xf]
    %v4133 = vld [vmem:[%s8 + $0x1d0] sm:$0xf]
    %v4134 = vld [vmem:[%s8 + $0x1d4] sm:$0xf]
    %v4135 = vld [vmem:[%s8 + $0x1d8] sm:$0xf]
    %v4136 = vld [vmem:[%s8 + $0x1dc] sm:$0xf]
    %v4137 = vld [vmem:[%s8 + $0x1e0] sm:$0xf]
    %v4138 = vld [vmem:[%s8 + $0x1e4] sm:$0xf]
    %v4139 = vld [vmem:[%s8 + $0x1e8] sm:$0xf]
    %v4140 = vld [vmem:[%s8 + $0x1ec] sm:$0xf]
    %v4141 = vld [vmem:[%s8 + $0x1f0] sm:$0xf]
    %v4142 = vld [vmem:[%s8 + $0x1f4] sm:$0xf]
    %v4143 = vld [vmem:[%s8 + $0x1f8] sm:$0xf]
    %v4144 = vld [vmem:[%s8 + $0x1fc] sm:$0xf]
    %v4145 = vpack.c.bf16 %v4111, %v4109
    %v4146 = vpack.c.bf16 %v4112, %v4110
    %v4147 = vld [vmem:[%s11 + $0x1e] ss:$0 sm:$0xff]
    %v4180 = vunpack.c.l.b16 %v4113
    %v4181 = vunpack.c.l.b16 %v4114
    %v4182 = vunpack.c.l.b16 %v4115
    %v4183 = vunpack.c.l.b16 %v4116
    %v4184 = vunpack.c.l.b16 %v4117
    %v4185 = vunpack.c.l.b16 %v4118
    %v4186 = vunpack.c.l.b16 %v4119
    %v4187 = vunpack.c.l.b16 %v4120
    %v4188 = vunpack.c.l.b16 %v4121
    %v4189 = vunpack.c.l.b16 %v4122
    %v4190 = vunpack.c.l.b16 %v4123
    %v4191 = vunpack.c.l.b16 %v4124
    %v4192 = vunpack.c.l.b16 %v4125
    %v4193 = vunpack.c.l.b16 %v4126
    %v4194 = vunpack.c.l.b16 %v4127
    %v4195 = vunpack.c.l.b16 %v4128
    %v4196 = vunpack.c.l.b16 %v4129
    %v4197 = vunpack.c.l.b16 %v4130
    %v4198 = vunpack.c.l.b16 %v4131
    %v4199 = vunpack.c.l.b16 %v4132
    %v4200 = vunpack.c.l.b16 %v4133
    %v4201 = vunpack.c.l.b16 %v4134
    %v4202 = vunpack.c.l.b16 %v4135
    %v4203 = vunpack.c.l.b16 %v4136
    %v4204 = vunpack.c.l.b16 %v4137
    %v4205 = vunpack.c.l.b16 %v4138
    %v4206 = vunpack.c.l.b16 %v4139
    %v4207 = vunpack.c.l.b16 %v4140
    %v4208 = vunpack.c.l.b16 %v4141
    %v4209 = vunpack.c.l.b16 %v4142
    %v4210 = vunpack.c.l.b16 %v4143
    %v4211 = vunpack.c.l.b16 %v4144
    %v4212 = vpack.c.b16 %v4181, %v4180
    %v4213 = vpack.c.b16 %v4183, %v4182
    %v4214 = vpack.c.b16 %v4185, %v4184
    %v4215 = vpack.c.b16 %v4187, %v4186
    %v4216 = vpack.c.b16 %v4189, %v4188
    %v4217 = vpack.c.b16 %v4191, %v4190
    %v4218 = vpack.c.b16 %v4193, %v4192
    %v4219 = vpack.c.b16 %v4195, %v4194
    %v4220 = vpack.c.b16 %v4197, %v4196
    %v4221 = vpack.c.b16 %v4199, %v4198
    %v4222 = vpack.c.b16 %v4201, %v4200
    %v4223 = vpack.c.b16 %v4203, %v4202
    %v4224 = vpack.c.b16 %v4205, %v4204
    %v4225 = vpack.c.b16 %v4207, %v4206
    %v4226 = vpack.c.b16 %v4209, %v4208
    %v4227 = vpack.c.b16 %v4211, %v4210
    %4244 = vmatprep.subr.bf16.mxu0 0
    %4245 = vmatpush1.bf16.msra.mxu0 %v4219
    %4246 = vmatprep.subr.bf16.mxu0 0
    %4247 = vmatpush1.bf16.msra.mxu0 %v4218
    %4248 = vmatprep.subr.bf16.mxu0 0
    %4249 = vmatpush1.bf16.msra.mxu0 %v4217
    %4250 = vmatprep.subr.bf16.mxu0 0
    %4251 = vmatpush1.bf16.msra.mxu0 %v4216
    %4252 = vmatprep.subr.bf16.mxu0 0
    %4253 = vmatpush1.bf16.msra.mxu0 %v4215
    %4254 = vmatprep.subr.bf16.mxu0 0
    %4255 = vmatpush1.bf16.msra.mxu0 %v4214
    %4256 = vmatprep.subr.bf16.mxu0 0
    %4257 = vmatpush1.bf16.msra.mxu0 %v4213
    %4258 = vmatprep.subr.bf16.mxu0 0
    %4259 = vmatpush1.bf16.msra.mxu0 %v4212
    %4260 = vmatprep.subr.bf16.mxu0 0
    %4261 = vmatpush2.bf16.msra.mxu0 %v4227
    %4262 = vmatprep.subr.bf16.mxu0 0
    %4263 = vmatpush2.bf16.msra.mxu0 %v4226
    %4264 = vmatprep.subr.bf16.mxu0 0
    %4265 = vmatpush2.bf16.msra.mxu0 %v4225
    %4266 = vmatprep.subr.bf16.mxu0 0
    %4267 = vmatpush2.bf16.msra.mxu0 %v4224
    %4268 = vmatprep.subr.bf16.mxu0 0
    %4269 = vmatpush2.bf16.msra.mxu0 %v4223
    %4270 = vmatprep.subr.bf16.mxu0 0
    %4271 = vmatpush2.bf16.msra.mxu0 %v4222
    %4272 = vmatprep.subr.bf16.mxu0 0
    %4273 = vmatpush2.bf16.msra.mxu0 %v4221
    %4274 = vmatprep.subr.bf16.mxu0 0
    %4275 = vmatpush2.bf16.msra.mxu0 %v4220
    %4276 = vmatprep.mubr.bf16.mxu0 %v4146
    %4277 = vmatmul.mubr.bf16.gmra.mxu0 %v4145
    %v4278 = vpop.f32.mrf.mxu0
    %v4279 = vadd.f32 %v4147, %v4278
    %v4280 = vpop.f32.mrf.mxu0
    %v4281 = vpop.f32.mrf.mxu0
    %v4282 = vadd.f32 %v4147, %v4281
    %v4283 = vpop.f32.mrf.mxu0
    %4284 = vdwg.mxu0
    %vm4285 = vcmp.lt.s32.totalorder %v3229, 26
    %v4286 = vsel %vm4285, %v4279, -1e+30
    %v4287 = vsel %vm4285, %v4282, -1e+30
    %4288 = vmax.xlane.f32.xlu0 %v4286
    %v4289 = vpop.xlane.xlu0 %4288
    %4290 = vmax.xlane.f32.xlu0 %v4287
    %v4291 = vpop.xlane.xlu0 %4290
    %v4292 = vsub.f32 %v4286, %v4289
    %v4293 = vsub.f32 %v4287, %v4291
    %v4294 = vmul.f32 %v4292, 1.442695
    %v4295 = vpow.pop %v4294
    %v4296 = vmul.f32 %v4293, 1.442695
    %v4297 = vpow.pop %v4296
    %4298 = vadd.xlane.f32.xlu0 %v4295
    %v4299 = vpop.xlane.xlu0 %4298
    %4300 = vadd.xlane.f32.xlu0 %v4297
    %v4301 = vpop.xlane.xlu0 %4300
    %v4302 = vrcp.pop %v4299
    %v4303 = vrcp.pop %v4301
    %v4304 = vmul.f32 %v4295, %v4302
    %v4305 = vmul.f32 %v4297, %v4303
    %4306 = vst [vmem:[%s15] sm:$0xff] %v4304
    %4307 = vst [vmem:[%s15 + $0x8] sm:$0xff] %v4305
    %v4308 = vld [vmem:[#allocation4 + $0x240] sm:$0xff]
    %v4309 = vld [vmem:[#allocation4 + $0x248] sm:$0xf]
    %v4310 = vld [vmem:[#allocation4 + $0x24c] sm:$0xff]
    %v4311 = vld [vmem:[#allocation4 + $0x254] sm:$0xf]
    %v4312 = vld [vmem:[#allocation4 + $0x258] sm:$0xff]
    %v4313 = vld [vmem:[#allocation4 + $0x260] sm:$0xf]
    %v4314 = vld [vmem:[#allocation4 + $0x264] sm:$0xff]
    %v4315 = vld [vmem:[#allocation4 + $0x26c] sm:$0xf]
    %v4316 = vld [vmem:[#allocation4 + $0x270] sm:$0xff]
    %v4317 = vld [vmem:[#allocation4 + $0x278] sm:$0xf]
    %v4318 = vld [vmem:[#allocation4 + $0x27c] sm:$0xff]
    %v4319 = vld [vmem:[#allocation4 + $0x284] sm:$0xf]
    %v4320 = vld [vmem:[#allocation4 + $0x288] sm:$0xff]
    %v4321 = vld [vmem:[#allocation4 + $0x290] sm:$0xf]
    %v4322 = vld [vmem:[#allocation4 + $0x294] sm:$0xff]
    %v4323 = vld [vmem:[#allocation4 + $0x29c] sm:$0xf]
    %v4324 = vld [vmem:[#allocation4 + $0x2a0] sm:$0xff]
    %v4325 = vld [vmem:[#allocation4 + $0x2a8] sm:$0xf]
    %v4326 = vld [vmem:[#allocation4 + $0x2ac] sm:$0xff]
    %v4327 = vld [vmem:[#allocation4 + $0x2b4] sm:$0xf]
    %v4328 = vld [vmem:[#allocation4 + $0x2b8] sm:$0xff]
    %v4329 = vld [vmem:[#allocation4 + $0x2c0] sm:$0xf]
    %v4330 = vld [vmem:[#allocation4 + $0x2c4] sm:$0xff]
    %v4331 = vld [vmem:[#allocation4 + $0x2cc] sm:$0xf]
    %v4332 = vld [vmem:[#allocation4 + $0x2d0] sm:$0xff]
    %v4333 = vld [vmem:[#allocation4 + $0x2d8] sm:$0xf]
    %v4334 = vld [vmem:[#allocation4 + $0x2dc] sm:$0xff]
    %v4335 = vld [vmem:[#allocation4 + $0x2e4] sm:$0xf]
    %v4336 = vld [vmem:[#allocation4 + $0x2e8] sm:$0xff]
    %v4337 = vld [vmem:[#allocation4 + $0x2f0] sm:$0xf]
    %v4338 = vld [vmem:[#allocation4 + $0x2f4] sm:$0xff]
    %v4339 = vld [vmem:[#allocation4 + $0x2fc] sm:$0xf]
    %v4340 = vpack.c.bf16 %v2836, %v2836
    %v4373 = vunpack.c.l.b16 %v4308
    %v4374 = vunpack.c.h.b16 %v4308
    %v4375 = vunpack.c.l.b16 %v4309
    %v4376 = vunpack.c.l.b16 %v4310
    %v4377 = vunpack.c.h.b16 %v4310
    %v4378 = vunpack.c.l.b16 %v4311
    %v4379 = vunpack.c.l.b16 %v4312
    %v4380 = vunpack.c.h.b16 %v4312
    %v4381 = vunpack.c.l.b16 %v4313
    %v4382 = vunpack.c.l.b16 %v4314
    %v4383 = vunpack.c.h.b16 %v4314
    %v4384 = vunpack.c.l.b16 %v4315
    %v4385 = vunpack.c.l.b16 %v4316
    %v4386 = vunpack.c.h.b16 %v4316
    %v4387 = vunpack.c.l.b16 %v4317
    %v4388 = vunpack.c.l.b16 %v4318
    %v4389 = vunpack.c.h.b16 %v4318
    %v4390 = vunpack.c.l.b16 %v4319
    %v4391 = vunpack.c.l.b16 %v4320
    %v4392 = vunpack.c.h.b16 %v4320
    %v4393 = vunpack.c.l.b16 %v4321
    %v4394 = vunpack.c.l.b16 %v4322
    %v4395 = vunpack.c.h.b16 %v4322
    %v4396 = vunpack.c.l.b16 %v4323
    %v4397 = vunpack.c.l.b16 %v4324
    %v4398 = vunpack.c.h.b16 %v4324
    %v4399 = vunpack.c.l.b16 %v4325
    %v4400 = vunpack.c.l.b16 %v4326
    %v4401 = vunpack.c.h.b16 %v4326
    %v4402 = vunpack.c.l.b16 %v4327
    %v4403 = vunpack.c.l.b16 %v4328
    %v4404 = vunpack.c.h.b16 %v4328
    %v4405 = vunpack.c.l.b16 %v4329
    %v4406 = vunpack.c.l.b16 %v4330
    %v4407 = vunpack.c.h.b16 %v4330
    %v4408 = vunpack.c.l.b16 %v4331
    %v4409 = vunpack.c.l.b16 %v4332
    %v4410 = vunpack.c.h.b16 %v4332
    %v4411 = vunpack.c.l.b16 %v4333
    %v4412 = vunpack.c.l.b16 %v4334
    %v4413 = vunpack.c.h.b16 %v4334
    %v4414 = vunpack.c.l.b16 %v4335
    %v4415 = vunpack.c.l.b16 %v4336
    %v4416 = vunpack.c.h.b16 %v4336
    %v4417 = vunpack.c.l.b16 %v4337
    %v4418 = vunpack.c.l.b16 %v4338
    %v4419 = vunpack.c.h.b16 %v4338
    %v4420 = vunpack.c.l.b16 %v4339
    %v4421 = vpack.c.b16 %v4376, %v4373
    %v4422 = vpack.c.b16 %v4377, %v4374
    %v4423 = vpack.c.b16 %v4378, %v4375
    %v4424 = vpack.c.b16 %v4382, %v4379
    %v4425 = vpack.c.b16 %v4383, %v4380
    %v4426 = vpack.c.b16 %v4384, %v4381
    %v4427 = vpack.c.b16 %v4388, %v4385
    %v4428 = vpack.c.b16 %v4389, %v4386
    %v4429 = vpack.c.b16 %v4390, %v4387
    %v4430 = vpack.c.b16 %v4394, %v4391
    %v4431 = vpack.c.b16 %v4395, %v4392
    %v4432 = vpack.c.b16 %v4396, %v4393
    %v4433 = vpack.c.b16 %v4400, %v4397
    %v4434 = vpack.c.b16 %v4401, %v4398
    %v4435 = vpack.c.b16 %v4402, %v4399
    %v4436 = vpack.c.b16 %v4406, %v4403
    %v4437 = vpack.c.b16 %v4407, %v4404
    %v4438 = vpack.c.b16 %v4408, %v4405
    %v4439 = vpack.c.b16 %v4412, %v4409
    %v4440 = vpack.c.b16 %v4413, %v4410
    %v4441 = vpack.c.b16 %v4414, %v4411
    %v4442 = vpack.c.b16 %v4418, %v4415
    %v4443 = vpack.c.b16 %v4419, %v4416
    %v4444 = vpack.c.b16 %v4420, %v4417
    %4469 = vmatprep.subr.bf16.mxu0 %v4443
    %4470 = vmatpush1.bf16.msra.mxu0 %v4442
    %4471 = vmatprep.subr.bf16.mxu0 %v4440
    %4472 = vmatpush1.bf16.msra.mxu0 %v4439
    %4473 = vmatprep.subr.bf16.mxu0 %v4437
    %4474 = vmatpush1.bf16.msra.mxu0 %v4436
    %4475 = vmatprep.subr.bf16.mxu0 %v4434
    %4476 = vmatpush1.bf16.msra.mxu0 %v4433
    %4477 = vmatprep.subr.bf16.mxu0 %v4431
    %4478 = vmatpush1.bf16.msra.mxu0 %v4430
    %4479 = vmatprep.subr.bf16.mxu0 %v4428
    %4480 = vmatpush1.bf16.msra.mxu0 %v4427
    %4481 = vmatprep.subr.bf16.mxu0 %v4425
    %4482 = vmatpush1.bf16.msra.mxu0 %v4424
    %4483 = vmatprep.subr.bf16.mxu0 %v4422
    %4484 = vmatpush1.bf16.msra.mxu0 %v4421
    %4485 = vmatprep.subr.bf16.mxu0 0
    %4486 = vmatpush2.bf16.msra.mxu0 0
    %4487 = vmatprep.subr.bf16.mxu0 0
    %4488 = vmatpush2.bf16.msra.mxu0 0
    %4489 = vmatprep.subr.bf16.mxu0 0
    %4490 = vmatpush2.bf16.msra.mxu0 0
    %4491 = vmatprep.subr.bf16.mxu0 0
    %4492 = vmatpush2.bf16.msra.mxu0 0
    %4493 = vmatprep.subr.bf16.mxu0 0
    %4494 = vmatpush2.bf16.msra.mxu0 0
    %4495 = vmatprep.subr.bf16.mxu0 0
    %4496 = vmatpush2.bf16.msra.mxu0 0
    %4497 = vmatprep.subr.bf16.mxu0 0
    %4498 = vmatpush2.bf16.msra.mxu0 0
    %4499 = vmatprep.subr.bf16.mxu0 0
    %4500 = vmatpush2.bf16.msra.mxu0 0
    %4501 = vmatprep.mubr.bf16.mxu0 0
    %4502 = vmatmul.mubr.bf16.gmra.mxu0 %v4340
    %v4503 = vpop.f32.mrf.mxu0
    %v4504 = vadd.f32 0.0, %v4503
    %v4505 = vpop.f32.mrf.mxu0
    %v4506 = vadd.f32 0.0, %v4505
    %v4507 = vpop.f32.mrf.mxu0
    %v4508 = vpop.f32.mrf.mxu0
    %4509 = vdwg.mxu0
    %4510 = vmatprep.subr.bf16.mxu0 0
    %4511 = vmatpush1.bf16.msra.mxu0 %v4444
    %4512 = vmatprep.subr.bf16.mxu0 0
    %4513 = vmatpush1.bf16.msra.mxu0 %v4441
    %4514 = vmatprep.subr.bf16.mxu0 0
    %4515 = vmatpush1.bf16.msra.mxu0 %v4438
    %4516 = vmatprep.subr.bf16.mxu0 0
    %4517 = vmatpush1.bf16.msra.mxu0 %v4435
    %4518 = vmatprep.subr.bf16.mxu0 0
    %4519 = vmatpush1.bf16.msra.mxu0 %v4432
    %4520 = vmatprep.subr.bf16.mxu0 0
    %4521 = vmatpush1.bf16.msra.mxu0 %v4429
    %4522 = vmatprep.subr.bf16.mxu0 0
    %4523 = vmatpush1.bf16.msra.mxu0 %v4426
    %4524 = vmatprep.subr.bf16.mxu0 0
    %4525 = vmatpush1.bf16.msra.mxu0 %v4423
    %4526 = vmatprep.subr.bf16.mxu0 0
    %4527 = vmatpush2.bf16.msra.mxu0 0
    %4528 = vmatprep.subr.bf16.mxu0 0
    %4529 = vmatpush2.bf16.msra.mxu0 0
    %4530 = vmatprep.subr.bf16.mxu0 0
    %4531 = vmatpush2.bf16.msra.mxu0 0
    %4532 = vmatprep.subr.bf16.mxu0 0
    %4533 = vmatpush2.bf16.msra.mxu0 0
    %4534 = vmatprep.subr.bf16.mxu0 0
    %4535 = vmatpush2.bf16.msra.mxu0 0
    %4536 = vmatprep.subr.bf16.mxu0 0
    %4537 = vmatpush2.bf16.msra.mxu0 0
    %4538 = vmatprep.subr.bf16.mxu0 0
    %4539 = vmatpush2.bf16.msra.mxu0 0
    %4540 = vmatprep.subr.bf16.mxu0 0
    %4541 = vmatpush2.bf16.msra.mxu0 0
    %4542 = vmatprep.mubr.bf16.mxu0 0
    %4543 = vmatmul.mubr.bf16.gmra.mxu0 %v4340
    %v4544 = vpop.f32.mrf.mxu0
    %v4545 = vadd.f32 0.0, %v4544
    %v4546 = vpop.f32.mrf.mxu0
    %v4547 = vpop.f32.mrf.mxu0
    %v4548 = vpop.f32.mrf.mxu0
    %4549 = vdwg.mxu0
    %4550 = vst [vmem:[%s16] sm:$0xff] %v4504
    %4551 = vst [vmem:[%s16 + $0x8] sm:$0xff] %v4506
    %4552 = vst [vmem:[%s16 + $0x10] sm:$0xff] %v4545
    // Predicated region
    $region58: #{_forward_impl.1} parent=1 // pred_check
      _
    $region59: #{_forward_impl.1} parent=1 // pred_check_branch
      %4554 = sbr.rel (0) target = $region61
    $region60: #{_forward_impl.1} parent=1 // pred_region
      _
    $region61: #{_forward_impl.1} parent=1 // pred_fallthru
      _
    // Predicated region
    $region62: #{_forward_impl.1} parent=1 // pred_check
      _
    $region63: #{_forward_impl.1} parent=1 // pred_check_branch
      %4556 = sbr.rel (0) target = $region65
    $region64: #{_forward_impl.1} parent=1 // pred_region
      _
    $region65: #{_forward_impl.1} parent=1 // pred_fallthru
      _
    // Predicated region
    $region66: #{_forward_impl.1} parent=1 // pred_check
      _
    $region67: #{_forward_impl.1} parent=1 // pred_check_branch
      %4558 = sbr.rel (0) target = $region69
    $region68: #{_forward_impl.1} parent=1 // pred_region
      _
    $region69: #{_forward_impl.1} parent=1 // pred_fallthru
      _
    // Predicated region
    $region70: #{_forward_impl.1} parent=1 // pred_check
      _
    $region71: #{_forward_impl.1} parent=1 // pred_check_branch
      %4560 = sbr.rel (0) target = $region73
    $region72: #{_forward_impl.1} parent=1 // pred_region
      _
    $region73: #{_forward_impl.1} parent=1 // pred_fallthru
      _
    // Predicated region
    $region74: #{_forward_impl.1} parent=1 // pred_check
      _
    $region75: #{_forward_impl.1} parent=1 // pred_check_branch
      %4562 = sbr.rel (0) target = $region77
    $region76: #{_forward_impl.1} parent=1 // pred_region
      _
    $region77: #{_forward_impl.1} parent=1 // pred_fallthru
      _
    // Predicated region
    $region78: #{_forward_impl.1} parent=1 // pred_check
      _
    $region79: #{_forward_impl.1} parent=1 // pred_check_branch
      %4564 = sbr.rel (0) target = $region81
    $region80: #{_forward_impl.1} parent=1 // pred_region
      _
    $region81: #{_forward_impl.1} parent=1 // pred_fallthru
      _
    // Predicated region
    $region82: #{_forward_impl.1} parent=1 // pred_check
      _
    $region83: #{_forward_impl.1} parent=1 // pred_check_branch
      %4566 = sbr.rel (0) target = $region85
    $region84: #{_forward_impl.1} parent=1 // pred_region
      _
    $region85: #{_forward_impl.1} parent=1 // pred_fallthru
      _
    // Predicated region
    $region86: #{_forward_impl.1} parent=1 // pred_check
      _
    $region87: #{_forward_impl.1} parent=1 // pred_check_branch
      %4568 = sbr.rel (0) target = $region89
    $region88: #{_forward_impl.1} parent=1 // pred_region
      _
    $region89: #{_forward_impl.1} parent=1 // pred_fallthru
      _
    // Predicated region
    $region90: #{_forward_impl.1} parent=1 // pred_check
      _
    $region91: #{_forward_impl.1} parent=1 // pred_check_branch
      %4570 = sbr.rel (0) target = $region93
    $region92: #{_forward_impl.1} parent=1 // pred_region
      _
    $region93: #{_forward_impl.1} parent=1 // pred_fallthru
      _
    // Predicated region
    $region94: #{_forward_impl.1} parent=1 // pred_check
      _
    $region95: #{_forward_impl.1} parent=1 // pred_check_branch
      %4572 = sbr.rel (0) target = $region97
    $region96: #{_forward_impl.1} parent=1 // pred_region
      _
    $region97: #{_forward_impl.1} parent=1 // pred_fallthru
      _
    %4573 = vsyncpa [#allocation3], 1
    %4574 = vsyncpa [#allocation5], 1

</llo_original>
